<compile_context>
chip_gen: v7x
topology: tpu7x:2x2x1
jax: 0.10.0
libtpu: 0.0.40
codegen_flags: <defaults>
</compile_context>

<pallas_src>
import jax
import jax.numpy as jnp
import numpy as np
from jax.experimental import pallas as pl
from jax.experimental.pallas import tpu as pltpu


# ----------------------------------------------------------------------------
# Fused Pallas kernel: both TCN_GCN_units of the multiscale block + concat
# ----------------------------------------------------------------------------
def _make_fused_kernel(C, T, V, units, stride, fuse_residual):
    """units: static tuple of (O, K, has_down) per TCN_GCN_unit."""
    Tout = (T - 1) // stride + 1
    n_units = len(units)

    def kernel(*refs):
        x_ref = refs[0]
        out_ref = refs[len(refs) - n_units - 1]
        scratch_refs = refs[len(refs) - n_units:]
        params = list(refs[1:len(refs) - n_units - 1])

        # --- unpack parameter refs (static order, mirrors the wrapper) ---
        g_ref = params.pop(0)
        s1_ref = params.pop(0)
        t1_ref = params.pop(0)
        tcn_refs = []
        for _ in range(n_units):
            tcn_refs.append((params.pop(0), params.pop(0), params.pop(0)))
        if fuse_residual:
            r_ref = params.pop(0)
            sd_ref = params.pop(0)
            td_ref = params.pop(0)
        else:
            res_refs = []
            for (_, _, has_down) in units:
                if has_down:
                    res_refs.append((params.pop(0), params.pop(0), params.pop(0)))
                else:
                    res_refs.append(None)

        # lane-dense activations (T, C*V); one DMA of x shared by both units
        x_tcv = x_ref[0].astype(jnp.float32)                    # (T, C*V)
        if stride == 1:
            xs = x_tcv                                           # (Tout, C*V)
        else:
            # strided Ref read for the 1x1/identity residual branch
            xs = x_ref[0, pl.ds(0, Tout, stride)].astype(jnp.float32)

        # ---- unit_gcn of BOTH units as ONE MXU matmul with the folded
        #      operator [G1 | G2];  fused BN + ReLU epilogue ----
        y_all = jnp.dot(x_tcv, g_ref[...],
                        preferred_element_type=jnp.float32)      # (T, sum OV)
        y_all = jnp.maximum(y_all * s1_ref[...] + t1_ref[...], 0.0)

        # ---- per-unit Unit2D temporal conv (K,1), pad (K-1)/2, stride:
        #      im2col along T (sublane-shifted scratch views, 128-aligned lane
        #      concat) -> ONE matmul per unit with contraction K*O*V ----
        zs = []
        off = 0
        for u, (O, K, _) in enumerate(units):
            OV = O * V
            y = y_all[:, off:off + OV]                           # aligned lane slice
            off += OV
            wt_ref, s2_ref, t2_ref = tcn_refs[u]
            ypad_ref = scratch_refs[u]
            pad = (K - 1) // 2

            if pad > 0:
                ypad_ref[0:pad] = jnp.zeros((pad, OV), jnp.float32)
                ypad_ref[pad + T:pad + T + pad] = jnp.zeros((pad, OV), jnp.float32)
            ypad_ref[pad:pad + T] = y

            if stride == 1:
                taps = [ypad_ref[k:k + Tout] for k in range(K)]
            else:
                taps = [ypad_ref[pl.ds(k, Tout, stride)] for k in range(K)]
            stacked = jnp.concatenate(taps, axis=1)              # (Tout, K*O*V)
            z = jnp.dot(stacked, wt_ref[...],
                        preferred_element_type=jnp.float32)      # (Tout, O*V)
            z = jnp.maximum(z * s2_ref[...] + t2_ref[...], 0.0)
            zs.append(z)

        z_all = jnp.concatenate(zs, axis=1)                      # (Tout, sum OV)

        # ---- residual / downsample (Unit2D kernel 1, stride) ----
        if fuse_residual:
            d_all = jnp.dot(xs, r_ref[...],
                            preferred_element_type=jnp.float32)  # (Tout, sum OV)
            d_all = jnp.maximum(d_all * sd_ref[...] + td_ref[...], 0.0)
        else:
            ds = []
            for u, (O, K, has_down) in enumerate(units):
                if has_down:
                    wd_ref, sdu_ref, tdu_ref = res_refs[u]
                    d = jnp.dot(xs, wd_ref[...],
                                preferred_element_type=jnp.float32)
                    d = jnp.maximum(d * sdu_ref[...] + tdu_ref[...], 0.0)
                else:
                    # PyTorch only takes this branch when C == O and stride == 1
                    d = xs
                ds.append(d)
            d_all = jnp.concatenate(ds, axis=1)

        # torch.cat(dim=1): one dense 256-lane store
        out_ref[0] = (z_all + d_all).astype(out_ref.dtype)

    return kernel, Tout


# ----------------------------------------------------------------------------
# Parameter folding / wrapper glue
# ----------------------------------------------------------------------------
def fold_bn(gamma, beta, mean, var, conv_bias, eps=1e-5):
    """Fold eval-mode BatchNorm2d + preceding conv bias into scale/shift."""
    s = gamma / jnp.sqrt(var + eps)
    t = beta + s * (conv_bias - mean)
    return s, t


def _lane_vec(per_channel, V):
    # per-channel value repeated V times -> (1, O*V), matching the (o*V + v) lanes
    return jnp.repeat(per_channel, V).reshape(1, -1).astype(jnp.float32)


def prepare_unit_params(p, A, C, V, K):
    nA, O, _ = p['Wg'].shape
    eye_v = jnp.eye(V, dtype=jnp.float32)

    # gcn operator: G[c*V+w, o*V+v] = sum_i Wg[i,o,c] * A[i,w,v]
    G = jnp.einsum('ioc,iwv->cwov', p['Wg'], A).reshape(C * V, O * V)
    s1, t1 = fold_bn(*p['bn1'], conv_bias=p['bg'].sum(axis=0))

    # temporal conv operator: WtBig[(k*O+c)*V+w, o*V+v] = Wt[o,c,k] * delta(w,v)
    WtBig = jnp.einsum('ock,wv->kcwov', p['Wt'], eye_v).reshape(K * O * V, O * V)
    s2, t2 = fold_bn(*p['bn2'], conv_bias=p['bt'])

    has_down = 'Wd' in p
    if has_down:
        WdBig = jnp.einsum('oc,wv->cwov', p['Wd'], eye_v).reshape(C * V, O * V)
        sd, td = fold_bn(*p['bnd'], conv_bias=p['bd'])
        res = (WdBig, _lane_vec(sd, V), _lane_vec(td, V))
    else:
        res = None

    return dict(G=G, s1=_lane_vec(s1, V), t1=_lane_vec(t1, V),
                WtBig=WtBig, s2=_lane_vec(s2, V), t2=_lane_vec(t2, V),
                res=res, meta=(O, K, has_down))


def _const_spec(a):
    nd = a.ndim
    return pl.BlockSpec(a.shape, lambda n, _nd=nd: (0,) * _nd)


def multiscale_forward(x_nchw, A, p1, p2, *, K1, K2, stride):
    """Forward of TCN_GCN_unit_multiscale.  x: NCHW (N, C, T, V).  Returns NCHW."""
    N, C, T, V = x_nchw.shape

    # boundary glue (tiny at these sizes): NCHW -> lane-dense (N, T, C*V)
    x_tcv = jnp.transpose(x_nchw, (0, 2, 1, 3)).reshape(N, T, C * V)

    u_list = [prepare_unit_params(p1, A, C, V, K1),
              prepare_unit_params(p2, A, C, V, K2)]
    units = tuple(u['meta'] for u in u_list)
    Ototal = sum(m[0] for m in units)
    fuse_residual = all(m[2] for m in units)

    kernel, Tout = _make_fused_kernel(C, T, V, units, stride, fuse_residual)

    # Flat argument list (order must match the kernel's unpacking).
    flat_args = [x_tcv,
                 jnp.concatenate([u['G'] for u in u_list], axis=1),
                 jnp.concatenate([u['s1'] for u in u_list], axis=1),
                 jnp.concatenate([u['t1'] for u in u_list], axis=1)]
    for u in u_list:
        flat_args += [u['WtBig'], u['s2'], u['t2']]
    if fuse_residual:
        flat_args += [jnp.concatenate([u['res'][0] for u in u_list], axis=1),
                      jnp.concatenate([u['res'][1] for u in u_list], axis=1),
                      jnp.concatenate([u['res'][2] for u in u_list], axis=1)]
    else:
        for u in u_list:
            if u['res'] is not None:
                flat_args += list(u['res'])

    in_specs = [pl.BlockSpec((1, T, C * V), lambda n: (n, 0, 0))]
    in_specs += [_const_spec(a) for a in flat_args[1:]]

    # per-unit lane-dense padded-activation scratch (Tpad, O*V) -- a few KB
    scratch_shapes = [
        pltpu.VMEM((T + 2 * ((K - 1) // 2), O * V), jnp.float32)
        for (O, K, _) in units
    ]

    out = pl.pallas_call(
        kernel,
        out_shape=jax.ShapeDtypeStruct((N, Tout, Ototal * V), x_nchw.dtype),
        grid_spec=pltpu.PrefetchScalarGridSpec(
            num_scalar_prefetch=0,
            grid=(N,),
            in_specs=in_specs,
            out_specs=pl.BlockSpec((1, Tout, Ototal * V), lambda n: (n, 0, 0)),
            scratch_shapes=scratch_shapes,
        ),
        compiler_params=pltpu.CompilerParams(
            dimension_semantics=("parallel",)),  # batch axis -> both v7x TCs
    )(*flat_args)

    # (N, Tout, (O1+O2)*V) -> NCHW (N, O1+O2, Tout, V)   (== torch.cat(dim=1))
    return jnp.transpose(out.reshape(N, Tout, Ototal, V), (0, 2, 1, 3))


# ----------------------------------------------------------------------------
# Parameter init (random, deterministic)
# ----------------------------------------------------------------------------
def init_unit_params(key, in_c, out_c, nA, K, stride):
    ks = jax.random.split(key, 20)

    def bn_init(k):
        k0, k1, k2, k3 = jax.random.split(k, 4)
        gamma = 1.0 + 0.1 * jax.random.normal(k0, (out_c,), jnp.float32)
        beta = 0.1 * jax.random.normal(k1, (out_c,), jnp.float32)
        mean = 0.1 * jax.random.normal(k2, (out_c,), jnp.float32)
        var = 0.5 + jax.random.uniform(k3, (out_c,), jnp.float32)
        return (gamma, beta, mean, var)

    p = {
        'Wg': jax.random.normal(ks[0], (nA, out_c, in_c), jnp.float32)
              * (1.0 / np.sqrt(in_c)),
        'bg': 0.1 * jax.random.normal(ks[1], (nA, out_c), jnp.float32),
        'bn1': bn_init(ks[2]),
        'Wt': jax.random.normal(ks[3], (out_c, out_c, K), jnp.float32)
              * (1.0 / np.sqrt(out_c * K)),
        'bt': 0.1 * jax.random.normal(ks[4], (out_c,), jnp.float32),
        'bn2': bn_init(ks[5]),
    }
    if in_c != out_c or stride != 1:   # same rule as the PyTorch module
        p['Wd'] = jax.random.normal(ks[6], (out_c, in_c), jnp.float32) \
                  * (1.0 / np.sqrt(in_c))
        p['bd'] = 0.1 * jax.random.normal(ks[7], (out_c,), jnp.float32)
        p['bnd'] = bn_init(ks[8])
    return p


# ----------------------------------------------------------------------------
# Pure-JAX reference (mirrors the PyTorch forward, NCHW), for verification
# ----------------------------------------------------------------------------
def unit_ref_nchw(x, A, p, *, K, stride, eps=1e-5):
    N, C, T, V = x.shape

    def bn(v, stats):
        g, b, m, var = stats
        return (g[None, :, None, None] * (v - m[None, :, None, None])
                / jnp.sqrt(var[None, :, None, None] + eps)
                + b[None, :, None, None])

    y = 0.0
    for i in range(A.shape[0]):
        xa = jnp.einsum('nctw,wv->nctv', x, A[i])
        y = y + jnp.einsum('oc,nctv->notv', p['Wg'][i], xa) \
              + p['bg'][i][None, :, None, None]
    y = jax.nn.relu(bn(y, p['bn1']))

    pad = (K - 1) // 2
    Tout = (T - 1) // stride + 1
    yp = jnp.pad(y, ((0, 0), (0, 0), (pad, pad), (0, 0)))
    z = 0.0
    for k in range(K):
        z = z + jnp.einsum('oc,nctv->notv', p['Wt'][:, :, k],
                           yp[:, :, k:k + (Tout - 1) * stride + 1:stride, :])
    z = z + p['bt'][None, :, None, None]
    z = jax.nn.relu(bn(z, p['bn2']))

    if 'Wd' in p:
        xs = x[:, :, ::stride, :]
        d = jnp.einsum('oc,nctv->notv', p['Wd'], xs) \
            + p['bd'][None, :, None, None]
        d = jax.nn.relu(bn(d, p['bnd']))
    else:
        d = x[:, :, ::stride, :]
    return z + d


# ----------------------------------------------------------------------------
if __name__ == "__main__":
    key = jax.random.PRNGKey(0)
    N, Cin, T, V = 2, 4, 16, 16        # (batch, in_channels, frames, joints)
    out_channels = 16
    nA = 3                             # graph partitions
    kernel_size = 9
    stride = 1

    O1 = out_channels // 2             # unit_1 channels
    O2 = out_channels - out_channels // 2
    K1, K2 = kernel_size, 2 * kernel_size - 1

    k_x, k_a, k_p1, k_p2 = jax.random.split(key, 4)
    x = jax.random.normal(k_x, (N, Cin, T, V), jnp.float32)
    A = jax.random.normal(k_a, (nA, V, V), jnp.float32) * (1.0 / np.sqrt(V))

    p1 = init_unit_params(k_p1, Cin, O1, nA, K1, stride)
    p2 = init_unit_params(k_p2, Cin, O2, nA, K2, stride)

    out = multiscale_forward(x, A, p1, p2, K1=K1, K2=K2, stride=stride)
    out = jax.block_until_ready(out)

    ref = jnp.concatenate(
        [unit_ref_nchw(x, A, p1, K=K1, stride=stride),
         unit_ref_nchw(x, A, p2, K=K2, stride=stride)], axis=1)

    assert out.shape == (N, out_channels, T, V), out.shape
    np.testing.assert_allclose(np.asarray(out), np.asarray(ref),
                               rtol=2e-2, atol=2e-2)
    print("KERNEL_OK")
</pallas_src>

<mosaic_0001>
module attributes {stable_mosaic.version = 11 : i64} {
  func.func @kernel(%arg0: i32, %arg1: memref<1x16x64xf32, #tpu.memory_space<vmem>>, %arg2: memref<64x256xf32, #tpu.memory_space<vmem>>, %arg3: memref<1x256xf32, #tpu.memory_space<vmem>>, %arg4: memref<1x256xf32, #tpu.memory_space<vmem>>, %arg5: memref<1152x128xf32, #tpu.memory_space<vmem>>, %arg6: memref<1x128xf32, #tpu.memory_space<vmem>>, %arg7: memref<1x128xf32, #tpu.memory_space<vmem>>, %arg8: memref<2176x128xf32, #tpu.memory_space<vmem>>, %arg9: memref<1x128xf32, #tpu.memory_space<vmem>>, %arg10: memref<1x128xf32, #tpu.memory_space<vmem>>, %arg11: memref<64x256xf32, #tpu.memory_space<vmem>>, %arg12: memref<1x256xf32, #tpu.memory_space<vmem>>, %arg13: memref<1x256xf32, #tpu.memory_space<vmem>>, %arg14: memref<1x16x256xf32, #tpu.memory_space<vmem>>, %arg15: memref<24x128xf32, #tpu.memory_space<vmem>>, %arg16: memref<32x128xf32, #tpu.memory_space<vmem>>) attributes {dimension_semantics = [#tpu.dimension_semantics<parallel>], iteration_bounds = array<i64: 2>, scalar_prefetch = 0 : i64, scratch_operands = 2 : i64, tpu.core_type = #tpu.core_type<tc>, window_params = [{transform_indices = @transform_0, window_bounds = array<i64: 1, 16, 64>}, {pipeline_mode = #tpu.pipeline_mode<synchronous>, transform_indices = @transform_1, window_bounds = array<i64: 64, 256>}, {pipeline_mode = #tpu.pipeline_mode<synchronous>, transform_indices = @transform_2, window_bounds = array<i64: 1, 256>}, {pipeline_mode = #tpu.pipeline_mode<synchronous>, transform_indices = @transform_3, window_bounds = array<i64: 1, 256>}, {pipeline_mode = #tpu.pipeline_mode<synchronous>, transform_indices = @transform_4, window_bounds = array<i64: 1152, 128>}, {pipeline_mode = #tpu.pipeline_mode<synchronous>, transform_indices = @transform_5, window_bounds = array<i64: 1, 128>}, {pipeline_mode = #tpu.pipeline_mode<synchronous>, transform_indices = @transform_6, window_bounds = array<i64: 1, 128>}, {pipeline_mode = #tpu.pipeline_mode<synchronous>, transform_indices = @transform_7, window_bounds = array<i64: 2176, 128>}, {pipeline_mode = #tpu.pipeline_mode<synchronous>, transform_indices = @transform_8, window_bounds = array<i64: 1, 128>}, {pipeline_mode = #tpu.pipeline_mode<synchronous>, transform_indices = @transform_9, window_bounds = array<i64: 1, 128>}, {pipeline_mode = #tpu.pipeline_mode<synchronous>, transform_indices = @transform_10, window_bounds = array<i64: 64, 256>}, {pipeline_mode = #tpu.pipeline_mode<synchronous>, transform_indices = @transform_11, window_bounds = array<i64: 1, 256>}, {pipeline_mode = #tpu.pipeline_mode<synchronous>, transform_indices = @transform_12, window_bounds = array<i64: 1, 256>}, {transform_indices = @transform_13, window_bounds = array<i64: 1, 16, 256>}]} {
    %c0 = arith.constant 0 : index
    %c0_0 = arith.constant 0 : index
    %c0_1 = arith.constant 0 : index
    %0 = vector.load %arg1[%c0, %c0_0, %c0_1] : memref<1x16x64xf32, #tpu.memory_space<vmem>>, vector<1x16x64xf32>
    %1 = vector.shape_cast %0 : vector<1x16x64xf32> to vector<16x64xf32>
    %c0_2 = arith.constant 0 : index
    %c0_3 = arith.constant 0 : index
    %2 = vector.load %arg2[%c0_2, %c0_3] : memref<64x256xf32, #tpu.memory_space<vmem>>, vector<64x256xf32>
    %cst = arith.constant dense<0.000000e+00> : vector<16x256xf32>
    %3 = tpu.matmul %1, %2, %cst {dimension_numbers = #tpu.dot_dimension_numbers<[1], [0], [0], [1], [0, 0, 1, 1], [], []>} : vector<16x64xf32>, vector<64x256xf32>, vector<16x256xf32> -> vector<16x256xf32>
    %c0_4 = arith.constant 0 : index
    %c0_5 = arith.constant 0 : index
    %4 = vector.load %arg3[%c0_4, %c0_5] : memref<1x256xf32, #tpu.memory_space<vmem>>, vector<1x256xf32>
    %5 = vector.broadcast %4 : vector<1x256xf32> to vector<16x256xf32>
    %6 = arith.mulf %3, %5 : vector<16x256xf32>
    %c0_6 = arith.constant 0 : index
    %c0_7 = arith.constant 0 : index
    %7 = vector.load %arg4[%c0_6, %c0_7] : memref<1x256xf32, #tpu.memory_space<vmem>>, vector<1x256xf32>
    %8 = vector.broadcast %7 : vector<1x256xf32> to vector<16x256xf32>
    %9 = arith.addf %6, %8 : vector<16x256xf32>
    %cst_8 = arith.constant 0.000000e+00 : f32
    %10 = vector.broadcast %cst_8 : f32 to vector<16x256xf32>
    %11 = arith.maximumf %9, %10 : vector<16x256xf32>
    %12 = vector.extract_strided_slice %11 {offsets = [0, 0], sizes = [16, 128], strides = [1, 1]} : vector<16x256xf32> to vector<16x128xf32>
    %cst_9 = arith.constant 0.000000e+00 : f32
    %13 = vector.broadcast %cst_9 : f32 to vector<4x128xf32>
    %c0_10 = arith.constant 0 : index
    %c0_11 = arith.constant 0 : index
    %14 = vector.load %arg15[%c0_10, %c0_11] : memref<24x128xf32, #tpu.memory_space<vmem>>, vector<4x128xf32>
    tpu.vector_store %arg15[%c0_10, %c0_11], %13 {strides = array<i32>} : memref<24x128xf32, #tpu.memory_space<vmem>>, vector<4x128xf32>,
    %cst_12 = arith.constant 0.000000e+00 : f32
    %15 = vector.broadcast %cst_12 : f32 to vector<4x128xf32>
    %c20 = arith.constant 20 : index
    %c0_13 = arith.constant 0 : index
    %16 = vector.load %arg15[%c20, %c0_13] : memref<24x128xf32, #tpu.memory_space<vmem>>, vector<4x128xf32>
    tpu.vector_store %arg15[%c20, %c0_13], %15 {strides = array<i32>} : memref<24x128xf32, #tpu.memory_space<vmem>>, vector<4x128xf32>,
    %c4 = arith.constant 4 : index
    %c0_14 = arith.constant 0 : index
    %17 = vector.load %arg15[%c4, %c0_14] : memref<24x128xf32, #tpu.memory_space<vmem>>, vector<16x128xf32>
    tpu.vector_store %arg15[%c4, %c0_14], %12 {strides = array<i32>} : memref<24x128xf32, #tpu.memory_space<vmem>>, vector<16x128xf32>,
    %c0_15 = arith.constant 0 : index
    %c0_16 = arith.constant 0 : index
    %18 = vector.load %arg15[%c0_15, %c0_16] : memref<24x128xf32, #tpu.memory_space<vmem>>, vector<16x128xf32>
    %c1 = arith.constant 1 : index
    %c0_17 = arith.constant 0 : index
    %19 = vector.load %arg15[%c1, %c0_17] : memref<24x128xf32, #tpu.memory_space<vmem>>, vector<16x128xf32>
    %c2 = arith.constant 2 : index
    %c0_18 = arith.constant 0 : index
    %20 = vector.load %arg15[%c2, %c0_18] : memref<24x128xf32, #tpu.memory_space<vmem>>, vector<16x128xf32>
    %c3 = arith.constant 3 : index
    %c0_19 = arith.constant 0 : index
    %21 = vector.load %arg15[%c3, %c0_19] : memref<24x128xf32, #tpu.memory_space<vmem>>, vector<16x128xf32>
    %c4_20 = arith.constant 4 : index
    %c0_21 = arith.constant 0 : index
    %22 = vector.load %arg15[%c4_20, %c0_21] : memref<24x128xf32, #tpu.memory_space<vmem>>, vector<16x128xf32>
    %c5 = arith.constant 5 : index
    %c0_22 = arith.constant 0 : index
    %23 = vector.load %arg15[%c5, %c0_22] : memref<24x128xf32, #tpu.memory_space<vmem>>, vector<16x128xf32>
    %c6 = arith.constant 6 : index
    %c0_23 = arith.constant 0 : index
    %24 = vector.load %arg15[%c6, %c0_23] : memref<24x128xf32, #tpu.memory_space<vmem>>, vector<16x128xf32>
    %c7 = arith.constant 7 : index
    %c0_24 = arith.constant 0 : index
    %25 = vector.load %arg15[%c7, %c0_24] : memref<24x128xf32, #tpu.memory_space<vmem>>, vector<16x128xf32>
    %c8 = arith.constant 8 : index
    %c0_25 = arith.constant 0 : index
    %26 = vector.load %arg15[%c8, %c0_25] : memref<24x128xf32, #tpu.memory_space<vmem>>, vector<16x128xf32>
    %27 = tpu.concatenate %18, %19, %20, %21, %22, %23, %24, %25, %26 in 1 : vector<16x128xf32>, vector<16x128xf32>, vector<16x128xf32>, vector<16x128xf32>, vector<16x128xf32>, vector<16x128xf32>, vector<16x128xf32>, vector<16x128xf32>, vector<16x128xf32> -> vector<16x1152xf32>
    %c0_26 = arith.constant 0 : index
    %c0_27 = arith.constant 0 : index
    %28 = vector.load %arg5[%c0_26, %c0_27] : memref<1152x128xf32, #tpu.memory_space<vmem>>, vector<1152x128xf32>
    %cst_28 = arith.constant dense<0.000000e+00> : vector<16x128xf32>
    %29 = tpu.matmul %27, %28, %cst_28 {dimension_numbers = #tpu.dot_dimension_numbers<[1], [0], [0], [1], [0, 0, 1, 1], [], []>} : vector<16x1152xf32>, vector<1152x128xf32>, vector<16x128xf32> -> vector<16x128xf32>
    %c0_29 = arith.constant 0 : index
    %c0_30 = arith.constant 0 : index
    %30 = vector.load %arg6[%c0_29, %c0_30] : memref<1x128xf32, #tpu.memory_space<vmem>>, vector<1x128xf32>
    %31 = vector.broadcast %30 : vector<1x128xf32> to vector<16x128xf32>
    %32 = arith.mulf %29, %31 : vector<16x128xf32>
    %c0_31 = arith.constant 0 : index
    %c0_32 = arith.constant 0 : index
    %33 = vector.load %arg7[%c0_31, %c0_32] : memref<1x128xf32, #tpu.memory_space<vmem>>, vector<1x128xf32>
    %34 = vector.broadcast %33 : vector<1x128xf32> to vector<16x128xf32>
    %35 = arith.addf %32, %34 : vector<16x128xf32>
    %cst_33 = arith.constant 0.000000e+00 : f32
    %36 = vector.broadcast %cst_33 : f32 to vector<16x128xf32>
    %37 = arith.maximumf %35, %36 : vector<16x128xf32>
    %38 = vector.extract_strided_slice %11 {offsets = [0, 128], sizes = [16, 128], strides = [1, 1]} : vector<16x256xf32> to vector<16x128xf32>
    %cst_34 = arith.constant 0.000000e+00 : f32
    %39 = vector.broadcast %cst_34 : f32 to vector<8x128xf32>
    %c0_35 = arith.constant 0 : index
    %c0_36 = arith.constant 0 : index
    %40 = vector.load %arg16[%c0_35, %c0_36] : memref<32x128xf32, #tpu.memory_space<vmem>>, vector<8x128xf32>
    tpu.vector_store %arg16[%c0_35, %c0_36], %39 {strides = array<i32>} : memref<32x128xf32, #tpu.memory_space<vmem>>, vector<8x128xf32>,
    %cst_37 = arith.constant 0.000000e+00 : f32
    %41 = vector.broadcast %cst_37 : f32 to vector<8x128xf32>
    %c24 = arith.constant 24 : index
    %c0_38 = arith.constant 0 : index
    %42 = vector.load %arg16[%c24, %c0_38] : memref<32x128xf32, #tpu.memory_space<vmem>>, vector<8x128xf32>
    tpu.vector_store %arg16[%c24, %c0_38], %41 {strides = array<i32>} : memref<32x128xf32, #tpu.memory_space<vmem>>, vector<8x128xf32>,
    %c8_39 = arith.constant 8 : index
    %c0_40 = arith.constant 0 : index
    %43 = vector.load %arg16[%c8_39, %c0_40] : memref<32x128xf32, #tpu.memory_space<vmem>>, vector<16x128xf32>
    tpu.vector_store %arg16[%c8_39, %c0_40], %38 {strides = array<i32>} : memref<32x128xf32, #tpu.memory_space<vmem>>, vector<16x128xf32>,
    %c0_41 = arith.constant 0 : index
    %c0_42 = arith.constant 0 : index
    %44 = vector.load %arg16[%c0_41, %c0_42] : memref<32x128xf32, #tpu.memory_space<vmem>>, vector<16x128xf32>
    %c1_43 = arith.constant 1 : index
    %c0_44 = arith.constant 0 : index
    %45 = vector.load %arg16[%c1_43, %c0_44] : memref<32x128xf32, #tpu.memory_space<vmem>>, vector<16x128xf32>
    %c2_45 = arith.constant 2 : index
    %c0_46 = arith.constant 0 : index
    %46 = vector.load %arg16[%c2_45, %c0_46] : memref<32x128xf32, #tpu.memory_space<vmem>>, vector<16x128xf32>
    %c3_47 = arith.constant 3 : index
    %c0_48 = arith.constant 0 : index
    %47 = vector.load %arg16[%c3_47, %c0_48] : memref<32x128xf32, #tpu.memory_space<vmem>>, vector<16x128xf32>
    %c4_49 = arith.constant 4 : index
    %c0_50 = arith.constant 0 : index
    %48 = vector.load %arg16[%c4_49, %c0_50] : memref<32x128xf32, #tpu.memory_space<vmem>>, vector<16x128xf32>
    %c5_51 = arith.constant 5 : index
    %c0_52 = arith.constant 0 : index
    %49 = vector.load %arg16[%c5_51, %c0_52] : memref<32x128xf32, #tpu.memory_space<vmem>>, vector<16x128xf32>
    %c6_53 = arith.constant 6 : index
    %c0_54 = arith.constant 0 : index
    %50 = vector.load %arg16[%c6_53, %c0_54] : memref<32x128xf32, #tpu.memory_space<vmem>>, vector<16x128xf32>
    %c7_55 = arith.constant 7 : index
    %c0_56 = arith.constant 0 : index
    %51 = vector.load %arg16[%c7_55, %c0_56] : memref<32x128xf32, #tpu.memory_space<vmem>>, vector<16x128xf32>
    %c8_57 = arith.constant 8 : index
    %c0_58 = arith.constant 0 : index
    %52 = vector.load %arg16[%c8_57, %c0_58] : memref<32x128xf32, #tpu.memory_space<vmem>>, vector<16x128xf32>
    %c9 = arith.constant 9 : index
    %c0_59 = arith.constant 0 : index
    %53 = vector.load %arg16[%c9, %c0_59] : memref<32x128xf32, #tpu.memory_space<vmem>>, vector<16x128xf32>
    %c10 = arith.constant 10 : index
    %c0_60 = arith.constant 0 : index
    %54 = vector.load %arg16[%c10, %c0_60] : memref<32x128xf32, #tpu.memory_space<vmem>>, vector<16x128xf32>
    %c11 = arith.constant 11 : index
    %c0_61 = arith.constant 0 : index
    %55 = vector.load %arg16[%c11, %c0_61] : memref<32x128xf32, #tpu.memory_space<vmem>>, vector<16x128xf32>
    %c12 = arith.constant 12 : index
    %c0_62 = arith.constant 0 : index
    %56 = vector.load %arg16[%c12, %c0_62] : memref<32x128xf32, #tpu.memory_space<vmem>>, vector<16x128xf32>
    %c13 = arith.constant 13 : index
    %c0_63 = arith.constant 0 : index
    %57 = vector.load %arg16[%c13, %c0_63] : memref<32x128xf32, #tpu.memory_space<vmem>>, vector<16x128xf32>
    %c14 = arith.constant 14 : index
    %c0_64 = arith.constant 0 : index
    %58 = vector.load %arg16[%c14, %c0_64] : memref<32x128xf32, #tpu.memory_space<vmem>>, vector<16x128xf32>
    %c15 = arith.constant 15 : index
    %c0_65 = arith.constant 0 : index
    %59 = vector.load %arg16[%c15, %c0_65] : memref<32x128xf32, #tpu.memory_space<vmem>>, vector<16x128xf32>
    %c16 = arith.constant 16 : index
    %c0_66 = arith.constant 0 : index
    %60 = vector.load %arg16[%c16, %c0_66] : memref<32x128xf32, #tpu.memory_space<vmem>>, vector<16x128xf32>
    %61 = tpu.concatenate %44, %45, %46, %47, %48, %49, %50, %51, %52, %53, %54, %55, %56, %57, %58, %59 in 1 : vector<16x128xf32>, vector<16x128xf32>, vector<16x128xf32>, vector<16x128xf32>, vector<16x128xf32>, vector<16x128xf32>, vector<16x128xf32>, vector<16x128xf32>, vector<16x128xf32>, vector<16x128xf32>, vector<16x128xf32>, vector<16x128xf32>, vector<16x128xf32>, vector<16x128xf32>, vector<16x128xf32>, vector<16x128xf32> -> vector<16x2048xf32>
    %62 = tpu.concatenate %61, %60 in 1 : vector<16x2048xf32>, vector<16x128xf32> -> vector<16x2176xf32>
    %c0_67 = arith.constant 0 : index
    %c0_68 = arith.constant 0 : index
    %63 = vector.load %arg8[%c0_67, %c0_68] : memref<2176x128xf32, #tpu.memory_space<vmem>>, vector<2176x128xf32>
    %cst_69 = arith.constant dense<0.000000e+00> : vector<16x128xf32>
    %64 = tpu.matmul %62, %63, %cst_69 {dimension_numbers = #tpu.dot_dimension_numbers<[1], [0], [0], [1], [0, 0, 1, 1], [], []>} : vector<16x2176xf32>, vector<2176x128xf32>, vector<16x128xf32> -> vector<16x128xf32>
    %c0_70 = arith.constant 0 : index
    %c0_71 = arith.constant 0 : index
    %65 = vector.load %arg9[%c0_70, %c0_71] : memref<1x128xf32, #tpu.memory_space<vmem>>, vector<1x128xf32>
    %66 = vector.broadcast %65 : vector<1x128xf32> to vector<16x128xf32>
    %67 = arith.mulf %64, %66 : vector<16x128xf32>
    %c0_72 = arith.constant 0 : index
    %c0_73 = arith.constant 0 : index
    %68 = vector.load %arg10[%c0_72, %c0_73] : memref<1x128xf32, #tpu.memory_space<vmem>>, vector<1x128xf32>
    %69 = vector.broadcast %68 : vector<1x128xf32> to vector<16x128xf32>
    %70 = arith.addf %67, %69 : vector<16x128xf32>
    %cst_74 = arith.constant 0.000000e+00 : f32
    %71 = vector.broadcast %cst_74 : f32 to vector<16x128xf32>
    %72 = arith.maximumf %70, %71 : vector<16x128xf32>
    %73 = tpu.concatenate %37, %72 in 1 : vector<16x128xf32>, vector<16x128xf32> -> vector<16x256xf32>
    %c0_75 = arith.constant 0 : index
    %c0_76 = arith.constant 0 : index
    %74 = vector.load %arg11[%c0_75, %c0_76] : memref<64x256xf32, #tpu.memory_space<vmem>>, vector<64x256xf32>
    %cst_77 = arith.constant dense<0.000000e+00> : vector<16x256xf32>
    %75 = tpu.matmul %1, %74, %cst_77 {dimension_numbers = #tpu.dot_dimension_numbers<[1], [0], [0], [1], [0, 0, 1, 1], [], []>} : vector<16x64xf32>, vector<64x256xf32>, vector<16x256xf32> -> vector<16x256xf32>
    %c0_78 = arith.constant 0 : index
    %c0_79 = arith.constant 0 : index
    %76 = vector.load %arg12[%c0_78, %c0_79] : memref<1x256xf32, #tpu.memory_space<vmem>>, vector<1x256xf32>
    %77 = vector.broadcast %76 : vector<1x256xf32> to vector<16x256xf32>
    %78 = arith.mulf %75, %77 : vector<16x256xf32>
    %c0_80 = arith.constant 0 : index
    %c0_81 = arith.constant 0 : index
    %79 = vector.load %arg13[%c0_80, %c0_81] : memref<1x256xf32, #tpu.memory_space<vmem>>, vector<1x256xf32>
    %80 = vector.broadcast %79 : vector<1x256xf32> to vector<16x256xf32>
    %81 = arith.addf %78, %80 : vector<16x256xf32>
    %cst_82 = arith.constant 0.000000e+00 : f32
    %82 = vector.broadcast %cst_82 : f32 to vector<16x256xf32>
    %83 = arith.maximumf %81, %82 : vector<16x256xf32>
    %84 = arith.addf %73, %83 : vector<16x256xf32>
    %c0_83 = arith.constant 0 : index
    %c0_84 = arith.constant 0 : index
    %c0_85 = arith.constant 0 : index
    %85 = vector.load %arg14[%c0_83, %c0_84, %c0_85] : memref<1x16x256xf32, #tpu.memory_space<vmem>>, vector<1x16x256xf32>
    %86 = vector.shape_cast %85 : vector<1x16x256xf32> to vector<16x256xf32>
    %87 = vector.shape_cast %84 : vector<16x256xf32> to vector<1x16x256xf32>
    tpu.vector_store %arg14[%c0_83, %c0_84, %c0_85], %87 {strides = array<i32>} : memref<1x16x256xf32, #tpu.memory_space<vmem>>, vector<1x16x256xf32>,
    return
  }
  func.func @transform_0(%arg0: i32) -> (i32, i32, i32) {
    %c0_i32 = arith.constant 0 : i32
    %c0_i32_0 = arith.constant 0 : i32
    %c0_i32_1 = arith.constant 0 : i32
    return %arg0, %c0_i32, %c0_i32_0 : i32, i32, i32
  }
  func.func @transform_1(%arg0: i32) -> (i32, i32) {
    %c0_i32 = arith.constant 0 : i32
    %c0_i32_0 = arith.constant 0 : i32
    %c0_i32_1 = arith.constant 0 : i32
    return %c0_i32, %c0_i32_0 : i32, i32
  }
  func.func @transform_2(%arg0: i32) -> (i32, i32) {
    %c0_i32 = arith.constant 0 : i32
    %c0_i32_0 = arith.constant 0 : i32
    %c0_i32_1 = arith.constant 0 : i32
    return %c0_i32, %c0_i32_0 : i32, i32
  }
  func.func @transform_3(%arg0: i32) -> (i32, i32) {
    %c0_i32 = arith.constant 0 : i32
    %c0_i32_0 = arith.constant 0 : i32
    %c0_i32_1 = arith.constant 0 : i32
    return %c0_i32, %c0_i32_0 : i32, i32
  }
  func.func @transform_4(%arg0: i32) -> (i32, i32) {
    %c0_i32 = arith.constant 0 : i32
    %c0_i32_0 = arith.constant 0 : i32
    %c0_i32_1 = arith.constant 0 : i32
    return %c0_i32, %c0_i32_0 : i32, i32
  }
  func.func @transform_5(%arg0: i32) -> (i32, i32) {
    %c0_i32 = arith.constant 0 : i32
    %c0_i32_0 = arith.constant 0 : i32
    %c0_i32_1 = arith.constant 0 : i32
    return %c0_i32, %c0_i32_0 : i32, i32
  }
  func.func @transform_6(%arg0: i32) -> (i32, i32) {
    %c0_i32 = arith.constant 0 : i32
    %c0_i32_0 = arith.constant 0 : i32
    %c0_i32_1 = arith.constant 0 : i32
    return %c0_i32, %c0_i32_0 : i32, i32
  }
  func.func @transform_7(%arg0: i32) -> (i32, i32) {
    %c0_i32 = arith.constant 0 : i32
    %c0_i32_0 = arith.constant 0 : i32
    %c0_i32_1 = arith.constant 0 : i32
    return %c0_i32, %c0_i32_0 : i32, i32
  }
  func.func @transform_8(%arg0: i32) -> (i32, i32) {
    %c0_i32 = arith.constant 0 : i32
    %c0_i32_0 = arith.constant 0 : i32
    %c0_i32_1 = arith.constant 0 : i32
    return %c0_i32, %c0_i32_0 : i32, i32
  }
  func.func @transform_9(%arg0: i32) -> (i32, i32) {
    %c0_i32 = arith.constant 0 : i32
    %c0_i32_0 = arith.constant 0 : i32
    %c0_i32_1 = arith.constant 0 : i32
    return %c0_i32, %c0_i32_0 : i32, i32
  }
  func.func @transform_10(%arg0: i32) -> (i32, i32) {
    %c0_i32 = arith.constant 0 : i32
    %c0_i32_0 = arith.constant 0 : i32
    %c0_i32_1 = arith.constant 0 : i32
    return %c0_i32, %c0_i32_0 : i32, i32
  }
  func.func @transform_11(%arg0: i32) -> (i32, i32) {
    %c0_i32 = arith.constant 0 : i32
    %c0_i32_0 = arith.constant 0 : i32
    %c0_i32_1 = arith.constant 0 : i32
    return %c0_i32, %c0_i32_0 : i32, i32
  }
  func.func @transform_12(%arg0: i32) -> (i32, i32) {
    %c0_i32 = arith.constant 0 : i32
    %c0_i32_0 = arith.constant 0 : i32
    %c0_i32_1 = arith.constant 0 : i32
    return %c0_i32, %c0_i32_0 : i32, i32
  }
  func.func @transform_13(%arg0: i32) -> (i32, i32, i32) {
    %c0_i32 = arith.constant 0 : i32
    %c0_i32_0 = arith.constant 0 : i32
    %c0_i32_1 = arith.constant 0 : i32
    return %arg0, %c0_i32, %c0_i32_0 : i32, i32, i32
  }
}

</mosaic_0001>

<llo_original>
// kernel: tpu_custom_call.1
$region0: #{tpu_custom_call.1}
  #allocation0 [shape = 'u32[]', space=smem, size = 0x4, offset = 0x4, fixed_abs, tag = 'smem constant byte address 0x4 - core index']
  #allocation1 [shape = 'u32[144,128]{1,0:T(1,128)}', space=vmem, size = 0x12000, scoped, tag = 'internal scratch']
  #allocation2 [shape = 'f32[24,128]{1,0:T(8,128)}', space=vmem, size = 0x3000, scoped, tag = 'scratch operand']
  #allocation3 [shape = 'f32[32,128]{1,0:T(8,128)}', space=vmem, size = 0x4000, scoped, tag = 'scratch operand']
  %s0 = inlined_call_operand.hbm [shape: f32[2,16,64], index: 0, kind: input, shape index: {}]
  %s1 = inlined_call_operand.hbm [shape: f32[64,256], index: 1, kind: input, shape index: {}]
  %s2 = inlined_call_operand.hbm [shape: f32[1,256], index: 2, kind: input, shape index: {}]
  %s3 = inlined_call_operand.hbm [shape: f32[1,256], index: 3, kind: input, shape index: {}]
  %s4 = inlined_call_operand.hbm [shape: f32[1152,128], index: 4, kind: input, shape index: {}]
  %s5 = inlined_call_operand.hbm [shape: f32[1,128], index: 5, kind: input, shape index: {}]
  %s6 = inlined_call_operand.hbm [shape: f32[1,128], index: 6, kind: input, shape index: {}]
  %s7 = inlined_call_operand.hbm [shape: f32[2176,128], index: 7, kind: input, shape index: {}]
  %s8 = inlined_call_operand.hbm [shape: f32[1,128], index: 8, kind: input, shape index: {}]
  %s9 = inlined_call_operand.hbm [shape: f32[1,128], index: 9, kind: input, shape index: {}]
  %s10 = inlined_call_operand.hbm [shape: f32[64,256], index: 10, kind: input, shape index: {}]
  %s11 = inlined_call_operand.hbm [shape: f32[1,256], index: 11, kind: input, shape index: {}]
  %s12 = inlined_call_operand.hbm [shape: f32[1,256], index: 12, kind: input, shape index: {}]
  %s13 = inlined_call_operand.hbm [shape: f32[2,16,256], index: 13, kind: output, shape index: {}]
  %s14 = sld [smem:[#allocation0]]
  $region137: #{tpu_custom_call.1} parent=0
    _
  %s16 = ssub.s32 1, %s14
  %s17 = scalar_select 0, %s16, %s14
  $region1: #{tpu_custom_call.1} parent=0
    #allocation4 [shape = 'u8[16384]{0}', space=vmem, size = 0x4000, scoped, tag = 'input window, operand 0']
    #allocation5 [shape = 's32[2]{0}', space=sflag, size = 0x8, scoped, tag = 'scoped memory for tpu_custom_call.1']
    #allocation6 [shape = 's32[2]{0}', space=sflag, size = 0x8, scoped, tag = 'scoped memory for tpu_custom_call.1']
    #allocation7 [shape = 'u8[65536]{0}', space=vmem, size = 0x10000, scoped, tag = 'input window, operand 1, single buffered']
    #allocation8 [shape = 's32[1]{0}', space=sflag, size = 0x4, scoped, tag = 'scoped memory for tpu_custom_call.1']
    #allocation9 [shape = 'u8[1024]{0}', space=vmem, size = 0x400, scoped, tag = 'input window, operand 2, single buffered']
    #allocation10 [shape = 'u8[1024]{0}', space=vmem, size = 0x400, scoped, tag = 'input window, operand 3, single buffered']
    #allocation11 [shape = 's32[1]{0}', space=sflag, size = 0x4, scoped, tag = 'scoped memory for tpu_custom_call.1']
    #allocation12 [shape = 'u8[589824]{0}', space=vmem, size = 0x90000, scoped, tag = 'input window, operand 4, single buffered']
    #allocation13 [shape = 'u8[512]{0}', space=vmem, size = 0x400, scoped, tag = 'input window, operand 5, single buffered']
    #allocation14 [shape = 's32[1]{0}', space=sflag, size = 0x4, scoped, tag = 'scoped memory for tpu_custom_call.1']
    #allocation15 [shape = 'u8[512]{0}', space=vmem, size = 0x400, scoped, tag = 'input window, operand 6, single buffered']
    #allocation16 [shape = 'u8[1114112]{0}', space=vmem, size = 0x110000, scoped, tag = 'input window, operand 7, single buffered']
    #allocation17 [shape = 's32[1]{0}', space=sflag, size = 0x4, scoped, tag = 'scoped memory for tpu_custom_call.1']
    #allocation18 [shape = 'u8[512]{0}', space=vmem, size = 0x400, scoped, tag = 'input window, operand 8, single buffered']
    #allocation19 [shape = 'u8[512]{0}', space=vmem, size = 0x400, scoped, tag = 'input window, operand 9, single buffered']
    #allocation20 [shape = 's32[1]{0}', space=sflag, size = 0x4, scoped, tag = 'scoped memory for tpu_custom_call.1']
    #allocation21 [shape = 'u8[65536]{0}', space=vmem, size = 0x10000, scoped, tag = 'input window, operand 10, single buffered']
    #allocation22 [shape = 'u8[1024]{0}', space=vmem, size = 0x400, scoped, tag = 'input window, operand 11, single buffered']
    #allocation23 [shape = 's32[1]{0}', space=sflag, size = 0x4, scoped, tag = 'scoped memory for tpu_custom_call.1']
    #allocation24 [shape = 'u8[1024]{0}', space=vmem, size = 0x400, scoped, tag = 'input window, operand 12, single buffered']
    #allocation25 [shape = 'u8[32768]{0}', space=vmem, size = 0x8000, scoped, tag = 'output window, operand 0']
    %18 = vsyncpa [#allocation5], 0
    %s19 = scalar_lea.sflag [#allocation5], 1
    %20 = vsyncpa %s19, 0
    %21 = vsyncpa [#allocation8], 0
    %22 = vsyncpa [#allocation11], 0
    %23 = vsyncpa [#allocation14], 0
    %24 = vsyncpa [#allocation17], 0
    %25 = vsyncpa [#allocation20], 0
    %26 = vsyncpa [#allocation23], 0
    %27 = vsyncpa [#allocation6], 0
    %s28 = scalar_lea.sflag [#allocation6], 1
    %29 = vsyncpa %s28, 0
    loop: start=0, step=1, limit=4
    $region2: #{tpu_custom_call.1} parent=1 // loop_pre_header
      _
    $region3: #{tpu_custom_call.1} parent=1 // loop_header
      %s31 = sphi 0, %s35
      %p32 = scmp.ge.s32.totalorder %s31, 4
      %s41 = sphi 0, %s43
      %s44 = sphi 0, %s41
      %s45 = sphi 0, %s44
      %s61 = sphi 0, %s45
      %s65 = sphi 0, %s65
      %s67 = sphi 0, %s65
      %s68 = sphi 0, %s67
      %s82 = sphi 0, %s68
      %s86 = sphi 0, %s86
      %s88 = sphi 0, %s86
      %s89 = sphi 0, %s88
      %s103 = sphi 0, %s89
      %s107 = sphi 0, %s107
      %s109 = sphi 0, %s107
      %s110 = sphi 0, %s109
      %s124 = sphi 0, %s110
      %s128 = sphi 0, %s128
      %s130 = sphi 0, %s128
      %s131 = sphi 0, %s130
      %s145 = sphi 0, %s131
      %s149 = sphi 0, %s149
      %s151 = sphi 0, %s149
      %s152 = sphi 0, %s151
      %s166 = sphi 0, %s152
      %s170 = sphi 0, %s170
      %s172 = sphi 0, %s170
      %s173 = sphi 0, %s172
      %s187 = sphi 0, %s173
      %s191 = sphi 0, %s191
      %s193 = sphi 0, %s191
      %s194 = sphi 0, %s193
      %s208 = sphi 0, %s194
      %s212 = sphi 0, %s212
      %s214 = sphi 0, %s212
      %s215 = sphi 0, %s214
      %s229 = sphi 0, %s215
      %s233 = sphi 0, %s233
      %s235 = sphi 0, %s233
      %s236 = sphi 0, %s235
      %s250 = sphi 0, %s236
      %s254 = sphi 0, %s254
      %s256 = sphi 0, %s254
      %s257 = sphi 0, %s256
      %s271 = sphi 0, %s257
      %s275 = sphi 0, %s275
      %s277 = sphi 0, %s275
      %s278 = sphi 0, %s277
      %s292 = sphi 0, %s278
      %s296 = sphi 0, %s296
      %s298 = sphi 0, %s296
      %s299 = sphi 0, %s298
      %s313 = sphi 0, %s299
      %s319 = sphi 0, %s321
      %s322 = sphi 0, %s319
      %s323 = sphi 0, %s322
      %s339 = sphi 0, %s323
    $region4: #{tpu_custom_call.1} parent=1 // loop_header_branch
      %34 = sbr.rel (%p32) target = $region8
    $region5: #{tpu_custom_call.1} parent=1 // loop_body
      %s36 = ssub.s32 %s31, 1
      %s37 = ssub.s32 %s31, 2
      %s38 = sadd.s32 %s31, 1
      %s39 = ssub.s32 %s31, %s38
      %p40 = scmp.eq.s32.totalorder %s39, 0
      %s42 = sadd.s32 %s41, 1
      %s43 = scalar_select %p40, %s41, %s42
      %p46 = pneg %p40
      %p47 = scmp.eq.s32.totalorder %s31, 1
      %p48 = por %p46, %p47
      %p49 = scmp.ne.s32.totalorder %s41, %s44
      %p50 = scmp.eq.s32.totalorder %s31, 0
      %p51 = por %p49, %p50
      %p52 = scmp.ne.s32.totalorder %s41, %s44
      %p53 = scmp.eq.s32.totalorder %s36, 1
      %p54 = por %p52, %p53
      %p55 = scmp.ne.s32.totalorder %s44, %s45
      %p56 = scmp.eq.s32.totalorder %s36, 0
      %p57 = por %p55, %p56
      %p58 = scmp.ne.s32.totalorder %s44, %s45
      %p59 = scmp.eq.s32.totalorder %s37, 1
      %p60 = por %p58, %p59
      %p62 = scmp.ne.s32.totalorder %s45, %s61
      %p63 = scmp.eq.s32.totalorder %s37, 0
      %p64 = por %p62, %p63
      %s66 = sadd.s32 %s65, 1
      %p69 = scmp.eq.s32.totalorder %s31, 1
      %p70 = scmp.ne.s32.totalorder %s65, %s67
      %p71 = scmp.eq.s32.totalorder %s31, 0
      %p72 = por %p70, %p71
      %p73 = scmp.ne.s32.totalorder %s65, %s67
      %p74 = scmp.eq.s32.totalorder %s36, 1
      %p75 = por %p73, %p74
      %p76 = scmp.ne.s32.totalorder %s67, %s68
      %p77 = scmp.eq.s32.totalorder %s36, 0
      %p78 = por %p76, %p77
      %p79 = scmp.ne.s32.totalorder %s67, %s68
      %p80 = scmp.eq.s32.totalorder %s37, 1
      %p81 = por %p79, %p80
      %p83 = scmp.ne.s32.totalorder %s68, %s82
      %p84 = scmp.eq.s32.totalorder %s37, 0
      %p85 = por %p83, %p84
      %s87 = sadd.s32 %s86, 1
      %p90 = scmp.eq.s32.totalorder %s31, 1
      %p91 = scmp.ne.s32.totalorder %s86, %s88
      %p92 = scmp.eq.s32.totalorder %s31, 0
      %p93 = por %p91, %p92
      %p94 = scmp.ne.s32.totalorder %s86, %s88
      %p95 = scmp.eq.s32.totalorder %s36, 1
      %p96 = por %p94, %p95
      %p97 = scmp.ne.s32.totalorder %s88, %s89
      %p98 = scmp.eq.s32.totalorder %s36, 0
      %p99 = por %p97, %p98
      %p100 = scmp.ne.s32.totalorder %s88, %s89
      %p101 = scmp.eq.s32.totalorder %s37, 1
      %p102 = por %p100, %p101
      %p104 = scmp.ne.s32.totalorder %s89, %s103
      %p105 = scmp.eq.s32.totalorder %s37, 0
      %p106 = por %p104, %p105
      %s108 = sadd.s32 %s107, 1
      %p111 = scmp.eq.s32.totalorder %s31, 1
      %p112 = scmp.ne.s32.totalorder %s107, %s109
      %p113 = scmp.eq.s32.totalorder %s31, 0
      %p114 = por %p112, %p113
      %p115 = scmp.ne.s32.totalorder %s107, %s109
      %p116 = scmp.eq.s32.totalorder %s36, 1
      %p117 = por %p115, %p116
      %p118 = scmp.ne.s32.totalorder %s109, %s110
      %p119 = scmp.eq.s32.totalorder %s36, 0
      %p120 = por %p118, %p119
      %p121 = scmp.ne.s32.totalorder %s109, %s110
      %p122 = scmp.eq.s32.totalorder %s37, 1
      %p123 = por %p121, %p122
      %p125 = scmp.ne.s32.totalorder %s110, %s124
      %p126 = scmp.eq.s32.totalorder %s37, 0
      %p127 = por %p125, %p126
      %s129 = sadd.s32 %s128, 1
      %p132 = scmp.eq.s32.totalorder %s31, 1
      %p133 = scmp.ne.s32.totalorder %s128, %s130
      %p134 = scmp.eq.s32.totalorder %s31, 0
      %p135 = por %p133, %p134
      %p136 = scmp.ne.s32.totalorder %s128, %s130
      %p137 = scmp.eq.s32.totalorder %s36, 1
      %p138 = por %p136, %p137
      %p139 = scmp.ne.s32.totalorder %s130, %s131
      %p140 = scmp.eq.s32.totalorder %s36, 0
      %p141 = por %p139, %p140
      %p142 = scmp.ne.s32.totalorder %s130, %s131
      %p143 = scmp.eq.s32.totalorder %s37, 1
      %p144 = por %p142, %p143
      %p146 = scmp.ne.s32.totalorder %s131, %s145
      %p147 = scmp.eq.s32.totalorder %s37, 0
      %p148 = por %p146, %p147
      %s150 = sadd.s32 %s149, 1
      %p153 = scmp.eq.s32.totalorder %s31, 1
      %p154 = scmp.ne.s32.totalorder %s149, %s151
      %p155 = scmp.eq.s32.totalorder %s31, 0
      %p156 = por %p154, %p155
      %p157 = scmp.ne.s32.totalorder %s149, %s151
      %p158 = scmp.eq.s32.totalorder %s36, 1
      %p159 = por %p157, %p158
      %p160 = scmp.ne.s32.totalorder %s151, %s152
      %p161 = scmp.eq.s32.totalorder %s36, 0
      %p162 = por %p160, %p161
      %p163 = scmp.ne.s32.totalorder %s151, %s152
      %p164 = scmp.eq.s32.totalorder %s37, 1
      %p165 = por %p163, %p164
      %p167 = scmp.ne.s32.totalorder %s152, %s166
      %p168 = scmp.eq.s32.totalorder %s37, 0
      %p169 = por %p167, %p168
      %s171 = sadd.s32 %s170, 1
      %p174 = scmp.eq.s32.totalorder %s31, 1
      %p175 = scmp.ne.s32.totalorder %s170, %s172
      %p176 = scmp.eq.s32.totalorder %s31, 0
      %p177 = por %p175, %p176
      %p178 = scmp.ne.s32.totalorder %s170, %s172
      %p179 = scmp.eq.s32.totalorder %s36, 1
      %p180 = por %p178, %p179
      %p181 = scmp.ne.s32.totalorder %s172, %s173
      %p182 = scmp.eq.s32.totalorder %s36, 0
      %p183 = por %p181, %p182
      %p184 = scmp.ne.s32.totalorder %s172, %s173
      %p185 = scmp.eq.s32.totalorder %s37, 1
      %p186 = por %p184, %p185
      %p188 = scmp.ne.s32.totalorder %s173, %s187
      %p189 = scmp.eq.s32.totalorder %s37, 0
      %p190 = por %p188, %p189
      %s192 = sadd.s32 %s191, 1
      %p195 = scmp.eq.s32.totalorder %s31, 1
      %p196 = scmp.ne.s32.totalorder %s191, %s193
      %p197 = scmp.eq.s32.totalorder %s31, 0
      %p198 = por %p196, %p197
      %p199 = scmp.ne.s32.totalorder %s191, %s193
      %p200 = scmp.eq.s32.totalorder %s36, 1
      %p201 = por %p199, %p200
      %p202 = scmp.ne.s32.totalorder %s193, %s194
      %p203 = scmp.eq.s32.totalorder %s36, 0
      %p204 = por %p202, %p203
      %p205 = scmp.ne.s32.totalorder %s193, %s194
      %p206 = scmp.eq.s32.totalorder %s37, 1
      %p207 = por %p205, %p206
      %p209 = scmp.ne.s32.totalorder %s194, %s208
      %p210 = scmp.eq.s32.totalorder %s37, 0
      %p211 = por %p209, %p210
      %s213 = sadd.s32 %s212, 1
      %p216 = scmp.eq.s32.totalorder %s31, 1
      %p217 = scmp.ne.s32.totalorder %s212, %s214
      %p218 = scmp.eq.s32.totalorder %s31, 0
      %p219 = por %p217, %p218
      %p220 = scmp.ne.s32.totalorder %s212, %s214
      %p221 = scmp.eq.s32.totalorder %s36, 1
      %p222 = por %p220, %p221
      %p223 = scmp.ne.s32.totalorder %s214, %s215
      %p224 = scmp.eq.s32.totalorder %s36, 0
      %p225 = por %p223, %p224
      %p226 = scmp.ne.s32.totalorder %s214, %s215
      %p227 = scmp.eq.s32.totalorder %s37, 1
      %p228 = por %p226, %p227
      %p230 = scmp.ne.s32.totalorder %s215, %s229
      %p231 = scmp.eq.s32.totalorder %s37, 0
      %p232 = por %p230, %p231
      %s234 = sadd.s32 %s233, 1
      %p237 = scmp.eq.s32.totalorder %s31, 1
      %p238 = scmp.ne.s32.totalorder %s233, %s235
      %p239 = scmp.eq.s32.totalorder %s31, 0
      %p240 = por %p238, %p239
      %p241 = scmp.ne.s32.totalorder %s233, %s235
      %p242 = scmp.eq.s32.totalorder %s36, 1
      %p243 = por %p241, %p242
      %p244 = scmp.ne.s32.totalorder %s235, %s236
      %p245 = scmp.eq.s32.totalorder %s36, 0
      %p246 = por %p244, %p245
      %p247 = scmp.ne.s32.totalorder %s235, %s236
      %p248 = scmp.eq.s32.totalorder %s37, 1
      %p249 = por %p247, %p248
      %p251 = scmp.ne.s32.totalorder %s236, %s250
      %p252 = scmp.eq.s32.totalorder %s37, 0
      %p253 = por %p251, %p252
      %s255 = sadd.s32 %s254, 1
      %p258 = scmp.eq.s32.totalorder %s31, 1
      %p259 = scmp.ne.s32.totalorder %s254, %s256
      %p260 = scmp.eq.s32.totalorder %s31, 0
      %p261 = por %p259, %p260
      %p262 = scmp.ne.s32.totalorder %s254, %s256
      %p263 = scmp.eq.s32.totalorder %s36, 1
      %p264 = por %p262, %p263
      %p265 = scmp.ne.s32.totalorder %s256, %s257
      %p266 = scmp.eq.s32.totalorder %s36, 0
      %p267 = por %p265, %p266
      %p268 = scmp.ne.s32.totalorder %s256, %s257
      %p269 = scmp.eq.s32.totalorder %s37, 1
      %p270 = por %p268, %p269
      %p272 = scmp.ne.s32.totalorder %s257, %s271
      %p273 = scmp.eq.s32.totalorder %s37, 0
      %p274 = por %p272, %p273
      %s276 = sadd.s32 %s275, 1
      %p279 = scmp.eq.s32.totalorder %s31, 1
      %p280 = scmp.ne.s32.totalorder %s275, %s277
      %p281 = scmp.eq.s32.totalorder %s31, 0
      %p282 = por %p280, %p281
      %p283 = scmp.ne.s32.totalorder %s275, %s277
      %p284 = scmp.eq.s32.totalorder %s36, 1
      %p285 = por %p283, %p284
      %p286 = scmp.ne.s32.totalorder %s277, %s278
      %p287 = scmp.eq.s32.totalorder %s36, 0
      %p288 = por %p286, %p287
      %p289 = scmp.ne.s32.totalorder %s277, %s278
      %p290 = scmp.eq.s32.totalorder %s37, 1
      %p291 = por %p289, %p290
      %p293 = scmp.ne.s32.totalorder %s278, %s292
      %p294 = scmp.eq.s32.totalorder %s37, 0
      %p295 = por %p293, %p294
      %s297 = sadd.s32 %s296, 1
      %p300 = scmp.eq.s32.totalorder %s31, 1
      %p301 = scmp.ne.s32.totalorder %s296, %s298
      %p302 = scmp.eq.s32.totalorder %s31, 0
      %p303 = por %p301, %p302
      %p304 = scmp.ne.s32.totalorder %s296, %s298
      %p305 = scmp.eq.s32.totalorder %s36, 1
      %p306 = por %p304, %p305
      %p307 = scmp.ne.s32.totalorder %s298, %s299
      %p308 = scmp.eq.s32.totalorder %s36, 0
      %p309 = por %p307, %p308
      %p310 = scmp.ne.s32.totalorder %s298, %s299
      %p311 = scmp.eq.s32.totalorder %s37, 1
      %p312 = por %p310, %p311
      %p314 = scmp.ne.s32.totalorder %s299, %s313
      %p315 = scmp.eq.s32.totalorder %s37, 0
      %p316 = por %p314, %p315
      %s317 = ssub.s32 %s31, %s38
      %p318 = scmp.eq.s32.totalorder %s317, 0
      %s320 = sadd.s32 %s319, 1
      %s321 = scalar_select %p318, %s319, %s320
      %p324 = pneg %p318
      %p325 = scmp.eq.s32.totalorder %s31, 1
      %p326 = por %p324, %p325
      %p327 = scmp.ne.s32.totalorder %s319, %s322
      %p328 = scmp.eq.s32.totalorder %s31, 0
      %p329 = por %p327, %p328
      %p330 = scmp.ne.s32.totalorder %s319, %s322
      %p331 = scmp.eq.s32.totalorder %s36, 1
      %p332 = por %p330, %p331
      %p333 = scmp.ne.s32.totalorder %s322, %s323
      %p334 = scmp.eq.s32.totalorder %s36, 0
      %p335 = por %p333, %p334
      %p336 = scmp.ne.s32.totalorder %s322, %s323
      %p337 = scmp.eq.s32.totalorder %s37, 1
      %p338 = por %p336, %p337
      %p340 = scmp.ne.s32.totalorder %s323, %s339
      %p341 = scmp.eq.s32.totalorder %s37, 0
      %p342 = por %p340, %p341
      %p343 = scmp.le.s32.totalorder 1, %s31
      %p344 = scmp.lt.s32.totalorder %s31, 3
      %p345 = pnand %p343, %p344
      %p346 = pneg %p345
      // Predicated region
      $region9: #{tpu_custom_call.1} parent=5 // pred_check
        _
      $region10: #{tpu_custom_call.1} parent=5 // pred_check_branch
        %348 = sbr.rel (%p345) target = $region12
      $region11: #{tpu_custom_call.1} parent=5 // pred_region
        %s349 = ssub.s32 %s31, 1
        // Predicated region
        $region13: #{tpu_custom_call.1} parent=11 // pred_check
          %p350 = pneg %p78
        $region14: #{tpu_custom_call.1} parent=11 // pred_check_branch
          %352 = sbr.rel (%p350) target = $region16
        $region15: #{tpu_custom_call.1} parent=11 // pred_region
          %s354 = ssub.s32 2048, 2048
          %355 = vsyncadd [#allocation8], %s354
          %s356 = sshll.u32 [#allocation7], 4
          %s357 = int_to_ptr.vmem [resolvable:$true] %s356
          %362 = dma.hbm_to_vmem [thread:$0]  %s1, 2048, %s357, [#allocation8], 256, 256, 16
        $region16: #{tpu_custom_call.1} parent=11 // pred_fallthru
          _
        // Predicated region
        $region17: #{tpu_custom_call.1} parent=11 // pred_check
          %p363 = pneg %p99
        $region18: #{tpu_custom_call.1} parent=11 // pred_check_branch
          %365 = sbr.rel (%p363) target = $region20
        $region19: #{tpu_custom_call.1} parent=11 // pred_region
          %s367 = ssub.s32 32, 32
          %368 = vsyncadd [#allocation8], %s367
          %s370 = sshll.u32 [#allocation9], 4
          %s371 = int_to_ptr.vmem [resolvable:$true] %s370
          %373 = dma.hbm_to_vmem [thread:$0]  %s2, 32, %s371, [#allocation8]
        $region20: #{tpu_custom_call.1} parent=11 // pred_fallthru
          _
        // Predicated region
        $region21: #{tpu_custom_call.1} parent=11 // pred_check
          %p374 = pneg %p120
        $region22: #{tpu_custom_call.1} parent=11 // pred_check_branch
          %376 = sbr.rel (%p374) target = $region24
        $region23: #{tpu_custom_call.1} parent=11 // pred_region
          %s378 = ssub.s32 32, 32
          %379 = vsyncadd [#allocation11], %s378
          %s381 = sshll.u32 [#allocation10], 4
          %s382 = int_to_ptr.vmem [resolvable:$true] %s381
          %384 = dma.hbm_to_vmem [thread:$0]  %s3, 32, %s382, [#allocation11]
        $region24: #{tpu_custom_call.1} parent=11 // pred_fallthru
          _
        // Predicated region
        $region25: #{tpu_custom_call.1} parent=11 // pred_check
          %p385 = pneg %p141
        $region26: #{tpu_custom_call.1} parent=11 // pred_check_branch
          %387 = sbr.rel (%p385) target = $region28
        $region27: #{tpu_custom_call.1} parent=11 // pred_region
          %s389 = ssub.s32 18432, 18432
          %390 = vsyncadd [#allocation11], %s389
          %s391 = sshll.u32 [#allocation12], 4
          %s392 = int_to_ptr.vmem [resolvable:$true] %s391
          %397 = dma.hbm_to_vmem [thread:$0]  %s4, 18432, %s392, [#allocation11], 128, 128, 8
        $region28: #{tpu_custom_call.1} parent=11 // pred_fallthru
          _
        // Predicated region
        $region29: #{tpu_custom_call.1} parent=11 // pred_check
          %p398 = pneg %p162
        $region30: #{tpu_custom_call.1} parent=11 // pred_check_branch
          %400 = sbr.rel (%p398) target = $region32
        $region31: #{tpu_custom_call.1} parent=11 // pred_region
          %s402 = ssub.s32 16, 16
          %403 = vsyncadd [#allocation14], %s402
          %s405 = sshll.u32 [#allocation13], 4
          %s406 = int_to_ptr.vmem [resolvable:$true] %s405
          %408 = dma.hbm_to_vmem [thread:$0]  %s5, 16, %s406, [#allocation14]
        $region32: #{tpu_custom_call.1} parent=11 // pred_fallthru
          _
        // Predicated region
        $region33: #{tpu_custom_call.1} parent=11 // pred_check
          %p409 = pneg %p183
        $region34: #{tpu_custom_call.1} parent=11 // pred_check_branch
          %411 = sbr.rel (%p409) target = $region36
        $region35: #{tpu_custom_call.1} parent=11 // pred_region
          %s413 = ssub.s32 16, 16
          %414 = vsyncadd [#allocation14], %s413
          %s416 = sshll.u32 [#allocation15], 4
          %s417 = int_to_ptr.vmem [resolvable:$true] %s416
          %419 = dma.hbm_to_vmem [thread:$0]  %s6, 16, %s417, [#allocation14]
        $region36: #{tpu_custom_call.1} parent=11 // pred_fallthru
          _
        // Predicated region
        $region37: #{tpu_custom_call.1} parent=11 // pred_check
          %p420 = pneg %p204
        $region38: #{tpu_custom_call.1} parent=11 // pred_check_branch
          %422 = sbr.rel (%p420) target = $region40
        $region39: #{tpu_custom_call.1} parent=11 // pred_region
          %s424 = ssub.s32 34816, 34816
          %425 = vsyncadd [#allocation17], %s424
          %s426 = sshll.u32 [#allocation16], 4
          %s427 = int_to_ptr.vmem [resolvable:$true] %s426
          %432 = dma.hbm_to_vmem [thread:$0]  %s7, 34816, %s427, [#allocation17], 128, 128, 8
        $region40: #{tpu_custom_call.1} parent=11 // pred_fallthru
          _
        // Predicated region
        $region41: #{tpu_custom_call.1} parent=11 // pred_check
          %p433 = pneg %p225
        $region42: #{tpu_custom_call.1} parent=11 // pred_check_branch
          %435 = sbr.rel (%p433) target = $region44
        $region43: #{tpu_custom_call.1} parent=11 // pred_region
          %s437 = ssub.s32 16, 16
          %438 = vsyncadd [#allocation17], %s437
          %s440 = sshll.u32 [#allocation18], 4
          %s441 = int_to_ptr.vmem [resolvable:$true] %s440
          %443 = dma.hbm_to_vmem [thread:$0]  %s8, 16, %s441, [#allocation17]
        $region44: #{tpu_custom_call.1} parent=11 // pred_fallthru
          _
        // Predicated region
        $region45: #{tpu_custom_call.1} parent=11 // pred_check
          %p444 = pneg %p246
        $region46: #{tpu_custom_call.1} parent=11 // pred_check_branch
          %446 = sbr.rel (%p444) target = $region48
        $region47: #{tpu_custom_call.1} parent=11 // pred_region
          %s448 = ssub.s32 16, 16
          %449 = vsyncadd [#allocation20], %s448
          %s451 = sshll.u32 [#allocation19], 4
          %s452 = int_to_ptr.vmem [resolvable:$true] %s451
          %454 = dma.hbm_to_vmem [thread:$0]  %s9, 16, %s452, [#allocation20]
        $region48: #{tpu_custom_call.1} parent=11 // pred_fallthru
          _
        // Predicated region
        $region49: #{tpu_custom_call.1} parent=11 // pred_check
          %p455 = pneg %p267
        $region50: #{tpu_custom_call.1} parent=11 // pred_check_branch
          %457 = sbr.rel (%p455) target = $region52
        $region51: #{tpu_custom_call.1} parent=11 // pred_region
          %s459 = ssub.s32 2048, 2048
          %460 = vsyncadd [#allocation20], %s459
          %s461 = sshll.u32 [#allocation21], 4
          %s462 = int_to_ptr.vmem [resolvable:$true] %s461
          %467 = dma.hbm_to_vmem [thread:$0]  %s10, 2048, %s462, [#allocation20], 256, 256, 16
        $region52: #{tpu_custom_call.1} parent=11 // pred_fallthru
          _
        // Predicated region
        $region53: #{tpu_custom_call.1} parent=11 // pred_check
          %p468 = pneg %p288
        $region54: #{tpu_custom_call.1} parent=11 // pred_check_branch
          %470 = sbr.rel (%p468) target = $region56
        $region55: #{tpu_custom_call.1} parent=11 // pred_region
          %s472 = ssub.s32 32, 32
          %473 = vsyncadd [#allocation23], %s472
          %s475 = sshll.u32 [#allocation22], 4
          %s476 = int_to_ptr.vmem [resolvable:$true] %s475
          %478 = dma.hbm_to_vmem [thread:$0]  %s11, 32, %s476, [#allocation23]
        $region56: #{tpu_custom_call.1} parent=11 // pred_fallthru
          _
        // Predicated region
        $region57: #{tpu_custom_call.1} parent=11 // pred_check
          %p479 = pneg %p309
        $region58: #{tpu_custom_call.1} parent=11 // pred_check_branch
          %481 = sbr.rel (%p479) target = $region60
        $region59: #{tpu_custom_call.1} parent=11 // pred_region
          %s483 = ssub.s32 32, 32
          %484 = vsyncadd [#allocation23], %s483
          %s486 = sshll.u32 [#allocation24], 4
          %s487 = int_to_ptr.vmem [resolvable:$true] %s486
          %489 = dma.hbm_to_vmem [thread:$0]  %s12, 32, %s487, [#allocation23]
        $region60: #{tpu_custom_call.1} parent=11 // pred_fallthru
          _
      $region12: #{tpu_custom_call.1} parent=5 // pred_fallthru
        _
      %p490 = scmp.lt.s32.totalorder %s31, 2
      // Predicated region
      $region61: #{tpu_custom_call.1} parent=5 // pred_check
        %p491 = pneg %p490
      $region62: #{tpu_custom_call.1} parent=5 // pred_check_branch
        %493 = sbr.rel (%p491) target = $region64
      $region63: #{tpu_custom_call.1} parent=5 // pred_region
        // Predicated region
        $region65: #{tpu_custom_call.1} parent=63 // pred_check
          %p494 = pneg %p51
        $region66: #{tpu_custom_call.1} parent=63 // pred_check_branch
          %496 = sbr.rel (%p494) target = $region68
        $region67: #{tpu_custom_call.1} parent=63 // pred_region
          %s497 = sand.u32 %s41, 1
          %s498 = scalar_lea.sflag [#allocation5], %s497
          %s499 = sand.u32 %s41, 1
          %s500 = smul.addr %s499, 16
          %s501 = scalar_lea.vmem [#allocation4], %s500
          %s503 = ssub.s32 256, 256
          %504 = vsyncadd %s498, %s503
          %s505 = smul.addr %s31, 2
          %s506 = smul.addr %s505, 128
          %s507 = scalar_lea.hbm %s0, %s506
          %s508 = sshll.u32 %s501, 4
          %s509 = int_to_ptr.vmem [resolvable:$true] %s508
          %514 = dma.hbm_to_vmem [thread:$0]  %s507, 256, %s509, %s498, 128, 128, 8
        $region68: #{tpu_custom_call.1} parent=63 // pred_fallthru
          _
      $region64: #{tpu_custom_call.1} parent=5 // pred_fallthru
        _
      %p515 = scmp.le.s32.totalorder 1, %s31
      %p516 = scmp.lt.s32.totalorder %s31, 3
      %p517 = pnand %p515, %p516
      %p518 = pneg %p517
      // Predicated region
      $region69: #{tpu_custom_call.1} parent=5 // pred_check
        _
      $region70: #{tpu_custom_call.1} parent=5 // pred_check_branch
        %520 = sbr.rel (%p517) target = $region72
      $region71: #{tpu_custom_call.1} parent=5 // pred_region
        %s521 = ssub.s32 %s31, 1
        %s522 = sand.u32 %s44, 1
        %s523 = scalar_lea.sflag [#allocation5], %s522
        %s524 = sand.u32 %s44, 1
        %s525 = smul.addr %s524, 16
        %s526 = scalar_lea.vmem [#allocation4], %s525
        // Predicated region
        $region73: #{tpu_custom_call.1} parent=71 // pred_check
          %p527 = pneg %p57
        $region74: #{tpu_custom_call.1} parent=71 // pred_check_branch
          %529 = sbr.rel (%p527) target = $region76
        $region75: #{tpu_custom_call.1} parent=71 // pred_region
          %530 = dma.done %s523, 256
        $region76: #{tpu_custom_call.1} parent=71 // pred_fallthru
          _
        // Predicated region
        $region77: #{tpu_custom_call.1} parent=71 // pred_check
          %p531 = pneg %p78
        $region78: #{tpu_custom_call.1} parent=71 // pred_check_branch
          %533 = sbr.rel (%p531) target = $region80
        $region79: #{tpu_custom_call.1} parent=71 // pred_region
          %534 = dma.done [#allocation8], 2048
        $region80: #{tpu_custom_call.1} parent=71 // pred_fallthru
          _
        // Predicated region
        $region81: #{tpu_custom_call.1} parent=71 // pred_check
          %p535 = pneg %p99
        $region82: #{tpu_custom_call.1} parent=71 // pred_check_branch
          %537 = sbr.rel (%p535) target = $region84
        $region83: #{tpu_custom_call.1} parent=71 // pred_region
          %538 = dma.done [#allocation8], 32
        $region84: #{tpu_custom_call.1} parent=71 // pred_fallthru
          _
        // Predicated region
        $region85: #{tpu_custom_call.1} parent=71 // pred_check
          %p539 = pneg %p120
        $region86: #{tpu_custom_call.1} parent=71 // pred_check_branch
          %541 = sbr.rel (%p539) target = $region88
        $region87: #{tpu_custom_call.1} parent=71 // pred_region
          %542 = dma.done [#allocation11], 32
        $region88: #{tpu_custom_call.1} parent=71 // pred_fallthru
          _
        // Predicated region
        $region89: #{tpu_custom_call.1} parent=71 // pred_check
          %p543 = pneg %p141
        $region90: #{tpu_custom_call.1} parent=71 // pred_check_branch
          %545 = sbr.rel (%p543) target = $region92
        $region91: #{tpu_custom_call.1} parent=71 // pred_region
          %546 = dma.done [#allocation11], 18432
        $region92: #{tpu_custom_call.1} parent=71 // pred_fallthru
          _
        // Predicated region
        $region93: #{tpu_custom_call.1} parent=71 // pred_check
          %p547 = pneg %p162
        $region94: #{tpu_custom_call.1} parent=71 // pred_check_branch
          %549 = sbr.rel (%p547) target = $region96
        $region95: #{tpu_custom_call.1} parent=71 // pred_region
          %550 = dma.done [#allocation14], 16
        $region96: #{tpu_custom_call.1} parent=71 // pred_fallthru
          _
        // Predicated region
        $region97: #{tpu_custom_call.1} parent=71 // pred_check
          %p551 = pneg %p183
        $region98: #{tpu_custom_call.1} parent=71 // pred_check_branch
          %553 = sbr.rel (%p551) target = $region100
        $region99: #{tpu_custom_call.1} parent=71 // pred_region
          %554 = dma.done [#allocation14], 16
        $region100: #{tpu_custom_call.1} parent=71 // pred_fallthru
          _
        // Predicated region
        $region101: #{tpu_custom_call.1} parent=71 // pred_check
          %p555 = pneg %p204
        $region102: #{tpu_custom_call.1} parent=71 // pred_check_branch
          %557 = sbr.rel (%p555) target = $region104
        $region103: #{tpu_custom_call.1} parent=71 // pred_region
          %558 = dma.done [#allocation17], 34816
        $region104: #{tpu_custom_call.1} parent=71 // pred_fallthru
          _
        // Predicated region
        $region105: #{tpu_custom_call.1} parent=71 // pred_check
          %p559 = pneg %p225
        $region106: #{tpu_custom_call.1} parent=71 // pred_check_branch
          %561 = sbr.rel (%p559) target = $region108
        $region107: #{tpu_custom_call.1} parent=71 // pred_region
          %562 = dma.done [#allocation17], 16
        $region108: #{tpu_custom_call.1} parent=71 // pred_fallthru
          _
        // Predicated region
        $region109: #{tpu_custom_call.1} parent=71 // pred_check
          %p563 = pneg %p246
        $region110: #{tpu_custom_call.1} parent=71 // pred_check_branch
          %565 = sbr.rel (%p563) target = $region112
        $region111: #{tpu_custom_call.1} parent=71 // pred_region
          %566 = dma.done [#allocation20], 16
        $region112: #{tpu_custom_call.1} parent=71 // pred_fallthru
          _
        // Predicated region
        $region113: #{tpu_custom_call.1} parent=71 // pred_check
          %p567 = pneg %p267
        $region114: #{tpu_custom_call.1} parent=71 // pred_check_branch
          %569 = sbr.rel (%p567) target = $region116
        $region115: #{tpu_custom_call.1} parent=71 // pred_region
          %570 = dma.done [#allocation20], 2048
        $region116: #{tpu_custom_call.1} parent=71 // pred_fallthru
          _
        // Predicated region
        $region117: #{tpu_custom_call.1} parent=71 // pred_check
          %p571 = pneg %p288
        $region118: #{tpu_custom_call.1} parent=71 // pred_check_branch
          %573 = sbr.rel (%p571) target = $region120
        $region119: #{tpu_custom_call.1} parent=71 // pred_region
          %574 = dma.done [#allocation23], 32
        $region120: #{tpu_custom_call.1} parent=71 // pred_fallthru
          _
        // Predicated region
        $region121: #{tpu_custom_call.1} parent=71 // pred_check
          %p575 = pneg %p309
        $region122: #{tpu_custom_call.1} parent=71 // pred_check_branch
          %577 = sbr.rel (%p575) target = $region124
        $region123: #{tpu_custom_call.1} parent=71 // pred_region
          %578 = dma.done [#allocation23], 32
        $region124: #{tpu_custom_call.1} parent=71 // pred_fallthru
          _
        %s579 = sand.u32 %s44, 1
        %s580 = scalar_lea.sflag [#allocation5], %s579
        %s581 = sand.u32 %s44, 1
        %s582 = smul.addr %s581, 16
        %s583 = scalar_lea.vmem [#allocation4], %s582
        %p584 = pneg %p57
        %p585 = pneg %p54
        %p586 = pneg %p78
        %p587 = pneg %p75
        %p588 = pneg %p99
        %p589 = pneg %p96
        %p590 = pneg %p120
        %p591 = pneg %p117
        %p592 = pneg %p141
        %p593 = pneg %p138
        %p594 = pneg %p162
        %p595 = pneg %p159
        %p596 = pneg %p183
        %p597 = pneg %p180
        %p598 = pneg %p204
        %p599 = pneg %p201
        %p600 = pneg %p225
        %p601 = pneg %p222
        %p602 = pneg %p246
        %p603 = pneg %p243
        %p604 = pneg %p267
        %p605 = pneg %p264
        %p606 = pneg %p288
        %p607 = pneg %p285
        %p608 = pneg %p309
        %p609 = pneg %p306
        %p610 = pneg %p335
        %p611 = pneg %p332
        %s612 = sand.u32 %s322, 1
        %s613 = scalar_lea.sflag [#allocation6], %s612
        %s614 = sand.u32 %s322, 1
        %s615 = smul.addr %s614, 32
        %s616 = scalar_lea.vmem [#allocation25], %s615
        %v617 = vld [vmem:[%s526] sm:$0xff]
        %v618 = vld [vmem:[%s526 + $0x8] sm:$0xff]
        %v619 = vld [vmem:[#allocation7] sm:$0xff]
        %v620 = vld [vmem:[#allocation7 + $0x8] sm:$0xff]
        %v621 = vld [vmem:[#allocation7 + $0x10] sm:$0xff]
        %v622 = vld [vmem:[#allocation7 + $0x18] sm:$0xff]
        %v623 = vld [vmem:[#allocation7 + $0x20] sm:$0xff]
        %v624 = vld [vmem:[#allocation7 + $0x28] sm:$0xff]
        %v625 = vld [vmem:[#allocation7 + $0x30] sm:$0xff]
        %v626 = vld [vmem:[#allocation7 + $0x38] sm:$0xff]
        %v627 = vld [vmem:[#allocation7 + $0x40] sm:$0xff]
        %v628 = vld [vmem:[#allocation7 + $0x48] sm:$0xff]
        %v629 = vld [vmem:[#allocation7 + $0x50] sm:$0xff]
        %v630 = vld [vmem:[#allocation7 + $0x58] sm:$0xff]
        %v631 = vld [vmem:[#allocation7 + $0x60] sm:$0xff]
        %v632 = vld [vmem:[#allocation7 + $0x68] sm:$0xff]
        %v633 = vld [vmem:[#allocation7 + $0x70] sm:$0xff]
        %v634 = vld [vmem:[#allocation7 + $0x78] sm:$0xff]
        %vm635 = vcmask 523264
        %v637 = vsel %vm635, %v617, 0
        %v640 = vsel %vm635, %v618, 0
        %642 = vmatprep.subr.mxu0 %v620
        %643 = vmatpush1.msra.mxu0 %v619
        %644 = vmatprep.subr.mxu0 %v622
        %645 = vmatpush1.msra.mxu0 %v621
        %646 = vmatprep.subr.mxu0 %v624
        %647 = vmatpush1.msra.mxu0 %v623
        %648 = vmatprep.subr.mxu0 %v626
        %649 = vmatpush1.msra.mxu0 %v625
        %650 = vmatprep.subr.mxu0 %v628
        %651 = vmatpush1.msra.mxu0 %v627
        %652 = vmatprep.subr.mxu0 %v630
        %653 = vmatpush1.msra.mxu0 %v629
        %654 = vmatprep.subr.mxu0 %v632
        %655 = vmatpush1.msra.mxu0 %v631
        %656 = vmatprep.subr.mxu0 %v634
        %657 = vmatpush1.msra.mxu0 %v633
        %658 = vmatprep.subr.mxu0 0.0
        %659 = vmatpush1.msra.mxu0 0.0
        %660 = vmatprep.subr.mxu0 0.0
        %661 = vmatpush1.msra.mxu0 0.0
        %662 = vmatprep.subr.mxu0 0.0
        %663 = vmatpush1.msra.mxu0 0.0
        %664 = vmatprep.subr.mxu0 0.0
        %665 = vmatpush1.msra.mxu0 0.0
        %666 = vmatprep.subr.mxu0 0.0
        %667 = vmatpush1.msra.mxu0 0.0
        %668 = vmatprep.subr.mxu0 0.0
        %669 = vmatpush1.msra.mxu0 0.0
        %670 = vmatprep.subr.mxu0 0.0
        %671 = vmatpush1.msra.mxu0 0.0
        %672 = vmatprep.subr.mxu0 0.0
        %673 = vmatpush1.msra.mxu0 0.0
        %674 = vmatprep.subr.mxu0 0.0
        %675 = vmatpush1.msra.mxu0 0.0
        %676 = vmatprep.subr.mxu0 0.0
        %677 = vmatpush1.msra.mxu0 0.0
        %678 = vmatprep.subr.mxu0 0.0
        %679 = vmatpush1.msra.mxu0 0.0
        %680 = vmatprep.subr.mxu0 0.0
        %681 = vmatpush1.msra.mxu0 0.0
        %682 = vmatprep.subr.mxu0 0.0
        %683 = vmatpush1.msra.mxu0 0.0
        %684 = vmatprep.subr.mxu0 0.0
        %685 = vmatpush1.msra.mxu0 0.0
        %686 = vmatprep.subr.mxu0 0.0
        %687 = vmatpush1.msra.mxu0 0.0
        %688 = vmatprep.subr.mxu0 0.0
        %689 = vmatpush1.msra.mxu0 0.0
        %690 = vmatprep.subr.mxu0 0.0
        %691 = vmatpush1.msra.mxu0 0.0
        %692 = vmatprep.subr.mxu0 0.0
        %693 = vmatpush1.msra.mxu0 0.0
        %694 = vmatprep.subr.mxu0 0.0
        %695 = vmatpush1.msra.mxu0 0.0
        %696 = vmatprep.subr.mxu0 0.0
        %697 = vmatpush1.msra.mxu0 0.0
        %698 = vmatprep.subr.mxu0 0.0
        %699 = vmatpush1.msra.mxu0 0.0
        %700 = vmatprep.subr.mxu0 0.0
        %701 = vmatpush1.msra.mxu0 0.0
        %702 = vmatprep.subr.mxu0 0.0
        %703 = vmatpush1.msra.mxu0 0.0
        %704 = vmatprep.subr.mxu0 0.0
        %705 = vmatpush1.msra.mxu0 0.0
        %706 = vmatprep.mubr.f32.mxu0 0.0
        %707 = vmatmul.mubr.f32.gmra.mrb[0].mxu0 %v637
        %v708 = vpop.f32.mrb[0].mxu0
        %v709 = vadd.f32 0.0, %v708
        %v710 = vpop.f32.mrb[0].mxu0
        %v711 = vadd.f32 0.0, %v710
        %712 = vmatprep.mubr.f32.mxu0 0.0
        %713 = vmatmul.mubr.f32.gmra.mrb[0].mxu0 %v640
        %v714 = vpop.f32.mrb[0].mxu0
        %v715 = vadd.f32 0.0, %v714
        %v716 = vpop.f32.mrb[0].mxu0
        %v717 = vadd.f32 0.0, %v716
        %718 = vdwg.mxu0
        %v719 = vld [vmem:[#allocation9] sm:$0x3]
        %v721 = vlaneseq
        %v722 = vshrl.u32 %v721, 7
        %v723 = vsub.s32 0, %v722
        %v724 = vrot.slane %v719, %v723
        %v725 = vlaneseq
        %v726 = vshrl.u32 %v725, 7
        %v727 = vsub.s32 1, %v726
        %v728 = vrot.slane %v719, %v727
        %v731 = vmul.f32 %v709, %v724
        %v732 = vmul.f32 %v711, %v728
        %v733 = vmul.f32 %v715, %v724
        %v734 = vmul.f32 %v717, %v728
        %v735 = vld [vmem:[#allocation10] sm:$0x3]
        %v737 = vlaneseq
        %v738 = vshrl.u32 %v737, 7
        %v739 = vsub.s32 0, %v738
        %v740 = vrot.slane %v735, %v739
        %v741 = vlaneseq
        %v742 = vshrl.u32 %v741, 7
        %v743 = vsub.s32 1, %v742
        %v744 = vrot.slane %v735, %v743
        %v747 = vadd.f32 %v731, %v740
        %v748 = vadd.f32 %v732, %v744
        %v749 = vadd.f32 %v733, %v740
        %v750 = vadd.f32 %v734, %v744
        %v751 = vmax.f32 %v747, 0.0
        %v752 = vmax.f32 %v748, 0.0
        %v753 = vmax.f32 %v749, 0.0
        %v754 = vmax.f32 %v750, 0.0
        %755 = vst [vmem:[#allocation2] sm:$0xf] 0.0
        %756 = vst [vmem:[#allocation2 + $0x14] sm:$0xf] 0.0
        %757 = vst [vmem:[#allocation2 + $0x4] sm:$0xff] %v751
        %758 = vst [vmem:[#allocation2 + $0xc] sm:$0xff] %v753
        %v759 = vld [vmem:[#allocation2] sm:$0xff]
        %v760 = vld [vmem:[#allocation2 + $0x8] sm:$0xff]
        %v761 = vld [vmem:[#allocation2 + $0x1] sm:$0xff]
        %v762 = vld [vmem:[#allocation2 + $0x9] sm:$0xff]
        %v763 = vld [vmem:[#allocation2 + $0x2] sm:$0xff]
        %v764 = vld [vmem:[#allocation2 + $0xa] sm:$0xff]
        %v765 = vld [vmem:[#allocation2 + $0x3] sm:$0xff]
        %v766 = vld [vmem:[#allocation2 + $0xb] sm:$0xff]
        %v767 = vld [vmem:[#allocation2 + $0x4] sm:$0xff]
        %v768 = vld [vmem:[#allocation2 + $0xc] sm:$0xff]
        %v769 = vld [vmem:[#allocation2 + $0x5] sm:$0xff]
        %v770 = vld [vmem:[#allocation2 + $0xd] sm:$0xff]
        %v771 = vld [vmem:[#allocation2 + $0x6] sm:$0xff]
        %v772 = vld [vmem:[#allocation2 + $0xe] sm:$0xff]
        %v773 = vld [vmem:[#allocation2 + $0x7] sm:$0xff]
        %v774 = vld [vmem:[#allocation2 + $0xf] sm:$0xff]
        %v775 = vld [vmem:[#allocation2 + $0x8] sm:$0xff]
        %v776 = vld [vmem:[#allocation2 + $0x10] sm:$0xff]
        %v777 = vld [vmem:[#allocation12] sm:$0xff]
        %v778 = vld [vmem:[#allocation12 + $0x8] sm:$0xff]
        %v779 = vld [vmem:[#allocation12 + $0x10] sm:$0xff]
        %v780 = vld [vmem:[#allocation12 + $0x18] sm:$0xff]
        %v781 = vld [vmem:[#allocation12 + $0x20] sm:$0xff]
        %v782 = vld [vmem:[#allocation12 + $0x28] sm:$0xff]
        %v783 = vld [vmem:[#allocation12 + $0x30] sm:$0xff]
        %v784 = vld [vmem:[#allocation12 + $0x38] sm:$0xff]
        %v785 = vld [vmem:[#allocation12 + $0x40] sm:$0xff]
        %v786 = vld [vmem:[#allocation12 + $0x48] sm:$0xff]
        %v787 = vld [vmem:[#allocation12 + $0x50] sm:$0xff]
        %v788 = vld [vmem:[#allocation12 + $0x58] sm:$0xff]
        %v789 = vld [vmem:[#allocation12 + $0x60] sm:$0xff]
        %v790 = vld [vmem:[#allocation12 + $0x68] sm:$0xff]
        %v791 = vld [vmem:[#allocation12 + $0x70] sm:$0xff]
        %v792 = vld [vmem:[#allocation12 + $0x78] sm:$0xff]
        %v793 = vld [vmem:[#allocation12 + $0x80] sm:$0xff]
        %v794 = vld [vmem:[#allocation12 + $0x88] sm:$0xff]
        %v795 = vld [vmem:[#allocation12 + $0x90] sm:$0xff]
        %v796 = vld [vmem:[#allocation12 + $0x98] sm:$0xff]
        %v797 = vld [vmem:[#allocation12 + $0xa0] sm:$0xff]
        %v798 = vld [vmem:[#allocation12 + $0xa8] sm:$0xff]
        %v799 = vld [vmem:[#allocation12 + $0xb0] sm:$0xff]
        %v800 = vld [vmem:[#allocation12 + $0xb8] sm:$0xff]
        %v801 = vld [vmem:[#allocation12 + $0xc0] sm:$0xff]
        %v802 = vld [vmem:[#allocation12 + $0xc8] sm:$0xff]
        %v803 = vld [vmem:[#allocation12 + $0xd0] sm:$0xff]
        %v804 = vld [vmem:[#allocation12 + $0xd8] sm:$0xff]
        %v805 = vld [vmem:[#allocation12 + $0xe0] sm:$0xff]
        %v806 = vld [vmem:[#allocation12 + $0xe8] sm:$0xff]
        %v807 = vld [vmem:[#allocation12 + $0xf0] sm:$0xff]
        %v808 = vld [vmem:[#allocation12 + $0xf8] sm:$0xff]
        %v809 = vld [vmem:[#allocation12 + $0x100] sm:$0xff]
        %v810 = vld [vmem:[#allocation12 + $0x108] sm:$0xff]
        %v811 = vld [vmem:[#allocation12 + $0x110] sm:$0xff]
        %v812 = vld [vmem:[#allocation12 + $0x118] sm:$0xff]
        %v813 = vld [vmem:[#allocation12 + $0x120] sm:$0xff]
        %v814 = vld [vmem:[#allocation12 + $0x128] sm:$0xff]
        %v815 = vld [vmem:[#allocation12 + $0x130] sm:$0xff]
        %v816 = vld [vmem:[#allocation12 + $0x138] sm:$0xff]
        %v817 = vld [vmem:[#allocation12 + $0x140] sm:$0xff]
        %v818 = vld [vmem:[#allocation12 + $0x148] sm:$0xff]
        %v819 = vld [vmem:[#allocation12 + $0x150] sm:$0xff]
        %v820 = vld [vmem:[#allocation12 + $0x158] sm:$0xff]
        %v821 = vld [vmem:[#allocation12 + $0x160] sm:$0xff]
        %v822 = vld [vmem:[#allocation12 + $0x168] sm:$0xff]
        %v823 = vld [vmem:[#allocation12 + $0x170] sm:$0xff]
        %v824 = vld [vmem:[#allocation12 + $0x178] sm:$0xff]
        %v825 = vld [vmem:[#allocation12 + $0x180] sm:$0xff]
        %v826 = vld [vmem:[#allocation12 + $0x188] sm:$0xff]
        %v827 = vld [vmem:[#allocation12 + $0x190] sm:$0xff]
        %v828 = vld [vmem:[#allocation12 + $0x198] sm:$0xff]
        %v829 = vld [vmem:[#allocation12 + $0x1a0] sm:$0xff]
        %v830 = vld [vmem:[#allocation12 + $0x1a8] sm:$0xff]
        %v831 = vld [vmem:[#allocation12 + $0x1b0] sm:$0xff]
        %v832 = vld [vmem:[#allocation12 + $0x1b8] sm:$0xff]
        %v833 = vld [vmem:[#allocation12 + $0x1c0] sm:$0xff]
        %v834 = vld [vmem:[#allocation12 + $0x1c8] sm:$0xff]
        %v835 = vld [vmem:[#allocation12 + $0x1d0] sm:$0xff]
        %v836 = vld [vmem:[#allocation12 + $0x1d8] sm:$0xff]
        %v837 = vld [vmem:[#allocation12 + $0x1e0] sm:$0xff]
        %v838 = vld [vmem:[#allocation12 + $0x1e8] sm:$0xff]
        %v839 = vld [vmem:[#allocation12 + $0x1f0] sm:$0xff]
        %v840 = vld [vmem:[#allocation12 + $0x1f8] sm:$0xff]
        %v841 = vld [vmem:[#allocation12 + $0x200] sm:$0xff]
        %v842 = vld [vmem:[#allocation12 + $0x208] sm:$0xff]
        %v843 = vld [vmem:[#allocation12 + $0x210] sm:$0xff]
        %v844 = vld [vmem:[#allocation12 + $0x218] sm:$0xff]
        %v845 = vld [vmem:[#allocation12 + $0x220] sm:$0xff]
        %v846 = vld [vmem:[#allocation12 + $0x228] sm:$0xff]
        %v847 = vld [vmem:[#allocation12 + $0x230] sm:$0xff]
        %v848 = vld [vmem:[#allocation12 + $0x238] sm:$0xff]
        %v849 = vld [vmem:[#allocation12 + $0x240] sm:$0xff]
        %v850 = vld [vmem:[#allocation12 + $0x248] sm:$0xff]
        %v851 = vld [vmem:[#allocation12 + $0x250] sm:$0xff]
        %v852 = vld [vmem:[#allocation12 + $0x258] sm:$0xff]
        %v853 = vld [vmem:[#allocation12 + $0x260] sm:$0xff]
        %v854 = vld [vmem:[#allocation12 + $0x268] sm:$0xff]
        %v855 = vld [vmem:[#allocation12 + $0x270] sm:$0xff]
        %v856 = vld [vmem:[#allocation12 + $0x278] sm:$0xff]
        %v857 = vld [vmem:[#allocation12 + $0x280] sm:$0xff]
        %v858 = vld [vmem:[#allocation12 + $0x288] sm:$0xff]
        %v859 = vld [vmem:[#allocation12 + $0x290] sm:$0xff]
        %v860 = vld [vmem:[#allocation12 + $0x298] sm:$0xff]
        %v861 = vld [vmem:[#allocation12 + $0x2a0] sm:$0xff]
        %v862 = vld [vmem:[#allocation12 + $0x2a8] sm:$0xff]
        %v863 = vld [vmem:[#allocation12 + $0x2b0] sm:$0xff]
        %v864 = vld [vmem:[#allocation12 + $0x2b8] sm:$0xff]
        %v865 = vld [vmem:[#allocation12 + $0x2c0] sm:$0xff]
        %v866 = vld [vmem:[#allocation12 + $0x2c8] sm:$0xff]
        %v867 = vld [vmem:[#allocation12 + $0x2d0] sm:$0xff]
        %v868 = vld [vmem:[#allocation12 + $0x2d8] sm:$0xff]
        %v869 = vld [vmem:[#allocation12 + $0x2e0] sm:$0xff]
        %v870 = vld [vmem:[#allocation12 + $0x2e8] sm:$0xff]
        %v871 = vld [vmem:[#allocation12 + $0x2f0] sm:$0xff]
        %v872 = vld [vmem:[#allocation12 + $0x2f8] sm:$0xff]
        %v873 = vld [vmem:[#allocation12 + $0x300] sm:$0xff]
        %v874 = vld [vmem:[#allocation12 + $0x308] sm:$0xff]
        %v875 = vld [vmem:[#allocation12 + $0x310] sm:$0xff]
        %v876 = vld [vmem:[#allocation12 + $0x318] sm:$0xff]
        %v877 = vld [vmem:[#allocation12 + $0x320] sm:$0xff]
        %v878 = vld [vmem:[#allocation12 + $0x328] sm:$0xff]
        %v879 = vld [vmem:[#allocation12 + $0x330] sm:$0xff]
        %v880 = vld [vmem:[#allocation12 + $0x338] sm:$0xff]
        %v881 = vld [vmem:[#allocation12 + $0x340] sm:$0xff]
        %v882 = vld [vmem:[#allocation12 + $0x348] sm:$0xff]
        %v883 = vld [vmem:[#allocation12 + $0x350] sm:$0xff]
        %v884 = vld [vmem:[#allocation12 + $0x358] sm:$0xff]
        %v885 = vld [vmem:[#allocation12 + $0x360] sm:$0xff]
        %v886 = vld [vmem:[#allocation12 + $0x368] sm:$0xff]
        %v887 = vld [vmem:[#allocation12 + $0x370] sm:$0xff]
        %v888 = vld [vmem:[#allocation12 + $0x378] sm:$0xff]
        %v889 = vld [vmem:[#allocation12 + $0x380] sm:$0xff]
        %v890 = vld [vmem:[#allocation12 + $0x388] sm:$0xff]
        %v891 = vld [vmem:[#allocation12 + $0x390] sm:$0xff]
        %v892 = vld [vmem:[#allocation12 + $0x398] sm:$0xff]
        %v893 = vld [vmem:[#allocation12 + $0x3a0] sm:$0xff]
        %v894 = vld [vmem:[#allocation12 + $0x3a8] sm:$0xff]
        %v895 = vld [vmem:[#allocation12 + $0x3b0] sm:$0xff]
        %v896 = vld [vmem:[#allocation12 + $0x3b8] sm:$0xff]
        %v897 = vld [vmem:[#allocation12 + $0x3c0] sm:$0xff]
        %v898 = vld [vmem:[#allocation12 + $0x3c8] sm:$0xff]
        %v899 = vld [vmem:[#allocation12 + $0x3d0] sm:$0xff]
        %v900 = vld [vmem:[#allocation12 + $0x3d8] sm:$0xff]
        %v901 = vld [vmem:[#allocation12 + $0x3e0] sm:$0xff]
        %v902 = vld [vmem:[#allocation12 + $0x3e8] sm:$0xff]
        %v903 = vld [vmem:[#allocation12 + $0x3f0] sm:$0xff]
        %v904 = vld [vmem:[#allocation12 + $0x3f8] sm:$0xff]
        %v905 = vld [vmem:[#allocation12 + $0x400] sm:$0xff]
        %v906 = vld [vmem:[#allocation12 + $0x408] sm:$0xff]
        %v907 = vld [vmem:[#allocation12 + $0x410] sm:$0xff]
        %v908 = vld [vmem:[#allocation12 + $0x418] sm:$0xff]
        %v909 = vld [vmem:[#allocation12 + $0x420] sm:$0xff]
        %v910 = vld [vmem:[#allocation12 + $0x428] sm:$0xff]
        %v911 = vld [vmem:[#allocation12 + $0x430] sm:$0xff]
        %v912 = vld [vmem:[#allocation12 + $0x438] sm:$0xff]
        %v913 = vld [vmem:[#allocation12 + $0x440] sm:$0xff]
        %v914 = vld [vmem:[#allocation12 + $0x448] sm:$0xff]
        %v915 = vld [vmem:[#allocation12 + $0x450] sm:$0xff]
        %v916 = vld [vmem:[#allocation12 + $0x458] sm:$0xff]
        %v917 = vld [vmem:[#allocation12 + $0x460] sm:$0xff]
        %v918 = vld [vmem:[#allocation12 + $0x468] sm:$0xff]
        %v919 = vld [vmem:[#allocation12 + $0x470] sm:$0xff]
        %v920 = vld [vmem:[#allocation12 + $0x478] sm:$0xff]
        %921 = vmatprep.subr.mxu0 0.0
        %922 = vmatpush1.msra.mxu0 %v777
        %923 = vmatprep.subr.mxu0 0.0
        %924 = vmatpush1.msra.mxu0 %v778
        %925 = vmatprep.subr.mxu0 0.0
        %926 = vmatpush1.msra.mxu0 %v779
        %927 = vmatprep.subr.mxu0 0.0
        %928 = vmatpush1.msra.mxu0 %v780
        %929 = vmatprep.subr.mxu0 0.0
        %930 = vmatpush1.msra.mxu0 %v781
        %931 = vmatprep.subr.mxu0 0.0
        %932 = vmatpush1.msra.mxu0 %v782
        %933 = vmatprep.subr.mxu0 0.0
        %934 = vmatpush1.msra.mxu0 %v783
        %935 = vmatprep.subr.mxu0 0.0
        %936 = vmatpush1.msra.mxu0 %v784
        %937 = vmatprep.subr.mxu0 0.0
        %938 = vmatpush1.msra.mxu0 %v785
        %939 = vmatprep.subr.mxu0 0.0
        %940 = vmatpush1.msra.mxu0 %v786
        %941 = vmatprep.subr.mxu0 0.0
        %942 = vmatpush1.msra.mxu0 %v787
        %943 = vmatprep.subr.mxu0 0.0
        %944 = vmatpush1.msra.mxu0 %v788
        %945 = vmatprep.subr.mxu0 0.0
        %946 = vmatpush1.msra.mxu0 %v789
        %947 = vmatprep.subr.mxu0 0.0
        %948 = vmatpush1.msra.mxu0 %v790
        %949 = vmatprep.subr.mxu0 0.0
        %950 = vmatpush1.msra.mxu0 %v791
        %951 = vmatprep.subr.mxu0 0.0
        %952 = vmatpush1.msra.mxu0 %v792
        %953 = vmatprep.subr.mxu0 0.0
        %954 = vmatpush1.msra.mxu0 %v793
        %955 = vmatprep.subr.mxu0 0.0
        %956 = vmatpush1.msra.mxu0 %v794
        %957 = vmatprep.subr.mxu0 0.0
        %958 = vmatpush1.msra.mxu0 %v795
        %959 = vmatprep.subr.mxu0 0.0
        %960 = vmatpush1.msra.mxu0 %v796
        %961 = vmatprep.subr.mxu0 0.0
        %962 = vmatpush1.msra.mxu0 %v797
        %963 = vmatprep.subr.mxu0 0.0
        %964 = vmatpush1.msra.mxu0 %v798
        %965 = vmatprep.subr.mxu0 0.0
        %966 = vmatpush1.msra.mxu0 %v799
        %967 = vmatprep.subr.mxu0 0.0
        %968 = vmatpush1.msra.mxu0 %v800
        %969 = vmatprep.subr.mxu0 0.0
        %970 = vmatpush1.msra.mxu0 %v801
        %971 = vmatprep.subr.mxu0 0.0
        %972 = vmatpush1.msra.mxu0 %v802
        %973 = vmatprep.subr.mxu0 0.0
        %974 = vmatpush1.msra.mxu0 %v803
        %975 = vmatprep.subr.mxu0 0.0
        %976 = vmatpush1.msra.mxu0 %v804
        %977 = vmatprep.subr.mxu0 0.0
        %978 = vmatpush1.msra.mxu0 %v805
        %979 = vmatprep.subr.mxu0 0.0
        %980 = vmatpush1.msra.mxu0 %v806
        %981 = vmatprep.subr.mxu0 0.0
        %982 = vmatpush1.msra.mxu0 %v807
        %983 = vmatprep.subr.mxu0 0.0
        %984 = vmatpush1.msra.mxu0 %v808
        %985 = vmatprep.mubr.f32.mxu0 %v761
        %986 = vmatmul.mubr.f32.gmra.mrb[0].mxu0 %v759
        %v987 = vpop.f32.mrb[0].mxu0
        %v988 = vadd.f32 0.0, %v987
        %v989 = vpop.f32.mrb[0].mxu0
        %990 = vmatprep.mubr.f32.mxu0 %v762
        %991 = vmatmul.mubr.f32.gmra.mrb[0].mxu0 %v760
        %v992 = vpop.f32.mrb[0].mxu0
        %v993 = vadd.f32 0.0, %v992
        %v994 = vpop.f32.mrb[0].mxu0
        %995 = vdwg.mxu0
        %996 = vmatprep.subr.mxu0 0.0
        %997 = vmatpush1.msra.mxu0 %v809
        %998 = vmatprep.subr.mxu0 0.0
        %999 = vmatpush1.msra.mxu0 %v810
        %1000 = vmatprep.subr.mxu0 0.0
        %1001 = vmatpush1.msra.mxu0 %v811
        %1002 = vmatprep.subr.mxu0 0.0
        %1003 = vmatpush1.msra.mxu0 %v812
        %1004 = vmatprep.subr.mxu0 0.0
        %1005 = vmatpush1.msra.mxu0 %v813
        %1006 = vmatprep.subr.mxu0 0.0
        %1007 = vmatpush1.msra.mxu0 %v814
        %1008 = vmatprep.subr.mxu0 0.0
        %1009 = vmatpush1.msra.mxu0 %v815
        %1010 = vmatprep.subr.mxu0 0.0
        %1011 = vmatpush1.msra.mxu0 %v816
        %1012 = vmatprep.subr.mxu0 0.0
        %1013 = vmatpush1.msra.mxu0 %v817
        %1014 = vmatprep.subr.mxu0 0.0
        %1015 = vmatpush1.msra.mxu0 %v818
        %1016 = vmatprep.subr.mxu0 0.0
        %1017 = vmatpush1.msra.mxu0 %v819
        %1018 = vmatprep.subr.mxu0 0.0
        %1019 = vmatpush1.msra.mxu0 %v820
        %1020 = vmatprep.subr.mxu0 0.0
        %1021 = vmatpush1.msra.mxu0 %v821
        %1022 = vmatprep.subr.mxu0 0.0
        %1023 = vmatpush1.msra.mxu0 %v822
        %1024 = vmatprep.subr.mxu0 0.0
        %1025 = vmatpush1.msra.mxu0 %v823
        %1026 = vmatprep.subr.mxu0 0.0
        %1027 = vmatpush1.msra.mxu0 %v824
        %1028 = vmatprep.subr.mxu0 0.0
        %1029 = vmatpush1.msra.mxu0 %v825
        %1030 = vmatprep.subr.mxu0 0.0
        %1031 = vmatpush1.msra.mxu0 %v826
        %1032 = vmatprep.subr.mxu0 0.0
        %1033 = vmatpush1.msra.mxu0 %v827
        %1034 = vmatprep.subr.mxu0 0.0
        %1035 = vmatpush1.msra.mxu0 %v828
        %1036 = vmatprep.subr.mxu0 0.0
        %1037 = vmatpush1.msra.mxu0 %v829
        %1038 = vmatprep.subr.mxu0 0.0
        %1039 = vmatpush1.msra.mxu0 %v830
        %1040 = vmatprep.subr.mxu0 0.0
        %1041 = vmatpush1.msra.mxu0 %v831
        %1042 = vmatprep.subr.mxu0 0.0
        %1043 = vmatpush1.msra.mxu0 %v832
        %1044 = vmatprep.subr.mxu0 0.0
        %1045 = vmatpush1.msra.mxu0 %v833
        %1046 = vmatprep.subr.mxu0 0.0
        %1047 = vmatpush1.msra.mxu0 %v834
        %1048 = vmatprep.subr.mxu0 0.0
        %1049 = vmatpush1.msra.mxu0 %v835
        %1050 = vmatprep.subr.mxu0 0.0
        %1051 = vmatpush1.msra.mxu0 %v836
        %1052 = vmatprep.subr.mxu0 0.0
        %1053 = vmatpush1.msra.mxu0 %v837
        %1054 = vmatprep.subr.mxu0 0.0
        %1055 = vmatpush1.msra.mxu0 %v838
        %1056 = vmatprep.subr.mxu0 0.0
        %1057 = vmatpush1.msra.mxu0 %v839
        %1058 = vmatprep.subr.mxu0 0.0
        %1059 = vmatpush1.msra.mxu0 %v840
        %1060 = vmatprep.mubr.f32.mxu0 %v765
        %1061 = vmatmul.mubr.f32.gmra.mrb[0].mxu0 %v763
        %v1062 = vpop.f32.mrb[0].mxu0
        %v1063 = vadd.f32 %v988, %v1062
        %v1064 = vpop.f32.mrb[0].mxu0
        %1065 = vmatprep.mubr.f32.mxu0 %v766
        %1066 = vmatmul.mubr.f32.gmra.mrb[0].mxu0 %v764
        %v1067 = vpop.f32.mrb[0].mxu0
        %v1068 = vadd.f32 %v993, %v1067
        %v1069 = vpop.f32.mrb[0].mxu0
        %1070 = vdwg.mxu0
        %1071 = vmatprep.subr.mxu0 0.0
        %1072 = vmatpush1.msra.mxu0 %v841
        %1073 = vmatprep.subr.mxu0 0.0
        %1074 = vmatpush1.msra.mxu0 %v842
        %1075 = vmatprep.subr.mxu0 0.0
        %1076 = vmatpush1.msra.mxu0 %v843
        %1077 = vmatprep.subr.mxu0 0.0
        %1078 = vmatpush1.msra.mxu0 %v844
        %1079 = vmatprep.subr.mxu0 0.0
        %1080 = vmatpush1.msra.mxu0 %v845
        %1081 = vmatprep.subr.mxu0 0.0
        %1082 = vmatpush1.msra.mxu0 %v846
        %1083 = vmatprep.subr.mxu0 0.0
        %1084 = vmatpush1.msra.mxu0 %v847
        %1085 = vmatprep.subr.mxu0 0.0
        %1086 = vmatpush1.msra.mxu0 %v848
        %1087 = vmatprep.subr.mxu0 0.0
        %1088 = vmatpush1.msra.mxu0 %v849
        %1089 = vmatprep.subr.mxu0 0.0
        %1090 = vmatpush1.msra.mxu0 %v850
        %1091 = vmatprep.subr.mxu0 0.0
        %1092 = vmatpush1.msra.mxu0 %v851
        %1093 = vmatprep.subr.mxu0 0.0
        %1094 = vmatpush1.msra.mxu0 %v852
        %1095 = vmatprep.subr.mxu0 0.0
        %1096 = vmatpush1.msra.mxu0 %v853
        %1097 = vmatprep.subr.mxu0 0.0
        %1098 = vmatpush1.msra.mxu0 %v854
        %1099 = vmatprep.subr.mxu0 0.0
        %1100 = vmatpush1.msra.mxu0 %v855
        %1101 = vmatprep.subr.mxu0 0.0
        %1102 = vmatpush1.msra.mxu0 %v856
        %1103 = vmatprep.subr.mxu0 0.0
        %1104 = vmatpush1.msra.mxu0 %v857
        %1105 = vmatprep.subr.mxu0 0.0
        %1106 = vmatpush1.msra.mxu0 %v858
        %1107 = vmatprep.subr.mxu0 0.0
        %1108 = vmatpush1.msra.mxu0 %v859
        %1109 = vmatprep.subr.mxu0 0.0
        %1110 = vmatpush1.msra.mxu0 %v860
        %1111 = vmatprep.subr.mxu0 0.0
        %1112 = vmatpush1.msra.mxu0 %v861
        %1113 = vmatprep.subr.mxu0 0.0
        %1114 = vmatpush1.msra.mxu0 %v862
        %1115 = vmatprep.subr.mxu0 0.0
        %1116 = vmatpush1.msra.mxu0 %v863
        %1117 = vmatprep.subr.mxu0 0.0
        %1118 = vmatpush1.msra.mxu0 %v864
        %1119 = vmatprep.subr.mxu0 0.0
        %1120 = vmatpush1.msra.mxu0 %v865
        %1121 = vmatprep.subr.mxu0 0.0
        %1122 = vmatpush1.msra.mxu0 %v866
        %1123 = vmatprep.subr.mxu0 0.0
        %1124 = vmatpush1.msra.mxu0 %v867
        %1125 = vmatprep.subr.mxu0 0.0
        %1126 = vmatpush1.msra.mxu0 %v868
        %1127 = vmatprep.subr.mxu0 0.0
        %1128 = vmatpush1.msra.mxu0 %v869
        %1129 = vmatprep.subr.mxu0 0.0
        %1130 = vmatpush1.msra.mxu0 %v870
        %1131 = vmatprep.subr.mxu0 0.0
        %1132 = vmatpush1.msra.mxu0 %v871
        %1133 = vmatprep.subr.mxu0 0.0
        %1134 = vmatpush1.msra.mxu0 %v872
        %1135 = vmatprep.mubr.f32.mxu0 %v769
        %1136 = vmatmul.mubr.f32.gmra.mrb[0].mxu0 %v767
        %v1137 = vpop.f32.mrb[0].mxu0
        %v1138 = vadd.f32 %v1063, %v1137
        %v1139 = vpop.f32.mrb[0].mxu0
        %1140 = vmatprep.mubr.f32.mxu0 %v770
        %1141 = vmatmul.mubr.f32.gmra.mrb[0].mxu0 %v768
        %v1142 = vpop.f32.mrb[0].mxu0
        %v1143 = vadd.f32 %v1068, %v1142
        %v1144 = vpop.f32.mrb[0].mxu0
        %1145 = vdwg.mxu0
        %1146 = vmatprep.subr.mxu0 0.0
        %1147 = vmatpush1.msra.mxu0 %v873
        %1148 = vmatprep.subr.mxu0 0.0
        %1149 = vmatpush1.msra.mxu0 %v874
        %1150 = vmatprep.subr.mxu0 0.0
        %1151 = vmatpush1.msra.mxu0 %v875
        %1152 = vmatprep.subr.mxu0 0.0
        %1153 = vmatpush1.msra.mxu0 %v876
        %1154 = vmatprep.subr.mxu0 0.0
        %1155 = vmatpush1.msra.mxu0 %v877
        %1156 = vmatprep.subr.mxu0 0.0
        %1157 = vmatpush1.msra.mxu0 %v878
        %1158 = vmatprep.subr.mxu0 0.0
        %1159 = vmatpush1.msra.mxu0 %v879
        %1160 = vmatprep.subr.mxu0 0.0
        %1161 = vmatpush1.msra.mxu0 %v880
        %1162 = vmatprep.subr.mxu0 0.0
        %1163 = vmatpush1.msra.mxu0 %v881
        %1164 = vmatprep.subr.mxu0 0.0
        %1165 = vmatpush1.msra.mxu0 %v882
        %1166 = vmatprep.subr.mxu0 0.0
        %1167 = vmatpush1.msra.mxu0 %v883
        %1168 = vmatprep.subr.mxu0 0.0
        %1169 = vmatpush1.msra.mxu0 %v884
        %1170 = vmatprep.subr.mxu0 0.0
        %1171 = vmatpush1.msra.mxu0 %v885
        %1172 = vmatprep.subr.mxu0 0.0
        %1173 = vmatpush1.msra.mxu0 %v886
        %1174 = vmatprep.subr.mxu0 0.0
        %1175 = vmatpush1.msra.mxu0 %v887
        %1176 = vmatprep.subr.mxu0 0.0
        %1177 = vmatpush1.msra.mxu0 %v888
        %1178 = vmatprep.subr.mxu0 0.0
        %1179 = vmatpush1.msra.mxu0 %v889
        %1180 = vmatprep.subr.mxu0 0.0
        %1181 = vmatpush1.msra.mxu0 %v890
        %1182 = vmatprep.subr.mxu0 0.0
        %1183 = vmatpush1.msra.mxu0 %v891
        %1184 = vmatprep.subr.mxu0 0.0
        %1185 = vmatpush1.msra.mxu0 %v892
        %1186 = vmatprep.subr.mxu0 0.0
        %1187 = vmatpush1.msra.mxu0 %v893
        %1188 = vmatprep.subr.mxu0 0.0
        %1189 = vmatpush1.msra.mxu0 %v894
        %1190 = vmatprep.subr.mxu0 0.0
        %1191 = vmatpush1.msra.mxu0 %v895
        %1192 = vmatprep.subr.mxu0 0.0
        %1193 = vmatpush1.msra.mxu0 %v896
        %1194 = vmatprep.subr.mxu0 0.0
        %1195 = vmatpush1.msra.mxu0 %v897
        %1196 = vmatprep.subr.mxu0 0.0
        %1197 = vmatpush1.msra.mxu0 %v898
        %1198 = vmatprep.subr.mxu0 0.0
        %1199 = vmatpush1.msra.mxu0 %v899
        %1200 = vmatprep.subr.mxu0 0.0
        %1201 = vmatpush1.msra.mxu0 %v900
        %1202 = vmatprep.subr.mxu0 0.0
        %1203 = vmatpush1.msra.mxu0 %v901
        %1204 = vmatprep.subr.mxu0 0.0
        %1205 = vmatpush1.msra.mxu0 %v902
        %1206 = vmatprep.subr.mxu0 0.0
        %1207 = vmatpush1.msra.mxu0 %v903
        %1208 = vmatprep.subr.mxu0 0.0
        %1209 = vmatpush1.msra.mxu0 %v904
        %1210 = vmatprep.mubr.f32.mxu0 %v773
        %1211 = vmatmul.mubr.f32.gmra.mrb[0].mxu0 %v771
        %v1212 = vpop.f32.mrb[0].mxu0
        %v1213 = vadd.f32 %v1138, %v1212
        %v1214 = vpop.f32.mrb[0].mxu0
        %1215 = vmatprep.mubr.f32.mxu0 %v774
        %1216 = vmatmul.mubr.f32.gmra.mrb[0].mxu0 %v772
        %v1217 = vpop.f32.mrb[0].mxu0
        %v1218 = vadd.f32 %v1143, %v1217
        %v1219 = vpop.f32.mrb[0].mxu0
        %1220 = vdwg.mxu0
        %1221 = vmatprep.subr.mxu0 0.0
        %1222 = vmatpush1.msra.mxu0 %v905
        %1223 = vmatprep.subr.mxu0 0.0
        %1224 = vmatpush1.msra.mxu0 %v906
        %1225 = vmatprep.subr.mxu0 0.0
        %1226 = vmatpush1.msra.mxu0 %v907
        %1227 = vmatprep.subr.mxu0 0.0
        %1228 = vmatpush1.msra.mxu0 %v908
        %1229 = vmatprep.subr.mxu0 0.0
        %1230 = vmatpush1.msra.mxu0 %v909
        %1231 = vmatprep.subr.mxu0 0.0
        %1232 = vmatpush1.msra.mxu0 %v910
        %1233 = vmatprep.subr.mxu0 0.0
        %1234 = vmatpush1.msra.mxu0 %v911
        %1235 = vmatprep.subr.mxu0 0.0
        %1236 = vmatpush1.msra.mxu0 %v912
        %1237 = vmatprep.subr.mxu0 0.0
        %1238 = vmatpush1.msra.mxu0 %v913
        %1239 = vmatprep.subr.mxu0 0.0
        %1240 = vmatpush1.msra.mxu0 %v914
        %1241 = vmatprep.subr.mxu0 0.0
        %1242 = vmatpush1.msra.mxu0 %v915
        %1243 = vmatprep.subr.mxu0 0.0
        %1244 = vmatpush1.msra.mxu0 %v916
        %1245 = vmatprep.subr.mxu0 0.0
        %1246 = vmatpush1.msra.mxu0 %v917
        %1247 = vmatprep.subr.mxu0 0.0
        %1248 = vmatpush1.msra.mxu0 %v918
        %1249 = vmatprep.subr.mxu0 0.0
        %1250 = vmatpush1.msra.mxu0 %v919
        %1251 = vmatprep.subr.mxu0 0.0
        %1252 = vmatpush1.msra.mxu0 %v920
        %1253 = vmatprep.subr.mxu0 0.0
        %1254 = vmatpush1.msra.mxu0 0.0
        %1255 = vmatprep.subr.mxu0 0.0
        %1256 = vmatpush1.msra.mxu0 0.0
        %1257 = vmatprep.subr.mxu0 0.0
        %1258 = vmatpush1.msra.mxu0 0.0
        %1259 = vmatprep.subr.mxu0 0.0
        %1260 = vmatpush1.msra.mxu0 0.0
        %1261 = vmatprep.subr.mxu0 0.0
        %1262 = vmatpush1.msra.mxu0 0.0
        %1263 = vmatprep.subr.mxu0 0.0
        %1264 = vmatpush1.msra.mxu0 0.0
        %1265 = vmatprep.subr.mxu0 0.0
        %1266 = vmatpush1.msra.mxu0 0.0
        %1267 = vmatprep.subr.mxu0 0.0
        %1268 = vmatpush1.msra.mxu0 0.0
        %1269 = vmatprep.subr.mxu0 0.0
        %1270 = vmatpush1.msra.mxu0 0.0
        %1271 = vmatprep.subr.mxu0 0.0
        %1272 = vmatpush1.msra.mxu0 0.0
        %1273 = vmatprep.subr.mxu0 0.0
        %1274 = vmatpush1.msra.mxu0 0.0
        %1275 = vmatprep.subr.mxu0 0.0
        %1276 = vmatpush1.msra.mxu0 0.0
        %1277 = vmatprep.subr.mxu0 0.0
        %1278 = vmatpush1.msra.mxu0 0.0
        %1279 = vmatprep.subr.mxu0 0.0
        %1280 = vmatpush1.msra.mxu0 0.0
        %1281 = vmatprep.subr.mxu0 0.0
        %1282 = vmatpush1.msra.mxu0 0.0
        %1283 = vmatprep.subr.mxu0 0.0
        %1284 = vmatpush1.msra.mxu0 0.0
        %1285 = vmatprep.mubr.f32.mxu0 0.0
        %1286 = vmatmul.mubr.f32.gmra.mrb[0].mxu0 %v775
        %v1287 = vpop.f32.mrb[0].mxu0
        %v1288 = vadd.f32 %v1213, %v1287
        %v1289 = vpop.f32.mrb[0].mxu0
        %1290 = vmatprep.mubr.f32.mxu0 0.0
        %1291 = vmatmul.mubr.f32.gmra.mrb[0].mxu0 %v776
        %v1292 = vpop.f32.mrb[0].mxu0
        %v1293 = vadd.f32 %v1218, %v1292
        %v1294 = vpop.f32.mrb[0].mxu0
        %1295 = vdwg.mxu0
        %v1296 = vld [vmem:[#allocation13] sm:$0x1]
        %v1298 = vlaneseq
        %v1299 = vshrl.u32 %v1298, 7
        %v1300 = vsub.s32 0, %v1299
        %v1301 = vrot.slane %v1296, %v1300
        %v1303 = vmul.f32 %v1288, %v1301
        %v1304 = vmul.f32 %v1293, %v1301
        %v1305 = vld [vmem:[#allocation15] sm:$0x1]
        %v1307 = vlaneseq
        %v1308 = vshrl.u32 %v1307, 7
        %v1309 = vsub.s32 0, %v1308
        %v1310 = vrot.slane %v1305, %v1309
        %v1312 = vadd.f32 %v1303, %v1310
        %v1313 = vadd.f32 %v1304, %v1310
        %v1314 = vmax.f32 %v1312, 0.0
        %v1315 = vmax.f32 %v1313, 0.0
        %1316 = vst [vmem:[#allocation3] sm:$0xff] 0.0
        %1317 = vst [vmem:[#allocation3 + $0x18] sm:$0xff] 0.0
        %1318 = vst [vmem:[#allocation3 + $0x8] sm:$0xff] %v752
        %1319 = vst [vmem:[#allocation3 + $0x10] sm:$0xff] %v754
        %v1320 = vld [vmem:[#allocation3] sm:$0xff]
        %v1321 = vld [vmem:[#allocation3 + $0x8] sm:$0xff]
        %v1322 = vld [vmem:[#allocation3 + $0x1] sm:$0xff]
        %v1323 = vld [vmem:[#allocation3 + $0x9] sm:$0xff]
        %v1324 = vld [vmem:[#allocation3 + $0x2] sm:$0xff]
        %v1325 = vld [vmem:[#allocation3 + $0xa] sm:$0xff]
        %v1326 = vld [vmem:[#allocation3 + $0x3] sm:$0xff]
        %v1327 = vld [vmem:[#allocation3 + $0xb] sm:$0xff]
        %v1328 = vld [vmem:[#allocation3 + $0x4] sm:$0xff]
        %v1329 = vld [vmem:[#allocation3 + $0xc] sm:$0xff]
        %v1330 = vld [vmem:[#allocation3 + $0x5] sm:$0xff]
        %v1331 = vld [vmem:[#allocation3 + $0xd] sm:$0xff]
        %v1332 = vld [vmem:[#allocation3 + $0x6] sm:$0xff]
        %v1333 = vld [vmem:[#allocation3 + $0xe] sm:$0xff]
        %v1334 = vld [vmem:[#allocation3 + $0x7] sm:$0xff]
        %v1335 = vld [vmem:[#allocation3 + $0xf] sm:$0xff]
        %v1336 = vld [vmem:[#allocation3 + $0x10] sm:$0xff]
        %v1337 = vld [vmem:[#allocation3 + $0x11] sm:$0xff]
        %v1338 = vld [vmem:[#allocation3 + $0x12] sm:$0xff]
        %v1339 = vld [vmem:[#allocation3 + $0x13] sm:$0xff]
        %v1340 = vld [vmem:[#allocation3 + $0x14] sm:$0xff]
        %v1341 = vld [vmem:[#allocation3 + $0x15] sm:$0xff]
        %v1342 = vld [vmem:[#allocation3 + $0x16] sm:$0xff]
        %v1343 = vld [vmem:[#allocation3 + $0x17] sm:$0xff]
        %v1344 = vld [vmem:[#allocation3 + $0x10] sm:$0xff]
        %v1345 = vld [vmem:[#allocation3 + $0x18] sm:$0xff]
        %v1346 = vld [vmem:[#allocation16] sm:$0xff]
        %v1347 = vld [vmem:[#allocation16 + $0x8] sm:$0xff]
        %v1348 = vld [vmem:[#allocation16 + $0x10] sm:$0xff]
        %v1349 = vld [vmem:[#allocation16 + $0x18] sm:$0xff]
        %v1350 = vld [vmem:[#allocation16 + $0x20] sm:$0xff]
        %v1351 = vld [vmem:[#allocation16 + $0x28] sm:$0xff]
        %v1352 = vld [vmem:[#allocation16 + $0x30] sm:$0xff]
        %v1353 = vld [vmem:[#allocation16 + $0x38] sm:$0xff]
        %v1354 = vld [vmem:[#allocation16 + $0x40] sm:$0xff]
        %v1355 = vld [vmem:[#allocation16 + $0x48] sm:$0xff]
        %v1356 = vld [vmem:[#allocation16 + $0x50] sm:$0xff]
        %v1357 = vld [vmem:[#allocation16 + $0x58] sm:$0xff]
        %v1358 = vld [vmem:[#allocation16 + $0x60] sm:$0xff]
        %v1359 = vld [vmem:[#allocation16 + $0x68] sm:$0xff]
        %v1360 = vld [vmem:[#allocation16 + $0x70] sm:$0xff]
        %v1361 = vld [vmem:[#allocation16 + $0x78] sm:$0xff]
        %v1362 = vld [vmem:[#allocation16 + $0x80] sm:$0xff]
        %v1363 = vld [vmem:[#allocation16 + $0x88] sm:$0xff]
        %v1364 = vld [vmem:[#allocation16 + $0x90] sm:$0xff]
        %v1365 = vld [vmem:[#allocation16 + $0x98] sm:$0xff]
        %v1366 = vld [vmem:[#allocation16 + $0xa0] sm:$0xff]
        %v1367 = vld [vmem:[#allocation16 + $0xa8] sm:$0xff]
        %v1368 = vld [vmem:[#allocation16 + $0xb0] sm:$0xff]
        %v1369 = vld [vmem:[#allocation16 + $0xb8] sm:$0xff]
        %v1370 = vld [vmem:[#allocation16 + $0xc0] sm:$0xff]
        %v1371 = vld [vmem:[#allocation16 + $0xc8] sm:$0xff]
        %v1372 = vld [vmem:[#allocation16 + $0xd0] sm:$0xff]
        %v1373 = vld [vmem:[#allocation16 + $0xd8] sm:$0xff]
        %v1374 = vld [vmem:[#allocation16 + $0xe0] sm:$0xff]
        %v1375 = vld [vmem:[#allocation16 + $0xe8] sm:$0xff]
        %v1376 = vld [vmem:[#allocation16 + $0xf0] sm:$0xff]
        %v1377 = vld [vmem:[#allocation16 + $0xf8] sm:$0xff]
        %v1378 = vld [vmem:[#allocation16 + $0x100] sm:$0xff]
        %v1379 = vld [vmem:[#allocation16 + $0x108] sm:$0xff]
        %v1380 = vld [vmem:[#allocation16 + $0x110] sm:$0xff]
        %v1381 = vld [vmem:[#allocation16 + $0x118] sm:$0xff]
        %v1382 = vld [vmem:[#allocation16 + $0x120] sm:$0xff]
        %v1383 = vld [vmem:[#allocation16 + $0x128] sm:$0xff]
        %v1384 = vld [vmem:[#allocation16 + $0x130] sm:$0xff]
        %v1385 = vld [vmem:[#allocation16 + $0x138] sm:$0xff]
        %v1386 = vld [vmem:[#allocation16 + $0x140] sm:$0xff]
        %v1387 = vld [vmem:[#allocation16 + $0x148] sm:$0xff]
        %v1388 = vld [vmem:[#allocation16 + $0x150] sm:$0xff]
        %v1389 = vld [vmem:[#allocation16 + $0x158] sm:$0xff]
        %v1390 = vld [vmem:[#allocation16 + $0x160] sm:$0xff]
        %v1391 = vld [vmem:[#allocation16 + $0x168] sm:$0xff]
        %v1392 = vld [vmem:[#allocation16 + $0x170] sm:$0xff]
        %v1393 = vld [vmem:[#allocation16 + $0x178] sm:$0xff]
        %v1394 = vld [vmem:[#allocation16 + $0x180] sm:$0xff]
        %v1395 = vld [vmem:[#allocation16 + $0x188] sm:$0xff]
        %v1396 = vld [vmem:[#allocation16 + $0x190] sm:$0xff]
        %v1397 = vld [vmem:[#allocation16 + $0x198] sm:$0xff]
        %v1398 = vld [vmem:[#allocation16 + $0x1a0] sm:$0xff]
        %v1399 = vld [vmem:[#allocation16 + $0x1a8] sm:$0xff]
        %v1400 = vld [vmem:[#allocation16 + $0x1b0] sm:$0xff]
        %v1401 = vld [vmem:[#allocation16 + $0x1b8] sm:$0xff]
        %v1402 = vld [vmem:[#allocation16 + $0x1c0] sm:$0xff]
        %v1403 = vld [vmem:[#allocation16 + $0x1c8] sm:$0xff]
        %v1404 = vld [vmem:[#allocation16 + $0x1d0] sm:$0xff]
        %v1405 = vld [vmem:[#allocation16 + $0x1d8] sm:$0xff]
        %v1406 = vld [vmem:[#allocation16 + $0x1e0] sm:$0xff]
        %v1407 = vld [vmem:[#allocation16 + $0x1e8] sm:$0xff]
        %v1408 = vld [vmem:[#allocation16 + $0x1f0] sm:$0xff]
        %v1409 = vld [vmem:[#allocation16 + $0x1f8] sm:$0xff]
        %v1410 = vld [vmem:[#allocation16 + $0x200] sm:$0xff]
        %v1411 = vld [vmem:[#allocation16 + $0x208] sm:$0xff]
        %v1412 = vld [vmem:[#allocation16 + $0x210] sm:$0xff]
        %v1413 = vld [vmem:[#allocation16 + $0x218] sm:$0xff]
        %v1414 = vld [vmem:[#allocation16 + $0x220] sm:$0xff]
        %v1415 = vld [vmem:[#allocation16 + $0x228] sm:$0xff]
        %v1416 = vld [vmem:[#allocation16 + $0x230] sm:$0xff]
        %v1417 = vld [vmem:[#allocation16 + $0x238] sm:$0xff]
        %v1418 = vld [vmem:[#allocation16 + $0x240] sm:$0xff]
        %v1419 = vld [vmem:[#allocation16 + $0x248] sm:$0xff]
        %v1420 = vld [vmem:[#allocation16 + $0x250] sm:$0xff]
        %v1421 = vld [vmem:[#allocation16 + $0x258] sm:$0xff]
        %v1422 = vld [vmem:[#allocation16 + $0x260] sm:$0xff]
        %v1423 = vld [vmem:[#allocation16 + $0x268] sm:$0xff]
        %v1424 = vld [vmem:[#allocation16 + $0x270] sm:$0xff]
        %v1425 = vld [vmem:[#allocation16 + $0x278] sm:$0xff]
        %v1426 = vld [vmem:[#allocation16 + $0x280] sm:$0xff]
        %v1427 = vld [vmem:[#allocation16 + $0x288] sm:$0xff]
        %v1428 = vld [vmem:[#allocation16 + $0x290] sm:$0xff]
        %v1429 = vld [vmem:[#allocation16 + $0x298] sm:$0xff]
        %v1430 = vld [vmem:[#allocation16 + $0x2a0] sm:$0xff]
        %v1431 = vld [vmem:[#allocation16 + $0x2a8] sm:$0xff]
        %v1432 = vld [vmem:[#allocation16 + $0x2b0] sm:$0xff]
        %v1433 = vld [vmem:[#allocation16 + $0x2b8] sm:$0xff]
        %v1434 = vld [vmem:[#allocation16 + $0x2c0] sm:$0xff]
        %v1435 = vld [vmem:[#allocation16 + $0x2c8] sm:$0xff]
        %v1436 = vld [vmem:[#allocation16 + $0x2d0] sm:$0xff]
        %v1437 = vld [vmem:[#allocation16 + $0x2d8] sm:$0xff]
        %v1438 = vld [vmem:[#allocation16 + $0x2e0] sm:$0xff]
        %v1439 = vld [vmem:[#allocation16 + $0x2e8] sm:$0xff]
        %v1440 = vld [vmem:[#allocation16 + $0x2f0] sm:$0xff]
        %v1441 = vld [vmem:[#allocation16 + $0x2f8] sm:$0xff]
        %v1442 = vld [vmem:[#allocation16 + $0x300] sm:$0xff]
        %v1443 = vld [vmem:[#allocation16 + $0x308] sm:$0xff]
        %v1444 = vld [vmem:[#allocation16 + $0x310] sm:$0xff]
        %v1445 = vld [vmem:[#allocation16 + $0x318] sm:$0xff]
        %v1446 = vld [vmem:[#allocation16 + $0x320] sm:$0xff]
        %v1447 = vld [vmem:[#allocation16 + $0x328] sm:$0xff]
        %v1448 = vld [vmem:[#allocation16 + $0x330] sm:$0xff]
        %v1449 = vld [vmem:[#allocation16 + $0x338] sm:$0xff]
        %v1450 = vld [vmem:[#allocation16 + $0x340] sm:$0xff]
        %v1451 = vld [vmem:[#allocation16 + $0x348] sm:$0xff]
        %v1452 = vld [vmem:[#allocation16 + $0x350] sm:$0xff]
        %v1453 = vld [vmem:[#allocation16 + $0x358] sm:$0xff]
        %v1454 = vld [vmem:[#allocation16 + $0x360] sm:$0xff]
        %v1455 = vld [vmem:[#allocation16 + $0x368] sm:$0xff]
        %v1456 = vld [vmem:[#allocation16 + $0x370] sm:$0xff]
        %v1457 = vld [vmem:[#allocation16 + $0x378] sm:$0xff]
        %v1458 = vld [vmem:[#allocation16 + $0x380] sm:$0xff]
        %v1459 = vld [vmem:[#allocation16 + $0x388] sm:$0xff]
        %v1460 = vld [vmem:[#allocation16 + $0x390] sm:$0xff]
        %v1461 = vld [vmem:[#allocation16 + $0x398] sm:$0xff]
        %v1462 = vld [vmem:[#allocation16 + $0x3a0] sm:$0xff]
        %v1463 = vld [vmem:[#allocation16 + $0x3a8] sm:$0xff]
        %v1464 = vld [vmem:[#allocation16 + $0x3b0] sm:$0xff]
        %v1465 = vld [vmem:[#allocation16 + $0x3b8] sm:$0xff]
        %v1466 = vld [vmem:[#allocation16 + $0x3c0] sm:$0xff]
        %v1467 = vld [vmem:[#allocation16 + $0x3c8] sm:$0xff]
        %v1468 = vld [vmem:[#allocation16 + $0x3d0] sm:$0xff]
        %v1469 = vld [vmem:[#allocation16 + $0x3d8] sm:$0xff]
        %v1470 = vld [vmem:[#allocation16 + $0x3e0] sm:$0xff]
        %v1471 = vld [vmem:[#allocation16 + $0x3e8] sm:$0xff]
        %v1472 = vld [vmem:[#allocation16 + $0x3f0] sm:$0xff]
        %v1473 = vld [vmem:[#allocation16 + $0x3f8] sm:$0xff]
        %v1474 = vld [vmem:[#allocation16 + $0x400] sm:$0xff]
        %v1475 = vld [vmem:[#allocation16 + $0x408] sm:$0xff]
        %v1476 = vld [vmem:[#allocation16 + $0x410] sm:$0xff]
        %v1477 = vld [vmem:[#allocation16 + $0x418] sm:$0xff]
        %v1478 = vld [vmem:[#allocation16 + $0x420] sm:$0xff]
        %v1479 = vld [vmem:[#allocation16 + $0x428] sm:$0xff]
        %v1480 = vld [vmem:[#allocation16 + $0x430] sm:$0xff]
        %v1481 = vld [vmem:[#allocation16 + $0x438] sm:$0xff]
        %v1482 = vld [vmem:[#allocation16 + $0x440] sm:$0xff]
        %v1483 = vld [vmem:[#allocation16 + $0x448] sm:$0xff]
        %v1484 = vld [vmem:[#allocation16 + $0x450] sm:$0xff]
        %v1485 = vld [vmem:[#allocation16 + $0x458] sm:$0xff]
        %v1486 = vld [vmem:[#allocation16 + $0x460] sm:$0xff]
        %v1487 = vld [vmem:[#allocation16 + $0x468] sm:$0xff]
        %v1488 = vld [vmem:[#allocation16 + $0x470] sm:$0xff]
        %v1489 = vld [vmem:[#allocation16 + $0x478] sm:$0xff]
        %v1490 = vld [vmem:[#allocation16 + $0x480] sm:$0xff]
        %v1491 = vld [vmem:[#allocation16 + $0x488] sm:$0xff]
        %v1492 = vld [vmem:[#allocation16 + $0x490] sm:$0xff]
        %v1493 = vld [vmem:[#allocation16 + $0x498] sm:$0xff]
        %v1494 = vld [vmem:[#allocation16 + $0x4a0] sm:$0xff]
        %v1495 = vld [vmem:[#allocation16 + $0x4a8] sm:$0xff]
        %v1496 = vld [vmem:[#allocation16 + $0x4b0] sm:$0xff]
        %v1497 = vld [vmem:[#allocation16 + $0x4b8] sm:$0xff]
        %v1498 = vld [vmem:[#allocation16 + $0x4c0] sm:$0xff]
        %v1499 = vld [vmem:[#allocation16 + $0x4c8] sm:$0xff]
        %v1500 = vld [vmem:[#allocation16 + $0x4d0] sm:$0xff]
        %v1501 = vld [vmem:[#allocation16 + $0x4d8] sm:$0xff]
        %v1502 = vld [vmem:[#allocation16 + $0x4e0] sm:$0xff]
        %v1503 = vld [vmem:[#allocation16 + $0x4e8] sm:$0xff]
        %v1504 = vld [vmem:[#allocation16 + $0x4f0] sm:$0xff]
        %v1505 = vld [vmem:[#allocation16 + $0x4f8] sm:$0xff]
        %v1506 = vld [vmem:[#allocation16 + $0x500] sm:$0xff]
        %v1507 = vld [vmem:[#allocation16 + $0x508] sm:$0xff]
        %v1508 = vld [vmem:[#allocation16 + $0x510] sm:$0xff]
        %v1509 = vld [vmem:[#allocation16 + $0x518] sm:$0xff]
        %v1510 = vld [vmem:[#allocation16 + $0x520] sm:$0xff]
        %v1511 = vld [vmem:[#allocation16 + $0x528] sm:$0xff]
        %v1512 = vld [vmem:[#allocation16 + $0x530] sm:$0xff]
        %v1513 = vld [vmem:[#allocation16 + $0x538] sm:$0xff]
        %v1514 = vld [vmem:[#allocation16 + $0x540] sm:$0xff]
        %v1515 = vld [vmem:[#allocation16 + $0x548] sm:$0xff]
        %v1516 = vld [vmem:[#allocation16 + $0x550] sm:$0xff]
        %v1517 = vld [vmem:[#allocation16 + $0x558] sm:$0xff]
        %v1518 = vld [vmem:[#allocation16 + $0x560] sm:$0xff]
        %v1519 = vld [vmem:[#allocation16 + $0x568] sm:$0xff]
        %v1520 = vld [vmem:[#allocation16 + $0x570] sm:$0xff]
        %v1521 = vld [vmem:[#allocation16 + $0x578] sm:$0xff]
        %v1522 = vld [vmem:[#allocation16 + $0x580] sm:$0xff]
        %v1523 = vld [vmem:[#allocation16 + $0x588] sm:$0xff]
        %v1524 = vld [vmem:[#allocation16 + $0x590] sm:$0xff]
        %v1525 = vld [vmem:[#allocation16 + $0x598] sm:$0xff]
        %v1526 = vld [vmem:[#allocation16 + $0x5a0] sm:$0xff]
        %v1527 = vld [vmem:[#allocation16 + $0x5a8] sm:$0xff]
        %v1528 = vld [vmem:[#allocation16 + $0x5b0] sm:$0xff]
        %v1529 = vld [vmem:[#allocation16 + $0x5b8] sm:$0xff]
        %v1530 = vld [vmem:[#allocation16 + $0x5c0] sm:$0xff]
        %v1531 = vld [vmem:[#allocation16 + $0x5c8] sm:$0xff]
        %v1532 = vld [vmem:[#allocation16 + $0x5d0] sm:$0xff]
        %v1533 = vld [vmem:[#allocation16 + $0x5d8] sm:$0xff]
        %v1534 = vld [vmem:[#allocation16 + $0x5e0] sm:$0xff]
        %v1535 = vld [vmem:[#allocation16 + $0x5e8] sm:$0xff]
        %v1536 = vld [vmem:[#allocation16 + $0x5f0] sm:$0xff]
        %v1537 = vld [vmem:[#allocation16 + $0x5f8] sm:$0xff]
        %v1538 = vld [vmem:[#allocation16 + $0x600] sm:$0xff]
        %v1539 = vld [vmem:[#allocation16 + $0x608] sm:$0xff]
        %v1540 = vld [vmem:[#allocation16 + $0x610] sm:$0xff]
        %v1541 = vld [vmem:[#allocation16 + $0x618] sm:$0xff]
        %v1542 = vld [vmem:[#allocation16 + $0x620] sm:$0xff]
        %v1543 = vld [vmem:[#allocation16 + $0x628] sm:$0xff]
        %v1544 = vld [vmem:[#allocation16 + $0x630] sm:$0xff]
        %v1545 = vld [vmem:[#allocation16 + $0x638] sm:$0xff]
        %v1546 = vld [vmem:[#allocation16 + $0x640] sm:$0xff]
        %v1547 = vld [vmem:[#allocation16 + $0x648] sm:$0xff]
        %v1548 = vld [vmem:[#allocation16 + $0x650] sm:$0xff]
        %v1549 = vld [vmem:[#allocation16 + $0x658] sm:$0xff]
        %v1550 = vld [vmem:[#allocation16 + $0x660] sm:$0xff]
        %v1551 = vld [vmem:[#allocation16 + $0x668] sm:$0xff]
        %v1552 = vld [vmem:[#allocation16 + $0x670] sm:$0xff]
        %v1553 = vld [vmem:[#allocation16 + $0x678] sm:$0xff]
        %v1554 = vld [vmem:[#allocation16 + $0x680] sm:$0xff]
        %v1555 = vld [vmem:[#allocation16 + $0x688] sm:$0xff]
        %v1556 = vld [vmem:[#allocation16 + $0x690] sm:$0xff]
        %v1557 = vld [vmem:[#allocation16 + $0x698] sm:$0xff]
        %v1558 = vld [vmem:[#allocation16 + $0x6a0] sm:$0xff]
        %v1559 = vld [vmem:[#allocation16 + $0x6a8] sm:$0xff]
        %v1560 = vld [vmem:[#allocation16 + $0x6b0] sm:$0xff]
        %v1561 = vld [vmem:[#allocation16 + $0x6b8] sm:$0xff]
        %v1562 = vld [vmem:[#allocation16 + $0x6c0] sm:$0xff]
        %v1563 = vld [vmem:[#allocation16 + $0x6c8] sm:$0xff]
        %v1564 = vld [vmem:[#allocation16 + $0x6d0] sm:$0xff]
        %v1565 = vld [vmem:[#allocation16 + $0x6d8] sm:$0xff]
        %v1566 = vld [vmem:[#allocation16 + $0x6e0] sm:$0xff]
        %v1567 = vld [vmem:[#allocation16 + $0x6e8] sm:$0xff]
        %v1568 = vld [vmem:[#allocation16 + $0x6f0] sm:$0xff]
        %v1569 = vld [vmem:[#allocation16 + $0x6f8] sm:$0xff]
        %v1570 = vld [vmem:[#allocation16 + $0x700] sm:$0xff]
        %v1571 = vld [vmem:[#allocation16 + $0x708] sm:$0xff]
        %v1572 = vld [vmem:[#allocation16 + $0x710] sm:$0xff]
        %v1573 = vld [vmem:[#allocation16 + $0x718] sm:$0xff]
        %v1574 = vld [vmem:[#allocation16 + $0x720] sm:$0xff]
        %v1575 = vld [vmem:[#allocation16 + $0x728] sm:$0xff]
        %v1576 = vld [vmem:[#allocation16 + $0x730] sm:$0xff]
        %v1577 = vld [vmem:[#allocation16 + $0x738] sm:$0xff]
        %v1578 = vld [vmem:[#allocation16 + $0x740] sm:$0xff]
        %v1579 = vld [vmem:[#allocation16 + $0x748] sm:$0xff]
        %v1580 = vld [vmem:[#allocation16 + $0x750] sm:$0xff]
        %v1581 = vld [vmem:[#allocation16 + $0x758] sm:$0xff]
        %v1582 = vld [vmem:[#allocation16 + $0x760] sm:$0xff]
        %v1583 = vld [vmem:[#allocation16 + $0x768] sm:$0xff]
        %v1584 = vld [vmem:[#allocation16 + $0x770] sm:$0xff]
        %v1585 = vld [vmem:[#allocation16 + $0x778] sm:$0xff]
        %v1586 = vld [vmem:[#allocation16 + $0x780] sm:$0xff]
        %v1587 = vld [vmem:[#allocation16 + $0x788] sm:$0xff]
        %v1588 = vld [vmem:[#allocation16 + $0x790] sm:$0xff]
        %v1589 = vld [vmem:[#allocation16 + $0x798] sm:$0xff]
        %v1590 = vld [vmem:[#allocation16 + $0x7a0] sm:$0xff]
        %v1591 = vld [vmem:[#allocation16 + $0x7a8] sm:$0xff]
        %v1592 = vld [vmem:[#allocation16 + $0x7b0] sm:$0xff]
        %v1593 = vld [vmem:[#allocation16 + $0x7b8] sm:$0xff]
        %v1594 = vld [vmem:[#allocation16 + $0x7c0] sm:$0xff]
        %v1595 = vld [vmem:[#allocation16 + $0x7c8] sm:$0xff]
        %v1596 = vld [vmem:[#allocation16 + $0x7d0] sm:$0xff]
        %v1597 = vld [vmem:[#allocation16 + $0x7d8] sm:$0xff]
        %v1598 = vld [vmem:[#allocation16 + $0x7e0] sm:$0xff]
        %v1599 = vld [vmem:[#allocation16 + $0x7e8] sm:$0xff]
        %v1600 = vld [vmem:[#allocation16 + $0x7f0] sm:$0xff]
        %v1601 = vld [vmem:[#allocation16 + $0x7f8] sm:$0xff]
        %v1602 = vld [vmem:[#allocation16 + $0x800] sm:$0xff]
        %v1603 = vld [vmem:[#allocation16 + $0x808] sm:$0xff]
        %v1604 = vld [vmem:[#allocation16 + $0x810] sm:$0xff]
        %v1605 = vld [vmem:[#allocation16 + $0x818] sm:$0xff]
        %v1606 = vld [vmem:[#allocation16 + $0x820] sm:$0xff]
        %v1607 = vld [vmem:[#allocation16 + $0x828] sm:$0xff]
        %v1608 = vld [vmem:[#allocation16 + $0x830] sm:$0xff]
        %v1609 = vld [vmem:[#allocation16 + $0x838] sm:$0xff]
        %v1610 = vld [vmem:[#allocation16 + $0x840] sm:$0xff]
        %v1611 = vld [vmem:[#allocation16 + $0x848] sm:$0xff]
        %v1612 = vld [vmem:[#allocation16 + $0x850] sm:$0xff]
        %v1613 = vld [vmem:[#allocation16 + $0x858] sm:$0xff]
        %v1614 = vld [vmem:[#allocation16 + $0x860] sm:$0xff]
        %v1615 = vld [vmem:[#allocation16 + $0x868] sm:$0xff]
        %v1616 = vld [vmem:[#allocation16 + $0x870] sm:$0xff]
        %v1617 = vld [vmem:[#allocation16 + $0x878] sm:$0xff]
        %1618 = vmatprep.subr.mxu0 0.0
        %1619 = vmatpush1.msra.mxu0 %v1346
        %1620 = vmatprep.subr.mxu0 0.0
        %1621 = vmatpush1.msra.mxu0 %v1347
        %1622 = vmatprep.subr.mxu0 0.0
        %1623 = vmatpush1.msra.mxu0 %v1348
        %1624 = vmatprep.subr.mxu0 0.0
        %1625 = vmatpush1.msra.mxu0 %v1349
        %1626 = vmatprep.subr.mxu0 0.0
        %1627 = vmatpush1.msra.mxu0 %v1350
        %1628 = vmatprep.subr.mxu0 0.0
        %1629 = vmatpush1.msra.mxu0 %v1351
        %1630 = vmatprep.subr.mxu0 0.0
        %1631 = vmatpush1.msra.mxu0 %v1352
        %1632 = vmatprep.subr.mxu0 0.0
        %1633 = vmatpush1.msra.mxu0 %v1353
        %1634 = vmatprep.subr.mxu0 0.0
        %1635 = vmatpush1.msra.mxu0 %v1354
        %1636 = vmatprep.subr.mxu0 0.0
        %1637 = vmatpush1.msra.mxu0 %v1355
        %1638 = vmatprep.subr.mxu0 0.0
        %1639 = vmatpush1.msra.mxu0 %v1356
        %1640 = vmatprep.subr.mxu0 0.0
        %1641 = vmatpush1.msra.mxu0 %v1357
        %1642 = vmatprep.subr.mxu0 0.0
        %1643 = vmatpush1.msra.mxu0 %v1358
        %1644 = vmatprep.subr.mxu0 0.0
        %1645 = vmatpush1.msra.mxu0 %v1359
        %1646 = vmatprep.subr.mxu0 0.0
        %1647 = vmatpush1.msra.mxu0 %v1360
        %1648 = vmatprep.subr.mxu0 0.0
        %1649 = vmatpush1.msra.mxu0 %v1361
        %1650 = vmatprep.subr.mxu0 0.0
        %1651 = vmatpush1.msra.mxu0 %v1362
        %1652 = vmatprep.subr.mxu0 0.0
        %1653 = vmatpush1.msra.mxu0 %v1363
        %1654 = vmatprep.subr.mxu0 0.0
        %1655 = vmatpush1.msra.mxu0 %v1364
        %1656 = vmatprep.subr.mxu0 0.0
        %1657 = vmatpush1.msra.mxu0 %v1365
        %1658 = vmatprep.subr.mxu0 0.0
        %1659 = vmatpush1.msra.mxu0 %v1366
        %1660 = vmatprep.subr.mxu0 0.0
        %1661 = vmatpush1.msra.mxu0 %v1367
        %1662 = vmatprep.subr.mxu0 0.0
        %1663 = vmatpush1.msra.mxu0 %v1368
        %1664 = vmatprep.subr.mxu0 0.0
        %1665 = vmatpush1.msra.mxu0 %v1369
        %1666 = vmatprep.subr.mxu0 0.0
        %1667 = vmatpush1.msra.mxu0 %v1370
        %1668 = vmatprep.subr.mxu0 0.0
        %1669 = vmatpush1.msra.mxu0 %v1371
        %1670 = vmatprep.subr.mxu0 0.0
        %1671 = vmatpush1.msra.mxu0 %v1372
        %1672 = vmatprep.subr.mxu0 0.0
        %1673 = vmatpush1.msra.mxu0 %v1373
        %1674 = vmatprep.subr.mxu0 0.0
        %1675 = vmatpush1.msra.mxu0 %v1374
        %1676 = vmatprep.subr.mxu0 0.0
        %1677 = vmatpush1.msra.mxu0 %v1375
        %1678 = vmatprep.subr.mxu0 0.0
        %1679 = vmatpush1.msra.mxu0 %v1376
        %1680 = vmatprep.subr.mxu0 0.0
        %1681 = vmatpush1.msra.mxu0 %v1377
        %1682 = vmatprep.mubr.f32.mxu0 %v1322
        %1683 = vmatmul.mubr.f32.gmra.mrb[0].mxu0 %v1320
        %v1684 = vpop.f32.mrb[0].mxu0
        %v1685 = vadd.f32 0.0, %v1684
        %v1686 = vpop.f32.mrb[0].mxu0
        %1687 = vmatprep.mubr.f32.mxu0 %v1323
        %1688 = vmatmul.mubr.f32.gmra.mrb[0].mxu0 %v1321
        %v1689 = vpop.f32.mrb[0].mxu0
        %v1690 = vadd.f32 0.0, %v1689
        %v1691 = vpop.f32.mrb[0].mxu0
        %1692 = vdwg.mxu0
        %1693 = vmatprep.subr.mxu0 0.0
        %1694 = vmatpush1.msra.mxu0 %v1378
        %1695 = vmatprep.subr.mxu0 0.0
        %1696 = vmatpush1.msra.mxu0 %v1379
        %1697 = vmatprep.subr.mxu0 0.0
        %1698 = vmatpush1.msra.mxu0 %v1380
        %1699 = vmatprep.subr.mxu0 0.0
        %1700 = vmatpush1.msra.mxu0 %v1381
        %1701 = vmatprep.subr.mxu0 0.0
        %1702 = vmatpush1.msra.mxu0 %v1382
        %1703 = vmatprep.subr.mxu0 0.0
        %1704 = vmatpush1.msra.mxu0 %v1383
        %1705 = vmatprep.subr.mxu0 0.0
        %1706 = vmatpush1.msra.mxu0 %v1384
        %1707 = vmatprep.subr.mxu0 0.0
        %1708 = vmatpush1.msra.mxu0 %v1385
        %1709 = vmatprep.subr.mxu0 0.0
        %1710 = vmatpush1.msra.mxu0 %v1386
        %1711 = vmatprep.subr.mxu0 0.0
        %1712 = vmatpush1.msra.mxu0 %v1387
        %1713 = vmatprep.subr.mxu0 0.0
        %1714 = vmatpush1.msra.mxu0 %v1388
        %1715 = vmatprep.subr.mxu0 0.0
        %1716 = vmatpush1.msra.mxu0 %v1389
        %1717 = vmatprep.subr.mxu0 0.0
        %1718 = vmatpush1.msra.mxu0 %v1390
        %1719 = vmatprep.subr.mxu0 0.0
        %1720 = vmatpush1.msra.mxu0 %v1391
        %1721 = vmatprep.subr.mxu0 0.0
        %1722 = vmatpush1.msra.mxu0 %v1392
        %1723 = vmatprep.subr.mxu0 0.0
        %1724 = vmatpush1.msra.mxu0 %v1393
        %1725 = vmatprep.subr.mxu0 0.0
        %1726 = vmatpush1.msra.mxu0 %v1394
        %1727 = vmatprep.subr.mxu0 0.0
        %1728 = vmatpush1.msra.mxu0 %v1395
        %1729 = vmatprep.subr.mxu0 0.0
        %1730 = vmatpush1.msra.mxu0 %v1396
        %1731 = vmatprep.subr.mxu0 0.0
        %1732 = vmatpush1.msra.mxu0 %v1397
        %1733 = vmatprep.subr.mxu0 0.0
        %1734 = vmatpush1.msra.mxu0 %v1398
        %1735 = vmatprep.subr.mxu0 0.0
        %1736 = vmatpush1.msra.mxu0 %v1399
        %1737 = vmatprep.subr.mxu0 0.0
        %1738 = vmatpush1.msra.mxu0 %v1400
        %1739 = vmatprep.subr.mxu0 0.0
        %1740 = vmatpush1.msra.mxu0 %v1401
        %1741 = vmatprep.subr.mxu0 0.0
        %1742 = vmatpush1.msra.mxu0 %v1402
        %1743 = vmatprep.subr.mxu0 0.0
        %1744 = vmatpush1.msra.mxu0 %v1403
        %1745 = vmatprep.subr.mxu0 0.0
        %1746 = vmatpush1.msra.mxu0 %v1404
        %1747 = vmatprep.subr.mxu0 0.0
        %1748 = vmatpush1.msra.mxu0 %v1405
        %1749 = vmatprep.subr.mxu0 0.0
        %1750 = vmatpush1.msra.mxu0 %v1406
        %1751 = vmatprep.subr.mxu0 0.0
        %1752 = vmatpush1.msra.mxu0 %v1407
        %1753 = vmatprep.subr.mxu0 0.0
        %1754 = vmatpush1.msra.mxu0 %v1408
        %1755 = vmatprep.subr.mxu0 0.0
        %1756 = vmatpush1.msra.mxu0 %v1409
        %1757 = vmatprep.mubr.f32.mxu0 %v1326
        %1758 = vmatmul.mubr.f32.gmra.mrb[0].mxu0 %v1324
        %v1759 = vpop.f32.mrb[0].mxu0
        %v1760 = vadd.f32 %v1685, %v1759
        %v1761 = vpop.f32.mrb[0].mxu0
        %1762 = vmatprep.mubr.f32.mxu0 %v1327
        %1763 = vmatmul.mubr.f32.gmra.mrb[0].mxu0 %v1325
        %v1764 = vpop.f32.mrb[0].mxu0
        %v1765 = vadd.f32 %v1690, %v1764
        %v1766 = vpop.f32.mrb[0].mxu0
        %1767 = vdwg.mxu0
        %1768 = vmatprep.subr.mxu0 0.0
        %1769 = vmatpush1.msra.mxu0 %v1410
        %1770 = vmatprep.subr.mxu0 0.0
        %1771 = vmatpush1.msra.mxu0 %v1411
        %1772 = vmatprep.subr.mxu0 0.0
        %1773 = vmatpush1.msra.mxu0 %v1412
        %1774 = vmatprep.subr.mxu0 0.0
        %1775 = vmatpush1.msra.mxu0 %v1413
        %1776 = vmatprep.subr.mxu0 0.0
        %1777 = vmatpush1.msra.mxu0 %v1414
        %1778 = vmatprep.subr.mxu0 0.0
        %1779 = vmatpush1.msra.mxu0 %v1415
        %1780 = vmatprep.subr.mxu0 0.0
        %1781 = vmatpush1.msra.mxu0 %v1416
        %1782 = vmatprep.subr.mxu0 0.0
        %1783 = vmatpush1.msra.mxu0 %v1417
        %1784 = vmatprep.subr.mxu0 0.0
        %1785 = vmatpush1.msra.mxu0 %v1418
        %1786 = vmatprep.subr.mxu0 0.0
        %1787 = vmatpush1.msra.mxu0 %v1419
        %1788 = vmatprep.subr.mxu0 0.0
        %1789 = vmatpush1.msra.mxu0 %v1420
        %1790 = vmatprep.subr.mxu0 0.0
        %1791 = vmatpush1.msra.mxu0 %v1421
        %1792 = vmatprep.subr.mxu0 0.0
        %1793 = vmatpush1.msra.mxu0 %v1422
        %1794 = vmatprep.subr.mxu0 0.0
        %1795 = vmatpush1.msra.mxu0 %v1423
        %1796 = vmatprep.subr.mxu0 0.0
        %1797 = vmatpush1.msra.mxu0 %v1424
        %1798 = vmatprep.subr.mxu0 0.0
        %1799 = vmatpush1.msra.mxu0 %v1425
        %1800 = vmatprep.subr.mxu0 0.0
        %1801 = vmatpush1.msra.mxu0 %v1426
        %1802 = vmatprep.subr.mxu0 0.0
        %1803 = vmatpush1.msra.mxu0 %v1427
        %1804 = vmatprep.subr.mxu0 0.0
        %1805 = vmatpush1.msra.mxu0 %v1428
        %1806 = vmatprep.subr.mxu0 0.0
        %1807 = vmatpush1.msra.mxu0 %v1429
        %1808 = vmatprep.subr.mxu0 0.0
        %1809 = vmatpush1.msra.mxu0 %v1430
        %1810 = vmatprep.subr.mxu0 0.0
        %1811 = vmatpush1.msra.mxu0 %v1431
        %1812 = vmatprep.subr.mxu0 0.0
        %1813 = vmatpush1.msra.mxu0 %v1432
        %1814 = vmatprep.subr.mxu0 0.0
        %1815 = vmatpush1.msra.mxu0 %v1433
        %1816 = vmatprep.subr.mxu0 0.0
        %1817 = vmatpush1.msra.mxu0 %v1434
        %1818 = vmatprep.subr.mxu0 0.0
        %1819 = vmatpush1.msra.mxu0 %v1435
        %1820 = vmatprep.subr.mxu0 0.0
        %1821 = vmatpush1.msra.mxu0 %v1436
        %1822 = vmatprep.subr.mxu0 0.0
        %1823 = vmatpush1.msra.mxu0 %v1437
        %1824 = vmatprep.subr.mxu0 0.0
        %1825 = vmatpush1.msra.mxu0 %v1438
        %1826 = vmatprep.subr.mxu0 0.0
        %1827 = vmatpush1.msra.mxu0 %v1439
        %1828 = vmatprep.subr.mxu0 0.0
        %1829 = vmatpush1.msra.mxu0 %v1440
        %1830 = vmatprep.subr.mxu0 0.0
        %1831 = vmatpush1.msra.mxu0 %v1441
        %1832 = vmatprep.mubr.f32.mxu0 %v1330
        %1833 = vmatmul.mubr.f32.gmra.mrb[0].mxu0 %v1328
        %v1834 = vpop.f32.mrb[0].mxu0
        %v1835 = vadd.f32 %v1760, %v1834
        %v1836 = vpop.f32.mrb[0].mxu0
        %1837 = vmatprep.mubr.f32.mxu0 %v1331
        %1838 = vmatmul.mubr.f32.gmra.mrb[0].mxu0 %v1329
        %v1839 = vpop.f32.mrb[0].mxu0
        %v1840 = vadd.f32 %v1765, %v1839
        %v1841 = vpop.f32.mrb[0].mxu0
        %1842 = vdwg.mxu0
        %1843 = vmatprep.subr.mxu0 0.0
        %1844 = vmatpush1.msra.mxu0 %v1442
        %1845 = vmatprep.subr.mxu0 0.0
        %1846 = vmatpush1.msra.mxu0 %v1443
        %1847 = vmatprep.subr.mxu0 0.0
        %1848 = vmatpush1.msra.mxu0 %v1444
        %1849 = vmatprep.subr.mxu0 0.0
        %1850 = vmatpush1.msra.mxu0 %v1445
        %1851 = vmatprep.subr.mxu0 0.0
        %1852 = vmatpush1.msra.mxu0 %v1446
        %1853 = vmatprep.subr.mxu0 0.0
        %1854 = vmatpush1.msra.mxu0 %v1447
        %1855 = vmatprep.subr.mxu0 0.0
        %1856 = vmatpush1.msra.mxu0 %v1448
        %1857 = vmatprep.subr.mxu0 0.0
        %1858 = vmatpush1.msra.mxu0 %v1449
        %1859 = vmatprep.subr.mxu0 0.0
        %1860 = vmatpush1.msra.mxu0 %v1450
        %1861 = vmatprep.subr.mxu0 0.0
        %1862 = vmatpush1.msra.mxu0 %v1451
        %1863 = vmatprep.subr.mxu0 0.0
        %1864 = vmatpush1.msra.mxu0 %v1452
        %1865 = vmatprep.subr.mxu0 0.0
        %1866 = vmatpush1.msra.mxu0 %v1453
        %1867 = vmatprep.subr.mxu0 0.0
        %1868 = vmatpush1.msra.mxu0 %v1454
        %1869 = vmatprep.subr.mxu0 0.0
        %1870 = vmatpush1.msra.mxu0 %v1455
        %1871 = vmatprep.subr.mxu0 0.0
        %1872 = vmatpush1.msra.mxu0 %v1456
        %1873 = vmatprep.subr.mxu0 0.0
        %1874 = vmatpush1.msra.mxu0 %v1457
        %1875 = vmatprep.subr.mxu0 0.0
        %1876 = vmatpush1.msra.mxu0 %v1458
        %1877 = vmatprep.subr.mxu0 0.0
        %1878 = vmatpush1.msra.mxu0 %v1459
        %1879 = vmatprep.subr.mxu0 0.0
        %1880 = vmatpush1.msra.mxu0 %v1460
        %1881 = vmatprep.subr.mxu0 0.0
        %1882 = vmatpush1.msra.mxu0 %v1461
        %1883 = vmatprep.subr.mxu0 0.0
        %1884 = vmatpush1.msra.mxu0 %v1462
        %1885 = vmatprep.subr.mxu0 0.0
        %1886 = vmatpush1.msra.mxu0 %v1463
        %1887 = vmatprep.subr.mxu0 0.0
        %1888 = vmatpush1.msra.mxu0 %v1464
        %1889 = vmatprep.subr.mxu0 0.0
        %1890 = vmatpush1.msra.mxu0 %v1465
        %1891 = vmatprep.subr.mxu0 0.0
        %1892 = vmatpush1.msra.mxu0 %v1466
        %1893 = vmatprep.subr.mxu0 0.0
        %1894 = vmatpush1.msra.mxu0 %v1467
        %1895 = vmatprep.subr.mxu0 0.0
        %1896 = vmatpush1.msra.mxu0 %v1468
        %1897 = vmatprep.subr.mxu0 0.0
        %1898 = vmatpush1.msra.mxu0 %v1469
        %1899 = vmatprep.subr.mxu0 0.0
        %1900 = vmatpush1.msra.mxu0 %v1470
        %1901 = vmatprep.subr.mxu0 0.0
        %1902 = vmatpush1.msra.mxu0 %v1471
        %1903 = vmatprep.subr.mxu0 0.0
        %1904 = vmatpush1.msra.mxu0 %v1472
        %1905 = vmatprep.subr.mxu0 0.0
        %1906 = vmatpush1.msra.mxu0 %v1473
        %1907 = vmatprep.mubr.f32.mxu0 %v1334
        %1908 = vmatmul.mubr.f32.gmra.mrb[0].mxu0 %v1332
        %v1909 = vpop.f32.mrb[0].mxu0
        %v1910 = vadd.f32 %v1835, %v1909
        %v1911 = vpop.f32.mrb[0].mxu0
        %1912 = vmatprep.mubr.f32.mxu0 %v1335
        %1913 = vmatmul.mubr.f32.gmra.mrb[0].mxu0 %v1333
        %v1914 = vpop.f32.mrb[0].mxu0
        %v1915 = vadd.f32 %v1840, %v1914
        %v1916 = vpop.f32.mrb[0].mxu0
        %1917 = vdwg.mxu0
        %1918 = vmatprep.subr.mxu0 0.0
        %1919 = vmatpush1.msra.mxu0 %v1474
        %1920 = vmatprep.subr.mxu0 0.0
        %1921 = vmatpush1.msra.mxu0 %v1475
        %1922 = vmatprep.subr.mxu0 0.0
        %1923 = vmatpush1.msra.mxu0 %v1476
        %1924 = vmatprep.subr.mxu0 0.0
        %1925 = vmatpush1.msra.mxu0 %v1477
        %1926 = vmatprep.subr.mxu0 0.0
        %1927 = vmatpush1.msra.mxu0 %v1478
        %1928 = vmatprep.subr.mxu0 0.0
        %1929 = vmatpush1.msra.mxu0 %v1479
        %1930 = vmatprep.subr.mxu0 0.0
        %1931 = vmatpush1.msra.mxu0 %v1480
        %1932 = vmatprep.subr.mxu0 0.0
        %1933 = vmatpush1.msra.mxu0 %v1481
        %1934 = vmatprep.subr.mxu0 0.0
        %1935 = vmatpush1.msra.mxu0 %v1482
        %1936 = vmatprep.subr.mxu0 0.0
        %1937 = vmatpush1.msra.mxu0 %v1483
        %1938 = vmatprep.subr.mxu0 0.0
        %1939 = vmatpush1.msra.mxu0 %v1484
        %1940 = vmatprep.subr.mxu0 0.0
        %1941 = vmatpush1.msra.mxu0 %v1485
        %1942 = vmatprep.subr.mxu0 0.0
        %1943 = vmatpush1.msra.mxu0 %v1486
        %1944 = vmatprep.subr.mxu0 0.0
        %1945 = vmatpush1.msra.mxu0 %v1487
        %1946 = vmatprep.subr.mxu0 0.0
        %1947 = vmatpush1.msra.mxu0 %v1488
        %1948 = vmatprep.subr.mxu0 0.0
        %1949 = vmatpush1.msra.mxu0 %v1489
        %1950 = vmatprep.subr.mxu0 0.0
        %1951 = vmatpush1.msra.mxu0 %v1490
        %1952 = vmatprep.subr.mxu0 0.0
        %1953 = vmatpush1.msra.mxu0 %v1491
        %1954 = vmatprep.subr.mxu0 0.0
        %1955 = vmatpush1.msra.mxu0 %v1492
        %1956 = vmatprep.subr.mxu0 0.0
        %1957 = vmatpush1.msra.mxu0 %v1493
        %1958 = vmatprep.subr.mxu0 0.0
        %1959 = vmatpush1.msra.mxu0 %v1494
        %1960 = vmatprep.subr.mxu0 0.0
        %1961 = vmatpush1.msra.mxu0 %v1495
        %1962 = vmatprep.subr.mxu0 0.0
        %1963 = vmatpush1.msra.mxu0 %v1496
        %1964 = vmatprep.subr.mxu0 0.0
        %1965 = vmatpush1.msra.mxu0 %v1497
        %1966 = vmatprep.subr.mxu0 0.0
        %1967 = vmatpush1.msra.mxu0 %v1498
        %1968 = vmatprep.subr.mxu0 0.0
        %1969 = vmatpush1.msra.mxu0 %v1499
        %1970 = vmatprep.subr.mxu0 0.0
        %1971 = vmatpush1.msra.mxu0 %v1500
        %1972 = vmatprep.subr.mxu0 0.0
        %1973 = vmatpush1.msra.mxu0 %v1501
        %1974 = vmatprep.subr.mxu0 0.0
        %1975 = vmatpush1.msra.mxu0 %v1502
        %1976 = vmatprep.subr.mxu0 0.0
        %1977 = vmatpush1.msra.mxu0 %v1503
        %1978 = vmatprep.subr.mxu0 0.0
        %1979 = vmatpush1.msra.mxu0 %v1504
        %1980 = vmatprep.subr.mxu0 0.0
        %1981 = vmatpush1.msra.mxu0 %v1505
        %1982 = vmatprep.mubr.f32.mxu0 %v1323
        %1983 = vmatmul.mubr.f32.gmra.mrb[0].mxu0 %v1321
        %v1984 = vpop.f32.mrb[0].mxu0
        %v1985 = vadd.f32 %v1910, %v1984
        %v1986 = vpop.f32.mrb[0].mxu0
        %1987 = vmatprep.mubr.f32.mxu0 %v1337
        %1988 = vmatmul.mubr.f32.gmra.mrb[0].mxu0 %v1336
        %v1989 = vpop.f32.mrb[0].mxu0
        %v1990 = vadd.f32 %v1915, %v1989
        %v1991 = vpop.f32.mrb[0].mxu0
        %1992 = vdwg.mxu0
        %1993 = vmatprep.subr.mxu0 0.0
        %1994 = vmatpush1.msra.mxu0 %v1506
        %1995 = vmatprep.subr.mxu0 0.0
        %1996 = vmatpush1.msra.mxu0 %v1507
        %1997 = vmatprep.subr.mxu0 0.0
        %1998 = vmatpush1.msra.mxu0 %v1508
        %1999 = vmatprep.subr.mxu0 0.0
        %2000 = vmatpush1.msra.mxu0 %v1509
        %2001 = vmatprep.subr.mxu0 0.0
        %2002 = vmatpush1.msra.mxu0 %v1510
        %2003 = vmatprep.subr.mxu0 0.0
        %2004 = vmatpush1.msra.mxu0 %v1511
        %2005 = vmatprep.subr.mxu0 0.0
        %2006 = vmatpush1.msra.mxu0 %v1512
        %2007 = vmatprep.subr.mxu0 0.0
        %2008 = vmatpush1.msra.mxu0 %v1513
        %2009 = vmatprep.subr.mxu0 0.0
        %2010 = vmatpush1.msra.mxu0 %v1514
        %2011 = vmatprep.subr.mxu0 0.0
        %2012 = vmatpush1.msra.mxu0 %v1515
        %2013 = vmatprep.subr.mxu0 0.0
        %2014 = vmatpush1.msra.mxu0 %v1516
        %2015 = vmatprep.subr.mxu0 0.0
        %2016 = vmatpush1.msra.mxu0 %v1517
        %2017 = vmatprep.subr.mxu0 0.0
        %2018 = vmatpush1.msra.mxu0 %v1518
        %2019 = vmatprep.subr.mxu0 0.0
        %2020 = vmatpush1.msra.mxu0 %v1519
        %2021 = vmatprep.subr.mxu0 0.0
        %2022 = vmatpush1.msra.mxu0 %v1520
        %2023 = vmatprep.subr.mxu0 0.0
        %2024 = vmatpush1.msra.mxu0 %v1521
        %2025 = vmatprep.subr.mxu0 0.0
        %2026 = vmatpush1.msra.mxu0 %v1522
        %2027 = vmatprep.subr.mxu0 0.0
        %2028 = vmatpush1.msra.mxu0 %v1523
        %2029 = vmatprep.subr.mxu0 0.0
        %2030 = vmatpush1.msra.mxu0 %v1524
        %2031 = vmatprep.subr.mxu0 0.0
        %2032 = vmatpush1.msra.mxu0 %v1525
        %2033 = vmatprep.subr.mxu0 0.0
        %2034 = vmatpush1.msra.mxu0 %v1526
        %2035 = vmatprep.subr.mxu0 0.0
        %2036 = vmatpush1.msra.mxu0 %v1527
        %2037 = vmatprep.subr.mxu0 0.0
        %2038 = vmatpush1.msra.mxu0 %v1528
        %2039 = vmatprep.subr.mxu0 0.0
        %2040 = vmatpush1.msra.mxu0 %v1529
        %2041 = vmatprep.subr.mxu0 0.0
        %2042 = vmatpush1.msra.mxu0 %v1530
        %2043 = vmatprep.subr.mxu0 0.0
        %2044 = vmatpush1.msra.mxu0 %v1531
        %2045 = vmatprep.subr.mxu0 0.0
        %2046 = vmatpush1.msra.mxu0 %v1532
        %2047 = vmatprep.subr.mxu0 0.0
        %2048 = vmatpush1.msra.mxu0 %v1533
        %2049 = vmatprep.subr.mxu0 0.0
        %2050 = vmatpush1.msra.mxu0 %v1534
        %2051 = vmatprep.subr.mxu0 0.0
        %2052 = vmatpush1.msra.mxu0 %v1535
        %2053 = vmatprep.subr.mxu0 0.0
        %2054 = vmatpush1.msra.mxu0 %v1536
        %2055 = vmatprep.subr.mxu0 0.0
        %2056 = vmatpush1.msra.mxu0 %v1537
        %2057 = vmatprep.mubr.f32.mxu0 %v1327
        %2058 = vmatmul.mubr.f32.gmra.mrb[0].mxu0 %v1325
        %v2059 = vpop.f32.mrb[0].mxu0
        %v2060 = vadd.f32 %v1985, %v2059
        %v2061 = vpop.f32.mrb[0].mxu0
        %2062 = vmatprep.mubr.f32.mxu0 %v1339
        %2063 = vmatmul.mubr.f32.gmra.mrb[0].mxu0 %v1338
        %v2064 = vpop.f32.mrb[0].mxu0
        %v2065 = vadd.f32 %v1990, %v2064
        %v2066 = vpop.f32.mrb[0].mxu0
        %2067 = vdwg.mxu0
        %2068 = vmatprep.subr.mxu0 0.0
        %2069 = vmatpush1.msra.mxu0 %v1538
        %2070 = vmatprep.subr.mxu0 0.0
        %2071 = vmatpush1.msra.mxu0 %v1539
        %2072 = vmatprep.subr.mxu0 0.0
        %2073 = vmatpush1.msra.mxu0 %v1540
        %2074 = vmatprep.subr.mxu0 0.0
        %2075 = vmatpush1.msra.mxu0 %v1541
        %2076 = vmatprep.subr.mxu0 0.0
        %2077 = vmatpush1.msra.mxu0 %v1542
        %2078 = vmatprep.subr.mxu0 0.0
        %2079 = vmatpush1.msra.mxu0 %v1543
        %2080 = vmatprep.subr.mxu0 0.0
        %2081 = vmatpush1.msra.mxu0 %v1544
        %2082 = vmatprep.subr.mxu0 0.0
        %2083 = vmatpush1.msra.mxu0 %v1545
        %2084 = vmatprep.subr.mxu0 0.0
        %2085 = vmatpush1.msra.mxu0 %v1546
        %2086 = vmatprep.subr.mxu0 0.0
        %2087 = vmatpush1.msra.mxu0 %v1547
        %2088 = vmatprep.subr.mxu0 0.0
        %2089 = vmatpush1.msra.mxu0 %v1548
        %2090 = vmatprep.subr.mxu0 0.0
        %2091 = vmatpush1.msra.mxu0 %v1549
        %2092 = vmatprep.subr.mxu0 0.0
        %2093 = vmatpush1.msra.mxu0 %v1550
        %2094 = vmatprep.subr.mxu0 0.0
        %2095 = vmatpush1.msra.mxu0 %v1551
        %2096 = vmatprep.subr.mxu0 0.0
        %2097 = vmatpush1.msra.mxu0 %v1552
        %2098 = vmatprep.subr.mxu0 0.0
        %2099 = vmatpush1.msra.mxu0 %v1553
        %2100 = vmatprep.subr.mxu0 0.0
        %2101 = vmatpush1.msra.mxu0 %v1554
        %2102 = vmatprep.subr.mxu0 0.0
        %2103 = vmatpush1.msra.mxu0 %v1555
        %2104 = vmatprep.subr.mxu0 0.0
        %2105 = vmatpush1.msra.mxu0 %v1556
        %2106 = vmatprep.subr.mxu0 0.0
        %2107 = vmatpush1.msra.mxu0 %v1557
        %2108 = vmatprep.subr.mxu0 0.0
        %2109 = vmatpush1.msra.mxu0 %v1558
        %2110 = vmatprep.subr.mxu0 0.0
        %2111 = vmatpush1.msra.mxu0 %v1559
        %2112 = vmatprep.subr.mxu0 0.0
        %2113 = vmatpush1.msra.mxu0 %v1560
        %2114 = vmatprep.subr.mxu0 0.0
        %2115 = vmatpush1.msra.mxu0 %v1561
        %2116 = vmatprep.subr.mxu0 0.0
        %2117 = vmatpush1.msra.mxu0 %v1562
        %2118 = vmatprep.subr.mxu0 0.0
        %2119 = vmatpush1.msra.mxu0 %v1563
        %2120 = vmatprep.subr.mxu0 0.0
        %2121 = vmatpush1.msra.mxu0 %v1564
        %2122 = vmatprep.subr.mxu0 0.0
        %2123 = vmatpush1.msra.mxu0 %v1565
        %2124 = vmatprep.subr.mxu0 0.0
        %2125 = vmatpush1.msra.mxu0 %v1566
        %2126 = vmatprep.subr.mxu0 0.0
        %2127 = vmatpush1.msra.mxu0 %v1567
        %2128 = vmatprep.subr.mxu0 0.0
        %2129 = vmatpush1.msra.mxu0 %v1568
        %2130 = vmatprep.subr.mxu0 0.0
        %2131 = vmatpush1.msra.mxu0 %v1569
        %2132 = vmatprep.mubr.f32.mxu0 %v1331
        %2133 = vmatmul.mubr.f32.gmra.mrb[0].mxu0 %v1329
        %v2134 = vpop.f32.mrb[0].mxu0
        %v2135 = vadd.f32 %v2060, %v2134
        %v2136 = vpop.f32.mrb[0].mxu0
        %2137 = vmatprep.mubr.f32.mxu0 %v1341
        %2138 = vmatmul.mubr.f32.gmra.mrb[0].mxu0 %v1340
        %v2139 = vpop.f32.mrb[0].mxu0
        %v2140 = vadd.f32 %v2065, %v2139
        %v2141 = vpop.f32.mrb[0].mxu0
        %2142 = vdwg.mxu0
        %2143 = vmatprep.subr.mxu0 0.0
        %2144 = vmatpush1.msra.mxu0 %v1570
        %2145 = vmatprep.subr.mxu0 0.0
        %2146 = vmatpush1.msra.mxu0 %v1571
        %2147 = vmatprep.subr.mxu0 0.0
        %2148 = vmatpush1.msra.mxu0 %v1572
        %2149 = vmatprep.subr.mxu0 0.0
        %2150 = vmatpush1.msra.mxu0 %v1573
        %2151 = vmatprep.subr.mxu0 0.0
        %2152 = vmatpush1.msra.mxu0 %v1574
        %2153 = vmatprep.subr.mxu0 0.0
        %2154 = vmatpush1.msra.mxu0 %v1575
        %2155 = vmatprep.subr.mxu0 0.0
        %2156 = vmatpush1.msra.mxu0 %v1576
        %2157 = vmatprep.subr.mxu0 0.0
        %2158 = vmatpush1.msra.mxu0 %v1577
        %2159 = vmatprep.subr.mxu0 0.0
        %2160 = vmatpush1.msra.mxu0 %v1578
        %2161 = vmatprep.subr.mxu0 0.0
        %2162 = vmatpush1.msra.mxu0 %v1579
        %2163 = vmatprep.subr.mxu0 0.0
        %2164 = vmatpush1.msra.mxu0 %v1580
        %2165 = vmatprep.subr.mxu0 0.0
        %2166 = vmatpush1.msra.mxu0 %v1581
        %2167 = vmatprep.subr.mxu0 0.0
        %2168 = vmatpush1.msra.mxu0 %v1582
        %2169 = vmatprep.subr.mxu0 0.0
        %2170 = vmatpush1.msra.mxu0 %v1583
        %2171 = vmatprep.subr.mxu0 0.0
        %2172 = vmatpush1.msra.mxu0 %v1584
        %2173 = vmatprep.subr.mxu0 0.0
        %2174 = vmatpush1.msra.mxu0 %v1585
        %2175 = vmatprep.subr.mxu0 0.0
        %2176 = vmatpush1.msra.mxu0 %v1586
        %2177 = vmatprep.subr.mxu0 0.0
        %2178 = vmatpush1.msra.mxu0 %v1587
        %2179 = vmatprep.subr.mxu0 0.0
        %2180 = vmatpush1.msra.mxu0 %v1588
        %2181 = vmatprep.subr.mxu0 0.0
        %2182 = vmatpush1.msra.mxu0 %v1589
        %2183 = vmatprep.subr.mxu0 0.0
        %2184 = vmatpush1.msra.mxu0 %v1590
        %2185 = vmatprep.subr.mxu0 0.0
        %2186 = vmatpush1.msra.mxu0 %v1591
        %2187 = vmatprep.subr.mxu0 0.0
        %2188 = vmatpush1.msra.mxu0 %v1592
        %2189 = vmatprep.subr.mxu0 0.0
        %2190 = vmatpush1.msra.mxu0 %v1593
        %2191 = vmatprep.subr.mxu0 0.0
        %2192 = vmatpush1.msra.mxu0 %v1594
        %2193 = vmatprep.subr.mxu0 0.0
        %2194 = vmatpush1.msra.mxu0 %v1595
        %2195 = vmatprep.subr.mxu0 0.0
        %2196 = vmatpush1.msra.mxu0 %v1596
        %2197 = vmatprep.subr.mxu0 0.0
        %2198 = vmatpush1.msra.mxu0 %v1597
        %2199 = vmatprep.subr.mxu0 0.0
        %2200 = vmatpush1.msra.mxu0 %v1598
        %2201 = vmatprep.subr.mxu0 0.0
        %2202 = vmatpush1.msra.mxu0 %v1599
        %2203 = vmatprep.subr.mxu0 0.0
        %2204 = vmatpush1.msra.mxu0 %v1600
        %2205 = vmatprep.subr.mxu0 0.0
        %2206 = vmatpush1.msra.mxu0 %v1601
        %2207 = vmatprep.mubr.f32.mxu0 %v1335
        %2208 = vmatmul.mubr.f32.gmra.mrb[0].mxu0 %v1333
        %v2209 = vpop.f32.mrb[0].mxu0
        %v2210 = vadd.f32 %v2135, %v2209
        %v2211 = vpop.f32.mrb[0].mxu0
        %2212 = vmatprep.mubr.f32.mxu0 %v1343
        %2213 = vmatmul.mubr.f32.gmra.mrb[0].mxu0 %v1342
        %v2214 = vpop.f32.mrb[0].mxu0
        %v2215 = vadd.f32 %v2140, %v2214
        %v2216 = vpop.f32.mrb[0].mxu0
        %2217 = vdwg.mxu0
        %2218 = vmatprep.subr.mxu0 0.0
        %2219 = vmatpush1.msra.mxu0 %v1602
        %2220 = vmatprep.subr.mxu0 0.0
        %2221 = vmatpush1.msra.mxu0 %v1603
        %2222 = vmatprep.subr.mxu0 0.0
        %2223 = vmatpush1.msra.mxu0 %v1604
        %2224 = vmatprep.subr.mxu0 0.0
        %2225 = vmatpush1.msra.mxu0 %v1605
        %2226 = vmatprep.subr.mxu0 0.0
        %2227 = vmatpush1.msra.mxu0 %v1606
        %2228 = vmatprep.subr.mxu0 0.0
        %2229 = vmatpush1.msra.mxu0 %v1607
        %2230 = vmatprep.subr.mxu0 0.0
        %2231 = vmatpush1.msra.mxu0 %v1608
        %2232 = vmatprep.subr.mxu0 0.0
        %2233 = vmatpush1.msra.mxu0 %v1609
        %2234 = vmatprep.subr.mxu0 0.0
        %2235 = vmatpush1.msra.mxu0 %v1610
        %2236 = vmatprep.subr.mxu0 0.0
        %2237 = vmatpush1.msra.mxu0 %v1611
        %2238 = vmatprep.subr.mxu0 0.0
        %2239 = vmatpush1.msra.mxu0 %v1612
        %2240 = vmatprep.subr.mxu0 0.0
        %2241 = vmatpush1.msra.mxu0 %v1613
        %2242 = vmatprep.subr.mxu0 0.0
        %2243 = vmatpush1.msra.mxu0 %v1614
        %2244 = vmatprep.subr.mxu0 0.0
        %2245 = vmatpush1.msra.mxu0 %v1615
        %2246 = vmatprep.subr.mxu0 0.0
        %2247 = vmatpush1.msra.mxu0 %v1616
        %2248 = vmatprep.subr.mxu0 0.0
        %2249 = vmatpush1.msra.mxu0 %v1617
        %2250 = vmatprep.subr.mxu0 0.0
        %2251 = vmatpush1.msra.mxu0 0.0
        %2252 = vmatprep.subr.mxu0 0.0
        %2253 = vmatpush1.msra.mxu0 0.0
        %2254 = vmatprep.subr.mxu0 0.0
        %2255 = vmatpush1.msra.mxu0 0.0
        %2256 = vmatprep.subr.mxu0 0.0
        %2257 = vmatpush1.msra.mxu0 0.0
        %2258 = vmatprep.subr.mxu0 0.0
        %2259 = vmatpush1.msra.mxu0 0.0
        %2260 = vmatprep.subr.mxu0 0.0
        %2261 = vmatpush1.msra.mxu0 0.0
        %2262 = vmatprep.subr.mxu0 0.0
        %2263 = vmatpush1.msra.mxu0 0.0
        %2264 = vmatprep.subr.mxu0 0.0
        %2265 = vmatpush1.msra.mxu0 0.0
        %2266 = vmatprep.subr.mxu0 0.0
        %2267 = vmatpush1.msra.mxu0 0.0
        %2268 = vmatprep.subr.mxu0 0.0
        %2269 = vmatpush1.msra.mxu0 0.0
        %2270 = vmatprep.subr.mxu0 0.0
        %2271 = vmatpush1.msra.mxu0 0.0
        %2272 = vmatprep.subr.mxu0 0.0
        %2273 = vmatpush1.msra.mxu0 0.0
        %2274 = vmatprep.subr.mxu0 0.0
        %2275 = vmatpush1.msra.mxu0 0.0
        %2276 = vmatprep.subr.mxu0 0.0
        %2277 = vmatpush1.msra.mxu0 0.0
        %2278 = vmatprep.subr.mxu0 0.0
        %2279 = vmatpush1.msra.mxu0 0.0
        %2280 = vmatprep.subr.mxu0 0.0
        %2281 = vmatpush1.msra.mxu0 0.0
        %2282 = vmatprep.mubr.f32.mxu0 0.0
        %2283 = vmatmul.mubr.f32.gmra.mrb[0].mxu0 %v1344
        %v2284 = vpop.f32.mrb[0].mxu0
        %v2285 = vadd.f32 %v2210, %v2284
        %v2286 = vpop.f32.mrb[0].mxu0
        %2287 = vmatprep.mubr.f32.mxu0 0.0
        %2288 = vmatmul.mubr.f32.gmra.mrb[0].mxu0 %v1345
        %v2289 = vpop.f32.mrb[0].mxu0
        %v2290 = vadd.f32 %v2215, %v2289
        %v2291 = vpop.f32.mrb[0].mxu0
        %2292 = vdwg.mxu0
        %v2293 = vld [vmem:[#allocation18] sm:$0x1]
        %v2295 = vlaneseq
        %v2296 = vshrl.u32 %v2295, 7
        %v2297 = vsub.s32 0, %v2296
        %v2298 = vrot.slane %v2293, %v2297
        %v2300 = vmul.f32 %v2285, %v2298
        %v2301 = vmul.f32 %v2290, %v2298
        %v2302 = vld [vmem:[#allocation19] sm:$0x1]
        %v2304 = vlaneseq
        %v2305 = vshrl.u32 %v2304, 7
        %v2306 = vsub.s32 0, %v2305
        %v2307 = vrot.slane %v2302, %v2306
        %v2309 = vadd.f32 %v2300, %v2307
        %v2310 = vadd.f32 %v2301, %v2307
        %v2311 = vmax.f32 %v2309, 0.0
        %v2312 = vmax.f32 %v2310, 0.0
        %v2313 = vld [vmem:[#allocation21] sm:$0xff]
        %v2314 = vld [vmem:[#allocation21 + $0x8] sm:$0xff]
        %v2315 = vld [vmem:[#allocation21 + $0x10] sm:$0xff]
        %v2316 = vld [vmem:[#allocation21 + $0x18] sm:$0xff]
        %v2317 = vld [vmem:[#allocation21 + $0x20] sm:$0xff]
        %v2318 = vld [vmem:[#allocation21 + $0x28] sm:$0xff]
        %v2319 = vld [vmem:[#allocation21 + $0x30] sm:$0xff]
        %v2320 = vld [vmem:[#allocation21 + $0x38] sm:$0xff]
        %v2321 = vld [vmem:[#allocation21 + $0x40] sm:$0xff]
        %v2322 = vld [vmem:[#allocation21 + $0x48] sm:$0xff]
        %v2323 = vld [vmem:[#allocation21 + $0x50] sm:$0xff]
        %v2324 = vld [vmem:[#allocation21 + $0x58] sm:$0xff]
        %v2325 = vld [vmem:[#allocation21 + $0x60] sm:$0xff]
        %v2326 = vld [vmem:[#allocation21 + $0x68] sm:$0xff]
        %v2327 = vld [vmem:[#allocation21 + $0x70] sm:$0xff]
        %v2328 = vld [vmem:[#allocation21 + $0x78] sm:$0xff]
        %2329 = vmatprep.subr.mxu0 %v2314
        %2330 = vmatpush1.msra.mxu0 %v2313
        %2331 = vmatprep.subr.mxu0 %v2316
        %2332 = vmatpush1.msra.mxu0 %v2315
        %2333 = vmatprep.subr.mxu0 %v2318
        %2334 = vmatpush1.msra.mxu0 %v2317
        %2335 = vmatprep.subr.mxu0 %v2320
        %2336 = vmatpush1.msra.mxu0 %v2319
        %2337 = vmatprep.subr.mxu0 %v2322
        %2338 = vmatpush1.msra.mxu0 %v2321
        %2339 = vmatprep.subr.mxu0 %v2324
        %2340 = vmatpush1.msra.mxu0 %v2323
        %2341 = vmatprep.subr.mxu0 %v2326
        %2342 = vmatpush1.msra.mxu0 %v2325
        %2343 = vmatprep.subr.mxu0 %v2328
        %2344 = vmatpush1.msra.mxu0 %v2327
        %2345 = vmatprep.subr.mxu0 0.0
        %2346 = vmatpush1.msra.mxu0 0.0
        %2347 = vmatprep.subr.mxu0 0.0
        %2348 = vmatpush1.msra.mxu0 0.0
        %2349 = vmatprep.subr.mxu0 0.0
        %2350 = vmatpush1.msra.mxu0 0.0
        %2351 = vmatprep.subr.mxu0 0.0
        %2352 = vmatpush1.msra.mxu0 0.0
        %2353 = vmatprep.subr.mxu0 0.0
        %2354 = vmatpush1.msra.mxu0 0.0
        %2355 = vmatprep.subr.mxu0 0.0
        %2356 = vmatpush1.msra.mxu0 0.0
        %2357 = vmatprep.subr.mxu0 0.0
        %2358 = vmatpush1.msra.mxu0 0.0
        %2359 = vmatprep.subr.mxu0 0.0
        %2360 = vmatpush1.msra.mxu0 0.0
        %2361 = vmatprep.subr.mxu0 0.0
        %2362 = vmatpush1.msra.mxu0 0.0
        %2363 = vmatprep.subr.mxu0 0.0
        %2364 = vmatpush1.msra.mxu0 0.0
        %2365 = vmatprep.subr.mxu0 0.0
        %2366 = vmatpush1.msra.mxu0 0.0
        %2367 = vmatprep.subr.mxu0 0.0
        %2368 = vmatpush1.msra.mxu0 0.0
        %2369 = vmatprep.subr.mxu0 0.0
        %2370 = vmatpush1.msra.mxu0 0.0
        %2371 = vmatprep.subr.mxu0 0.0
        %2372 = vmatpush1.msra.mxu0 0.0
        %2373 = vmatprep.subr.mxu0 0.0
        %2374 = vmatpush1.msra.mxu0 0.0
        %2375 = vmatprep.subr.mxu0 0.0
        %2376 = vmatpush1.msra.mxu0 0.0
        %2377 = vmatprep.subr.mxu0 0.0
        %2378 = vmatpush1.msra.mxu0 0.0
        %2379 = vmatprep.subr.mxu0 0.0
        %2380 = vmatpush1.msra.mxu0 0.0
        %2381 = vmatprep.subr.mxu0 0.0
        %2382 = vmatpush1.msra.mxu0 0.0
        %2383 = vmatprep.subr.mxu0 0.0
        %2384 = vmatpush1.msra.mxu0 0.0
        %2385 = vmatprep.subr.mxu0 0.0
        %2386 = vmatpush1.msra.mxu0 0.0
        %2387 = vmatprep.subr.mxu0 0.0
        %2388 = vmatpush1.msra.mxu0 0.0
        %2389 = vmatprep.subr.mxu0 0.0
        %2390 = vmatpush1.msra.mxu0 0.0
        %2391 = vmatprep.subr.mxu0 0.0
        %2392 = vmatpush1.msra.mxu0 0.0
        %2393 = vmatprep.mubr.f32.mxu0 0.0
        %2394 = vmatmul.mubr.f32.gmra.mrb[0].mxu0 %v637
        %v2395 = vpop.f32.mrb[0].mxu0
        %v2396 = vadd.f32 0.0, %v2395
        %v2397 = vpop.f32.mrb[0].mxu0
        %v2398 = vadd.f32 0.0, %v2397
        %2399 = vmatprep.mubr.f32.mxu0 0.0
        %2400 = vmatmul.mubr.f32.gmra.mrb[0].mxu0 %v640
        %v2401 = vpop.f32.mrb[0].mxu0
        %v2402 = vadd.f32 0.0, %v2401
        %v2403 = vpop.f32.mrb[0].mxu0
        %v2404 = vadd.f32 0.0, %v2403
        %2405 = vdwg.mxu0
        %v2406 = vld [vmem:[#allocation22] sm:$0x3]
        %v2408 = vlaneseq
        %v2409 = vshrl.u32 %v2408, 7
        %v2410 = vsub.s32 0, %v2409
        %v2411 = vrot.slane %v2406, %v2410
        %v2412 = vlaneseq
        %v2413 = vshrl.u32 %v2412, 7
        %v2414 = vsub.s32 1, %v2413
        %v2415 = vrot.slane %v2406, %v2414
        %v2418 = vmul.f32 %v2396, %v2411
        %v2419 = vmul.f32 %v2398, %v2415
        %v2420 = vmul.f32 %v2402, %v2411
        %v2421 = vmul.f32 %v2404, %v2415
        %v2422 = vld [vmem:[#allocation24] sm:$0x3]
        %v2424 = vlaneseq
        %v2425 = vshrl.u32 %v2424, 7
        %v2426 = vsub.s32 0, %v2425
        %v2427 = vrot.slane %v2422, %v2426
        %v2428 = vlaneseq
        %v2429 = vshrl.u32 %v2428, 7
        %v2430 = vsub.s32 1, %v2429
        %v2431 = vrot.slane %v2422, %v2430
        %v2434 = vadd.f32 %v2418, %v2427
        %v2435 = vadd.f32 %v2419, %v2431
        %v2436 = vadd.f32 %v2420, %v2427
        %v2437 = vadd.f32 %v2421, %v2431
        %v2438 = vmax.f32 %v2434, 0.0
        %v2439 = vmax.f32 %v2435, 0.0
        %v2440 = vmax.f32 %v2436, 0.0
        %v2441 = vmax.f32 %v2437, 0.0
        %v2442 = vadd.f32 %v1314, %v2438
        %v2443 = vadd.f32 %v2311, %v2439
        %v2444 = vadd.f32 %v1315, %v2440
        %v2445 = vadd.f32 %v2312, %v2441
        %2446 = vst [vmem:[%s616] sm:$0xff] %v2442
        %2447 = vst [vmem:[%s616 + $0x8] sm:$0xff] %v2443
        %2448 = vst [vmem:[%s616 + $0x10] sm:$0xff] %v2444
        %2449 = vst [vmem:[%s616 + $0x18] sm:$0xff] %v2445
        %s2450 = sand.u32 %s322, 1
        %s2451 = scalar_lea.sflag [#allocation6], %s2450
        %s2452 = sand.u32 %s322, 1
        %s2453 = smul.addr %s2452, 32
        %s2454 = scalar_lea.vmem [#allocation25], %s2453
        // Predicated region
        $region125: #{tpu_custom_call.1} parent=71 // pred_check
          %p2455 = pneg %p332
        $region126: #{tpu_custom_call.1} parent=71 // pred_check_branch
          %2457 = sbr.rel (%p2455) target = $region128
        $region127: #{tpu_custom_call.1} parent=71 // pred_region
          %s2459 = ssub.s32 512, 512
          %2460 = vsyncadd %s2451, %s2459
          %s2461 = smul.addr %s36, 4
          %s2462 = smul.addr %s2461, 128
          %s2463 = scalar_lea.hbm %s13, %s2462
          %s2464 = sshll.u32 %s2454, 4
          %s2465 = int_to_ptr.vmem [resolvable:$true] %s2464
          %2470 = dma.vmem_to_hbm [thread:$0]  %s2465, 512, %s2463, %s2451, 256, 256, 16
        $region128: #{tpu_custom_call.1} parent=71 // pred_fallthru
          _
      $region72: #{tpu_custom_call.1} parent=5 // pred_fallthru
        _
      %p2471 = scmp.le.s32.totalorder 2, %s31
      // Predicated region
      $region129: #{tpu_custom_call.1} parent=5 // pred_check
        %p2472 = pneg %p2471
      $region130: #{tpu_custom_call.1} parent=5 // pred_check_branch
        %2474 = sbr.rel (%p2472) target = $region132
      $region131: #{tpu_custom_call.1} parent=5 // pred_region
        %s2475 = ssub.s32 %s31, 2
        // Predicated region
        $region133: #{tpu_custom_call.1} parent=131 // pred_check
          %p2476 = pneg %p338
        $region134: #{tpu_custom_call.1} parent=131 // pred_check_branch
          %2478 = sbr.rel (%p2476) target = $region136
        $region135: #{tpu_custom_call.1} parent=131 // pred_region
          %s2479 = sand.u32 %s323, 1
          %s2480 = scalar_lea.sflag [#allocation6], %s2479
          %s2481 = sand.u32 %s323, 1
          %s2482 = smul.addr %s2481, 32
          %s2483 = scalar_lea.vmem [#allocation25], %s2482
          %2484 = dma.done %s2480, 512
        $region136: #{tpu_custom_call.1} parent=131 // pred_fallthru
          _
      $region132: #{tpu_custom_call.1} parent=5 // pred_fallthru
        _
    $region6: #{tpu_custom_call.1} parent=1 // loop_footer
      %s35 = sadd.s32 1, %s31
    $region7: #{tpu_custom_call.1} parent=1 // loop_footer_branch
      %30 = sbr.rel target = $region3
    $region8: #{tpu_custom_call.1} parent=1 // loop_exit
      _
    %2485 = vsyncpa [#allocation5], 1
    %s2486 = scalar_lea.sflag [#allocation5], 1
    %2487 = vsyncpa %s2486, 1
    %2488 = vsyncpa [#allocation8], 1
    %2489 = vsyncpa [#allocation11], 1
    %2490 = vsyncpa [#allocation14], 1
    %2491 = vsyncpa [#allocation17], 1
    %2492 = vsyncpa [#allocation20], 1
    %2493 = vsyncpa [#allocation23], 1
    %2494 = vsyncpa [#allocation6], 1
    %s2495 = scalar_lea.sflag [#allocation6], 1
    %2496 = vsyncpa %s2495, 1

</llo_original>
